<compile_context>
chip_gen: v7x
topology: tpu7x:2x2x1
jax: 0.10.0
libtpu: 0.0.40
codegen_flags: <defaults>
</compile_context>

<pallas_src>
import functools
import math

import numpy as np
import jax
import jax.numpy as jnp
from jax.experimental import pallas as pl
from jax.experimental.pallas import tpu as pltpu


# ----------------------------- synthetic DiscriminatorConfig -----------------------------
CONFIG = dict(
    leaky_relu_slope=0.1,
    msd_channels=[1, 8, 16, 16, 1],
    msd_kernel_sizes=[5, 5, 5, 3],
    msd_strides=[1, 2, 1, 1],
    msd_paddings=[2, 2, 2, 1],
    msd_groups=[1, 1, 4, 1],
)

# nn.AvgPool1d(4, 2, padding=2), count_include_pad=True
POOL_K, POOL_S, POOL_P = 4, 2, 2


def _pool_out_len(t):
    return (t + 2 * POOL_P - POOL_K) // POOL_S + 1


def _conv_out_len(t, k, s, p):
    return (t + 2 * p - k) // s + 1


# --------------------------- host-side constant selection matrices -----------------------
def _pool_matrix_np(batch, t_in):
    """Block-diagonal 0/1 matrix: 0.25 * (x_flat @ P) == AvgPool1d(4,2,2)(x) per sample."""
    t_out = _pool_out_len(t_in)
    P = np.zeros((batch * t_in, batch * t_out), np.float32)
    for b in range(batch):
        for t in range(t_out):
            for d in range(POOL_K):
                p = POOL_S * t + d - POOL_P
                if 0 <= p < t_in:
                    P[b * t_in + p, b * t_out + t] = 1.0
    return P


def _downsample_matrix_np(batch, t_s1, t_out, stride):
    """Block-diagonal 0/1 matrix selecting every `stride`-th time column per sample."""
    D = np.zeros((batch * t_s1, batch * t_out), np.float32)
    for b in range(batch):
        for t in range(t_out):
            D[b * t_s1 + stride * t, b * t_out + t] = 1.0
    return D


# ------------------------------ parameter init / preparation -----------------------------
def init_params(key, cfg):
    """Three ScaleBlocks; torch Conv1d default init U(-1/sqrt(fan_in), 1/sqrt(fan_in))."""
    params = []
    chans = cfg["msd_channels"]
    for _ in range(3):
        layers = []
        for cin, cout, k, g in zip(chans[:-1], chans[1:], cfg["msd_kernel_sizes"], cfg["msd_groups"]):
            key, kw, kb = jax.random.split(key, 3)
            fan_in = (cin // g) * k
            bound = 1.0 / math.sqrt(fan_in)
            w = jax.random.uniform(kw, (cout, cin // g, k), jnp.float32, -bound, bound)
            b = jax.random.uniform(kb, (cout,), jnp.float32, -bound, bound)
            layers.append((w, b))
        params.append(layers)
    return params


def _make_w_eff(w, groups):
    """(C_out, C_in//groups, K) torch layout -> (C_out, K*C_in) block-diagonal flat weight.

    Row layout of the matching im2col slab is tap-major: row = k*C_in + ci.
    """
    c_out, c_in_pg, k = w.shape
    c_in = c_in_pg * groups
    cout_pg = c_out // groups
    w_eff = jnp.zeros((c_out, k, c_in), jnp.float32)
    for g in range(groups):
        blk = jnp.transpose(w[g * cout_pg:(g + 1) * cout_pg].astype(jnp.float32), (0, 2, 1))
        w_eff = w_eff.at[g * cout_pg:(g + 1) * cout_pg, :, g * c_in_pg:(g + 1) * c_in_pg].set(blk)
    return w_eff.reshape(c_out, k * c_in)


def prepare_params(raw_params, cfg):
    """Hoisted weight prep (done once at init, not per forward call)."""
    prepared = []
    for layers in raw_params:
        pls = []
        for (w, b), groups in zip(layers, cfg["msd_groups"]):
            pls.append((_make_w_eff(w, groups), b.reshape(-1, 1).astype(jnp.float32)))
        prepared.append(pls)
    return prepared


# ------------------------------------ fused kernel ---------------------------------------
def _conv_layer(a, w_eff, b_col, d_mat, *, batch, t_in, k, pad, stride, apply_act, slope):
    """One Conv1d (+ optional LeakyReLU) on a (C_in, batch*t_in) slab -> (C_out, batch*t_out)."""
    c_in = a.shape[0]
    c_out = w_eff.shape[0]
    t_s1 = t_in + 2 * pad - k + 1  # stride-1 output length

    # Per-sample zero padding along the lane (time) axis.
    if pad > 0:
        z = jnp.zeros((c_in, pad), jnp.float32)
        samples = [jnp.concatenate([z, a[:, n * t_in:(n + 1) * t_in], z], axis=1)
                   for n in range(batch)]
    else:
        samples = [a[:, n * t_in:(n + 1) * t_in] for n in range(batch)]

    if c_in == 1:
        # Tiny first layer: K VPU broadcast multiply-adds (an MXU matmul with contraction
        # dim K=5 would waste >95% of the systolic array).
        out = jnp.zeros((c_out, batch * t_s1), jnp.float32)
        for j in range(k):
            tap = jnp.concatenate([s[:, j:j + t_s1] for s in samples], axis=1)  # (1, B*t_s1)
            out = out + w_eff[:, j:j + 1] * tap
    else:
        # im2col: one (C_out, K*C_in) @ (K*C_in, B*t_s1) MXU matmul per layer; grouped layer
        # is handled by the block-diagonal flattened weight (single matmul, no group loop).
        taps = [jnp.concatenate([s[:, j:j + t_s1] for s in samples], axis=1) for j in range(k)]
        u = jnp.concatenate(taps, axis=0)                                       # (K*C_in, B*t_s1)
        out = jnp.dot(w_eff, u, preferred_element_type=jnp.float32)

    if stride > 1:
        # Lane-compress the stride-1 result with a 0/1 selection matmul (no strided reads).
        out = jnp.dot(out, d_mat, preferred_element_type=jnp.float32)

    out = out + b_col
    if apply_act:
        out = jnp.where(out >= 0.0, out, slope * out)
    return out


def _scale_block_kernel(*refs, batch, num_pools, layer_meta, slope):
    """Fused: AvgPool1d stage(s) + full ScaleBlock conv stack for one stream (grid axis)."""
    n_layers = len(layer_meta)
    idx = 0
    x_ref = refs[idx]; idx += 1
    pool_refs = refs[idx:idx + num_pools]; idx += num_pools
    wb_refs = []
    for _ in range(n_layers):
        wb_refs.append((refs[idx], refs[idx + 1]))
        idx += 2
    d_refs = []
    for (_c_in, _c_out, _k, stride, _pad, _t_in, _t_s1, _t_out) in layer_meta:
        if stride > 1:
            d_refs.append(refs[idx]); idx += 1
        else:
            d_refs.append(None)
    out_refs = refs[idx:idx + n_layers]

    # Fused AvgPool1d(4, 2, 2) stage(s): one matmul per stage with a 0/1 pooling matrix.
    a = x_ref[...]                                   # (1, batch*T0)
    for p in range(num_pools):
        a = 0.25 * jnp.dot(a, pool_refs[p][...], preferred_element_type=jnp.float32)

    # Conv stack; activations stay in VMEM/vregs, each layer writes its fmap output.
    for li, (c_in, c_out, k, stride, pad, t_in, t_s1, t_out) in enumerate(layer_meta):
        w_ref, b_ref = wb_refs[li]
        d_mat = None if d_refs[li] is None else d_refs[li][...]
        a = _conv_layer(a, w_ref[...], b_ref[...], d_mat,
                        batch=batch, t_in=t_in, k=k, pad=pad, stride=stride,
                        apply_act=(li != n_layers - 1), slope=slope)
        out_refs[li][...] = a.astype(out_refs[li].dtype)


def run_scale_block(prep_layers, x_in, *, num_pools, batch, t0, cfg):
    """One fused ScaleBlock (incl. preceding pooling) for both streams.

    x_in: (2, 1, batch*t0) f32 -- stream axis {real, generated}, batch folded into lanes.
    Returns ([4 fmap arrays of shape (2, C_out_l, batch*t_out_l)], [t_out_l per layer]).
    """
    slope = cfg["leaky_relu_slope"]

    # Pooling constants + pooled length for this scale.
    t = t0
    pool_mats = []
    for _ in range(num_pools):
        pool_mats.append(jnp.asarray(_pool_matrix_np(batch, t)))
        t = _pool_out_len(t)

    # Static per-layer metadata + stride>1 lane-compress constants.
    layer_meta, down_mats = [], []
    t_in = t
    for c_in, c_out, k, stride, pad in zip(cfg["msd_channels"][:-1], cfg["msd_channels"][1:],
                                           cfg["msd_kernel_sizes"], cfg["msd_strides"],
                                           cfg["msd_paddings"]):
        t_s1 = t_in + 2 * pad - k + 1
        t_out = _conv_out_len(t_in, k, stride, pad)
        layer_meta.append((c_in, c_out, k, stride, pad, t_in, t_s1, t_out))
        if stride > 1:
            down_mats.append(jnp.asarray(_downsample_matrix_np(batch, t_s1, t_out, stride)))
        t_in = t_out

    def shared_spec(shape):  # whole (small, 2-D) operand, same block for both grid steps
        return pl.BlockSpec(shape, lambda s: (0, 0))

    operands = [x_in]
    in_specs = [pl.BlockSpec((None, 1, batch * t0), lambda s: (s, 0, 0))]
    for pm in pool_mats:
        operands.append(pm); in_specs.append(shared_spec(pm.shape))
    for w_eff, b_col in prep_layers:
        operands += [w_eff, b_col]
        in_specs += [shared_spec(w_eff.shape), shared_spec(b_col.shape)]
    for dm in down_mats:
        operands.append(dm); in_specs.append(shared_spec(dm.shape))

    out_shape = tuple(jax.ShapeDtypeStruct((2, m[1], batch * m[7]), jnp.float32) for m in layer_meta)
    out_specs = tuple(pl.BlockSpec((None, m[1], batch * m[7]), lambda s: (s, 0, 0)) for m in layer_meta)

    kern = functools.partial(_scale_block_kernel, batch=batch, num_pools=num_pools,
                             layer_meta=tuple(layer_meta), slope=slope)

    outs = pl.pallas_call(
        kern,
        grid=(2,),                       # real / generated stream -> both TCs on v7x
        in_specs=in_specs,
        out_specs=out_specs,
        out_shape=out_shape,
        compiler_params=pltpu.CompilerParams(dimension_semantics=("parallel",)),
    )(*operands)
    return list(outs), [m[7] for m in layer_meta]


# -------------------------------------- model glue ---------------------------------------
def msd_forward(prep_params, y, y_hat, cfg):
    """MultiScaleDiscriminator.forward -> (y_rs, y_gs, fmap_rs, fmap_gs)."""
    batch, t0 = y.shape
    # Both streams share weights: stream axis = grid axis, batch folded into the lane axis.
    x_in = jnp.stack([y.reshape(1, batch * t0), y_hat.reshape(1, batch * t0)],
                     axis=0).astype(jnp.float32)                     # (2, 1, B*T)

    y_rs, y_gs, fmap_rs, fmap_gs = [], [], [], []
    for s in range(3):
        outs, t_outs = run_scale_block(prep_params[s], x_in, num_pools=s,
                                       batch=batch, t0=t0, cfg=cfg)
        tmp_r, tmp_g = [], []
        for o, t_l in zip(outs, t_outs):
            c = o.shape[1]
            o = o.reshape(2, c, batch, t_l).transpose(0, 2, 1, 3)    # layout plumbing only
            tmp_r.append(o[0]); tmp_g.append(o[1])
        fmap_rs.append(tmp_r); fmap_gs.append(tmp_g)
        y_rs.append(tmp_r[-1].reshape(batch, -1))                    # flatten(1, -1)
        y_gs.append(tmp_g[-1].reshape(batch, -1))
    return y_rs, y_gs, fmap_rs, fmap_gs


# ------------------------------ pure-JAX reference (for checking) ------------------------
def _conv1d_ref(x, w, b, stride, padding, groups):
    out = jax.lax.conv_general_dilated(
        x, w, window_strides=(stride,), padding=[(padding, padding)],
        dimension_numbers=("NCH", "OIH", "NCH"), feature_group_count=groups,
        precision=jax.lax.Precision.HIGHEST)
    return out + b[None, :, None]


def _avg_pool_ref(x):
    w = jnp.full((1, 1, POOL_K), 1.0 / POOL_K, jnp.float32)
    return jax.lax.conv_general_dilated(
        x, w, window_strides=(POOL_S,), padding=[(POOL_P, POOL_P)],
        dimension_numbers=("NCH", "OIH", "NCH"), precision=jax.lax.Precision.HIGHEST)


def msd_forward_ref(raw_params, y, y_hat, cfg):
    slope = cfg["leaky_relu_slope"]

    def scale_block(layers, x):
        tmp = []
        n = len(layers)
        for i, ((w, b), stride, pad, groups) in enumerate(
                zip(layers, cfg["msd_strides"], cfg["msd_paddings"], cfg["msd_groups"])):
            x = _conv1d_ref(x, w, b, stride, pad, groups)
            if i != n - 1:
                x = jnp.where(x >= 0, x, slope * x)
            tmp.append(x)
        return x.reshape(x.shape[0], -1), tmp

    yy, yh = y[:, None, :], y_hat[:, None, :]
    y_rs, y_gs, fmap_rs, fmap_gs = [], [], [], []
    for s in range(3):
        if s > 0:
            yy, yh = _avg_pool_ref(yy), _avg_pool_ref(yh)
        r, tr = scale_block(raw_params[s], yy)
        g, tg = scale_block(raw_params[s], yh)
        y_rs.append(r); y_gs.append(g); fmap_rs.append(tr); fmap_gs.append(tg)
    return y_rs, y_gs, fmap_rs, fmap_gs


# ------------------------------------------ main -----------------------------------------
if __name__ == "__main__":
    key = jax.random.PRNGKey(0)
    k_params, k_y, k_yh = jax.random.split(key, 3)

    B, T = 2, 64
    y = jax.random.normal(k_y, (B, T), jnp.float32)
    y_hat = jax.random.normal(k_yh, (B, T), jnp.float32)

    raw_params = init_params(k_params, CONFIG)
    prep_params = prepare_params(raw_params, CONFIG)   # hoisted weight prep

    fwd = jax.jit(functools.partial(msd_forward, cfg=CONFIG))
    outs = fwd(prep_params, y, y_hat)
    jax.block_until_ready(outs)

    y_rs, y_gs, fmap_rs, fmap_gs = outs
    assert len(y_rs) == 3 and len(y_gs) == 3
    assert len(fmap_rs) == 3 and len(fmap_gs) == 3 and all(len(f) == 4 for f in fmap_rs)
    assert y_rs[0].shape == (B, 32) and y_rs[1].shape == (B, 17) and y_rs[2].shape == (B, 9)
    assert fmap_rs[0][0].shape == (B, 8, 64) and fmap_rs[0][3].shape == (B, 1, 32)

    # Cross-check against a pure-JAX (lax.conv) reference of the PyTorch module.
    ref = msd_forward_ref(raw_params, y, y_hat, CONFIG)
    got_leaves = jax.tree_util.tree_leaves(outs)
    ref_leaves = jax.tree_util.tree_leaves(ref)
    assert len(got_leaves) == len(ref_leaves)
    for a, b in zip(got_leaves, ref_leaves):
        assert a.shape == b.shape, (a.shape, b.shape)
        err = float(jnp.max(jnp.abs(a - b)))
        assert err < 2e-2, err

    print("KERNEL_OK")
</pallas_src>

<mosaic_0001>
module attributes {stable_mosaic.version = 11 : i64} {
  func.func @_scale_block_kernel(%arg0: i32, %arg1: memref<1x1x128xf32, #tpu.memory_space<vmem>>, %arg2: memref<128x66xf32, #tpu.memory_space<vmem>>, %arg3: memref<8x5xf32, #tpu.memory_space<vmem>>, %arg4: memref<8x1xf32, #tpu.memory_space<vmem>>, %arg5: memref<16x40xf32, #tpu.memory_space<vmem>>, %arg6: memref<16x1xf32, #tpu.memory_space<vmem>>, %arg7: memref<16x80xf32, #tpu.memory_space<vmem>>, %arg8: memref<16x1xf32, #tpu.memory_space<vmem>>, %arg9: memref<1x48xf32, #tpu.memory_space<vmem>>, %arg10: memref<1x1xf32, #tpu.memory_space<vmem>>, %arg11: memref<66x34xf32, #tpu.memory_space<vmem>>, %arg12: memref<1x8x66xf32, #tpu.memory_space<vmem>>, %arg13: memref<1x16x34xf32, #tpu.memory_space<vmem>>, %arg14: memref<1x16x34xf32, #tpu.memory_space<vmem>>, %arg15: memref<1x1x34xf32, #tpu.memory_space<vmem>>) attributes {dimension_semantics = [#tpu.dimension_semantics<parallel>], iteration_bounds = array<i64: 2>, scalar_prefetch = 0 : i64, scratch_operands = 0 : i64, tpu.core_type = #tpu.core_type<tc>, window_params = [{transform_indices = @transform_0, window_bounds = array<i64: 1, 1, 128>}, {pipeline_mode = #tpu.pipeline_mode<synchronous>, transform_indices = @transform_1, window_bounds = array<i64: 128, 66>}, {pipeline_mode = #tpu.pipeline_mode<synchronous>, transform_indices = @transform_2, window_bounds = array<i64: 8, 5>}, {pipeline_mode = #tpu.pipeline_mode<synchronous>, transform_indices = @transform_3, window_bounds = array<i64: 8, 1>}, {pipeline_mode = #tpu.pipeline_mode<synchronous>, transform_indices = @transform_4, window_bounds = array<i64: 16, 40>}, {pipeline_mode = #tpu.pipeline_mode<synchronous>, transform_indices = @transform_5, window_bounds = array<i64: 16, 1>}, {pipeline_mode = #tpu.pipeline_mode<synchronous>, transform_indices = @transform_6, window_bounds = array<i64: 16, 80>}, {pipeline_mode = #tpu.pipeline_mode<synchronous>, transform_indices = @transform_7, window_bounds = array<i64: 16, 1>}, {pipeline_mode = #tpu.pipeline_mode<synchronous>, transform_indices = @transform_8, window_bounds = array<i64: 1, 48>}, {pipeline_mode = #tpu.pipeline_mode<synchronous>, transform_indices = @transform_9, window_bounds = array<i64: 1, 1>}, {pipeline_mode = #tpu.pipeline_mode<synchronous>, transform_indices = @transform_10, window_bounds = array<i64: 66, 34>}, {transform_indices = @transform_11, window_bounds = array<i64: 1, 8, 66>}, {transform_indices = @transform_12, window_bounds = array<i64: 1, 16, 34>}, {transform_indices = @transform_13, window_bounds = array<i64: 1, 16, 34>}, {transform_indices = @transform_14, window_bounds = array<i64: 1, 1, 34>}]} {
    %c0 = arith.constant 0 : index
    %c0_0 = arith.constant 0 : index
    %c0_1 = arith.constant 0 : index
    %0 = vector.load %arg1[%c0, %c0_0, %c0_1] : memref<1x1x128xf32, #tpu.memory_space<vmem>>, vector<1x1x128xf32>
    %1 = vector.shape_cast %0 : vector<1x1x128xf32> to vector<1x128xf32>
    %c0_2 = arith.constant 0 : index
    %c0_3 = arith.constant 0 : index
    %2 = vector.load %arg2[%c0_2, %c0_3] : memref<128x66xf32, #tpu.memory_space<vmem>>, vector<128x66xf32>
    %cst = arith.constant dense<0.000000e+00> : vector<1x66xf32>
    %3 = tpu.matmul %1, %2, %cst {dimension_numbers = #tpu.dot_dimension_numbers<[1], [0], [0], [1], [0, 0, 1, 1], [], []>} : vector<1x128xf32>, vector<128x66xf32>, vector<1x66xf32> -> vector<1x66xf32>
    %cst_4 = arith.constant 2.500000e-01 : f32
    %4 = vector.broadcast %cst_4 : f32 to vector<1x66xf32>
    %5 = arith.mulf %4, %3 : vector<1x66xf32>
    %c0_5 = arith.constant 0 : index
    %c0_6 = arith.constant 0 : index
    %6 = vector.load %arg3[%c0_5, %c0_6] : memref<8x5xf32, #tpu.memory_space<vmem>>, vector<8x5xf32>
    %c0_7 = arith.constant 0 : index
    %c0_8 = arith.constant 0 : index
    %7 = vector.load %arg4[%c0_7, %c0_8] : memref<8x1xf32, #tpu.memory_space<vmem>>, vector<8x1xf32>
    %cst_9 = arith.constant 0.000000e+00 : f32
    %8 = vector.broadcast %cst_9 : f32 to vector<1x2xf32>
    %9 = vector.extract_strided_slice %5 {offsets = [0, 0], sizes = [1, 33], strides = [1, 1]} : vector<1x66xf32> to vector<1x33xf32>
    %10 = tpu.concatenate %8, %9, %8 in 1 : vector<1x2xf32>, vector<1x33xf32>, vector<1x2xf32> -> vector<1x37xf32>
    %11 = vector.extract_strided_slice %5 {offsets = [0, 33], sizes = [1, 33], strides = [1, 1]} : vector<1x66xf32> to vector<1x33xf32>
    %12 = tpu.concatenate %8, %11, %8 in 1 : vector<1x2xf32>, vector<1x33xf32>, vector<1x2xf32> -> vector<1x37xf32>
    %cst_10 = arith.constant 0.000000e+00 : f32
    %13 = vector.broadcast %cst_10 : f32 to vector<8x66xf32>
    %14 = vector.extract_strided_slice %10 {offsets = [0, 0], sizes = [1, 33], strides = [1, 1]} : vector<1x37xf32> to vector<1x33xf32>
    %15 = vector.extract_strided_slice %12 {offsets = [0, 0], sizes = [1, 33], strides = [1, 1]} : vector<1x37xf32> to vector<1x33xf32>
    %16 = tpu.concatenate %14, %15 in 1 : vector<1x33xf32>, vector<1x33xf32> -> vector<1x66xf32>
    %17 = vector.extract_strided_slice %6 {offsets = [0, 0], sizes = [8, 1], strides = [1, 1]} : vector<8x5xf32> to vector<8x1xf32>
    %18 = vector.broadcast %17 : vector<8x1xf32> to vector<8x66xf32>
    %19 = vector.broadcast %16 : vector<1x66xf32> to vector<8x66xf32>
    %20 = arith.mulf %18, %19 : vector<8x66xf32>
    %21 = arith.addf %13, %20 : vector<8x66xf32>
    %22 = vector.extract_strided_slice %10 {offsets = [0, 1], sizes = [1, 33], strides = [1, 1]} : vector<1x37xf32> to vector<1x33xf32>
    %23 = vector.extract_strided_slice %12 {offsets = [0, 1], sizes = [1, 33], strides = [1, 1]} : vector<1x37xf32> to vector<1x33xf32>
    %24 = tpu.concatenate %22, %23 in 1 : vector<1x33xf32>, vector<1x33xf32> -> vector<1x66xf32>
    %25 = vector.extract_strided_slice %6 {offsets = [0, 1], sizes = [8, 1], strides = [1, 1]} : vector<8x5xf32> to vector<8x1xf32>
    %26 = vector.broadcast %25 : vector<8x1xf32> to vector<8x66xf32>
    %27 = vector.broadcast %24 : vector<1x66xf32> to vector<8x66xf32>
    %28 = arith.mulf %26, %27 : vector<8x66xf32>
    %29 = arith.addf %21, %28 : vector<8x66xf32>
    %30 = vector.extract_strided_slice %10 {offsets = [0, 2], sizes = [1, 33], strides = [1, 1]} : vector<1x37xf32> to vector<1x33xf32>
    %31 = vector.extract_strided_slice %12 {offsets = [0, 2], sizes = [1, 33], strides = [1, 1]} : vector<1x37xf32> to vector<1x33xf32>
    %32 = tpu.concatenate %30, %31 in 1 : vector<1x33xf32>, vector<1x33xf32> -> vector<1x66xf32>
    %33 = vector.extract_strided_slice %6 {offsets = [0, 2], sizes = [8, 1], strides = [1, 1]} : vector<8x5xf32> to vector<8x1xf32>
    %34 = vector.broadcast %33 : vector<8x1xf32> to vector<8x66xf32>
    %35 = vector.broadcast %32 : vector<1x66xf32> to vector<8x66xf32>
    %36 = arith.mulf %34, %35 : vector<8x66xf32>
    %37 = arith.addf %29, %36 : vector<8x66xf32>
    %38 = vector.extract_strided_slice %10 {offsets = [0, 3], sizes = [1, 33], strides = [1, 1]} : vector<1x37xf32> to vector<1x33xf32>
    %39 = vector.extract_strided_slice %12 {offsets = [0, 3], sizes = [1, 33], strides = [1, 1]} : vector<1x37xf32> to vector<1x33xf32>
    %40 = tpu.concatenate %38, %39 in 1 : vector<1x33xf32>, vector<1x33xf32> -> vector<1x66xf32>
    %41 = vector.extract_strided_slice %6 {offsets = [0, 3], sizes = [8, 1], strides = [1, 1]} : vector<8x5xf32> to vector<8x1xf32>
    %42 = vector.broadcast %41 : vector<8x1xf32> to vector<8x66xf32>
    %43 = vector.broadcast %40 : vector<1x66xf32> to vector<8x66xf32>
    %44 = arith.mulf %42, %43 : vector<8x66xf32>
    %45 = arith.addf %37, %44 : vector<8x66xf32>
    %46 = vector.extract_strided_slice %10 {offsets = [0, 4], sizes = [1, 33], strides = [1, 1]} : vector<1x37xf32> to vector<1x33xf32>
    %47 = vector.extract_strided_slice %12 {offsets = [0, 4], sizes = [1, 33], strides = [1, 1]} : vector<1x37xf32> to vector<1x33xf32>
    %48 = tpu.concatenate %46, %47 in 1 : vector<1x33xf32>, vector<1x33xf32> -> vector<1x66xf32>
    %49 = vector.extract_strided_slice %6 {offsets = [0, 4], sizes = [8, 1], strides = [1, 1]} : vector<8x5xf32> to vector<8x1xf32>
    %50 = vector.broadcast %49 : vector<8x1xf32> to vector<8x66xf32>
    %51 = vector.broadcast %48 : vector<1x66xf32> to vector<8x66xf32>
    %52 = arith.mulf %50, %51 : vector<8x66xf32>
    %53 = arith.addf %45, %52 : vector<8x66xf32>
    %54 = vector.broadcast %7 : vector<8x1xf32> to vector<8x66xf32>
    %55 = arith.addf %53, %54 : vector<8x66xf32>
    %cst_11 = arith.constant 0.000000e+00 : f32
    %56 = vector.broadcast %cst_11 : f32 to vector<8x66xf32>
    %57 = arith.cmpf oge, %55, %56 : vector<8x66xf32>
    %cst_12 = arith.constant 1.000000e-01 : f32
    %58 = vector.broadcast %cst_12 : f32 to vector<8x66xf32>
    %59 = arith.mulf %58, %55 : vector<8x66xf32>
    %60 = arith.select %57, %55, %59 : vector<8x66xi1>, vector<8x66xf32>
    %c0_13 = arith.constant 0 : index
    %c0_14 = arith.constant 0 : index
    %c0_15 = arith.constant 0 : index
    %61 = vector.load %arg12[%c0_13, %c0_14, %c0_15] : memref<1x8x66xf32, #tpu.memory_space<vmem>>, vector<1x8x66xf32>
    %62 = vector.shape_cast %61 : vector<1x8x66xf32> to vector<8x66xf32>
    %63 = vector.shape_cast %60 : vector<8x66xf32> to vector<1x8x66xf32>
    tpu.vector_store %arg12[%c0_13, %c0_14, %c0_15], %63 {strides = array<i32>} : memref<1x8x66xf32, #tpu.memory_space<vmem>>, vector<1x8x66xf32>,
    %c0_16 = arith.constant 0 : index
    %c0_17 = arith.constant 0 : index
    %64 = vector.load %arg11[%c0_16, %c0_17] : memref<66x34xf32, #tpu.memory_space<vmem>>, vector<66x34xf32>
    %c0_18 = arith.constant 0 : index
    %c0_19 = arith.constant 0 : index
    %65 = vector.load %arg5[%c0_18, %c0_19] : memref<16x40xf32, #tpu.memory_space<vmem>>, vector<16x40xf32>
    %c0_20 = arith.constant 0 : index
    %c0_21 = arith.constant 0 : index
    %66 = vector.load %arg6[%c0_20, %c0_21] : memref<16x1xf32, #tpu.memory_space<vmem>>, vector<16x1xf32>
    %cst_22 = arith.constant 0.000000e+00 : f32
    %67 = vector.broadcast %cst_22 : f32 to vector<8x2xf32>
    %68 = vector.extract_strided_slice %60 {offsets = [0, 0], sizes = [8, 33], strides = [1, 1]} : vector<8x66xf32> to vector<8x33xf32>
    %69 = tpu.concatenate %67, %68, %67 in 1 : vector<8x2xf32>, vector<8x33xf32>, vector<8x2xf32> -> vector<8x37xf32>
    %70 = vector.extract_strided_slice %60 {offsets = [0, 33], sizes = [8, 33], strides = [1, 1]} : vector<8x66xf32> to vector<8x33xf32>
    %71 = tpu.concatenate %67, %70, %67 in 1 : vector<8x2xf32>, vector<8x33xf32>, vector<8x2xf32> -> vector<8x37xf32>
    %72 = vector.extract_strided_slice %69 {offsets = [0, 0], sizes = [8, 33], strides = [1, 1]} : vector<8x37xf32> to vector<8x33xf32>
    %73 = vector.extract_strided_slice %71 {offsets = [0, 0], sizes = [8, 33], strides = [1, 1]} : vector<8x37xf32> to vector<8x33xf32>
    %74 = tpu.concatenate %72, %73 in 1 : vector<8x33xf32>, vector<8x33xf32> -> vector<8x66xf32>
    %75 = vector.extract_strided_slice %69 {offsets = [0, 1], sizes = [8, 33], strides = [1, 1]} : vector<8x37xf32> to vector<8x33xf32>
    %76 = vector.extract_strided_slice %71 {offsets = [0, 1], sizes = [8, 33], strides = [1, 1]} : vector<8x37xf32> to vector<8x33xf32>
    %77 = tpu.concatenate %75, %76 in 1 : vector<8x33xf32>, vector<8x33xf32> -> vector<8x66xf32>
    %78 = vector.extract_strided_slice %69 {offsets = [0, 2], sizes = [8, 33], strides = [1, 1]} : vector<8x37xf32> to vector<8x33xf32>
    %79 = vector.extract_strided_slice %71 {offsets = [0, 2], sizes = [8, 33], strides = [1, 1]} : vector<8x37xf32> to vector<8x33xf32>
    %80 = tpu.concatenate %78, %79 in 1 : vector<8x33xf32>, vector<8x33xf32> -> vector<8x66xf32>
    %81 = vector.extract_strided_slice %69 {offsets = [0, 3], sizes = [8, 33], strides = [1, 1]} : vector<8x37xf32> to vector<8x33xf32>
    %82 = vector.extract_strided_slice %71 {offsets = [0, 3], sizes = [8, 33], strides = [1, 1]} : vector<8x37xf32> to vector<8x33xf32>
    %83 = tpu.concatenate %81, %82 in 1 : vector<8x33xf32>, vector<8x33xf32> -> vector<8x66xf32>
    %84 = vector.extract_strided_slice %69 {offsets = [0, 4], sizes = [8, 33], strides = [1, 1]} : vector<8x37xf32> to vector<8x33xf32>
    %85 = vector.extract_strided_slice %71 {offsets = [0, 4], sizes = [8, 33], strides = [1, 1]} : vector<8x37xf32> to vector<8x33xf32>
    %86 = tpu.concatenate %84, %85 in 1 : vector<8x33xf32>, vector<8x33xf32> -> vector<8x66xf32>
    %87 = tpu.concatenate %74, %77, %80, %83, %86 in 0 : vector<8x66xf32>, vector<8x66xf32>, vector<8x66xf32>, vector<8x66xf32>, vector<8x66xf32> -> vector<40x66xf32>
    %cst_23 = arith.constant dense<0.000000e+00> : vector<16x66xf32>
    %88 = tpu.matmul %65, %87, %cst_23 {dimension_numbers = #tpu.dot_dimension_numbers<[1], [0], [0], [1], [0, 0, 1, 1], [], []>} : vector<16x40xf32>, vector<40x66xf32>, vector<16x66xf32> -> vector<16x66xf32>
    %cst_24 = arith.constant dense<0.000000e+00> : vector<16x34xf32>
    %89 = tpu.matmul %88, %64, %cst_24 {dimension_numbers = #tpu.dot_dimension_numbers<[1], [0], [0], [1], [0, 0, 1, 1], [], []>} : vector<16x66xf32>, vector<66x34xf32>, vector<16x34xf32> -> vector<16x34xf32>
    %90 = vector.broadcast %66 : vector<16x1xf32> to vector<16x34xf32>
    %91 = arith.addf %89, %90 : vector<16x34xf32>
    %cst_25 = arith.constant 0.000000e+00 : f32
    %92 = vector.broadcast %cst_25 : f32 to vector<16x34xf32>
    %93 = arith.cmpf oge, %91, %92 : vector<16x34xf32>
    %cst_26 = arith.constant 1.000000e-01 : f32
    %94 = vector.broadcast %cst_26 : f32 to vector<16x34xf32>
    %95 = arith.mulf %94, %91 : vector<16x34xf32>
    %96 = arith.select %93, %91, %95 : vector<16x34xi1>, vector<16x34xf32>
    %c0_27 = arith.constant 0 : index
    %c0_28 = arith.constant 0 : index
    %c0_29 = arith.constant 0 : index
    %97 = vector.load %arg13[%c0_27, %c0_28, %c0_29] : memref<1x16x34xf32, #tpu.memory_space<vmem>>, vector<1x16x34xf32>
    %98 = vector.shape_cast %97 : vector<1x16x34xf32> to vector<16x34xf32>
    %99 = vector.shape_cast %96 : vector<16x34xf32> to vector<1x16x34xf32>
    tpu.vector_store %arg13[%c0_27, %c0_28, %c0_29], %99 {strides = array<i32>} : memref<1x16x34xf32, #tpu.memory_space<vmem>>, vector<1x16x34xf32>,
    %c0_30 = arith.constant 0 : index
    %c0_31 = arith.constant 0 : index
    %100 = vector.load %arg7[%c0_30, %c0_31] : memref<16x80xf32, #tpu.memory_space<vmem>>, vector<16x80xf32>
    %c0_32 = arith.constant 0 : index
    %c0_33 = arith.constant 0 : index
    %101 = vector.load %arg8[%c0_32, %c0_33] : memref<16x1xf32, #tpu.memory_space<vmem>>, vector<16x1xf32>
    %cst_34 = arith.constant 0.000000e+00 : f32
    %102 = vector.broadcast %cst_34 : f32 to vector<16x2xf32>
    %103 = vector.extract_strided_slice %96 {offsets = [0, 0], sizes = [16, 17], strides = [1, 1]} : vector<16x34xf32> to vector<16x17xf32>
    %104 = tpu.concatenate %102, %103, %102 in 1 : vector<16x2xf32>, vector<16x17xf32>, vector<16x2xf32> -> vector<16x21xf32>
    %105 = vector.extract_strided_slice %96 {offsets = [0, 17], sizes = [16, 17], strides = [1, 1]} : vector<16x34xf32> to vector<16x17xf32>
    %106 = tpu.concatenate %102, %105, %102 in 1 : vector<16x2xf32>, vector<16x17xf32>, vector<16x2xf32> -> vector<16x21xf32>
    %107 = vector.extract_strided_slice %104 {offsets = [0, 0], sizes = [16, 17], strides = [1, 1]} : vector<16x21xf32> to vector<16x17xf32>
    %108 = vector.extract_strided_slice %106 {offsets = [0, 0], sizes = [16, 17], strides = [1, 1]} : vector<16x21xf32> to vector<16x17xf32>
    %109 = tpu.concatenate %107, %108 in 1 : vector<16x17xf32>, vector<16x17xf32> -> vector<16x34xf32>
    %110 = vector.extract_strided_slice %104 {offsets = [0, 1], sizes = [16, 17], strides = [1, 1]} : vector<16x21xf32> to vector<16x17xf32>
    %111 = vector.extract_strided_slice %106 {offsets = [0, 1], sizes = [16, 17], strides = [1, 1]} : vector<16x21xf32> to vector<16x17xf32>
    %112 = tpu.concatenate %110, %111 in 1 : vector<16x17xf32>, vector<16x17xf32> -> vector<16x34xf32>
    %113 = vector.extract_strided_slice %104 {offsets = [0, 2], sizes = [16, 17], strides = [1, 1]} : vector<16x21xf32> to vector<16x17xf32>
    %114 = vector.extract_strided_slice %106 {offsets = [0, 2], sizes = [16, 17], strides = [1, 1]} : vector<16x21xf32> to vector<16x17xf32>
    %115 = tpu.concatenate %113, %114 in 1 : vector<16x17xf32>, vector<16x17xf32> -> vector<16x34xf32>
    %116 = vector.extract_strided_slice %104 {offsets = [0, 3], sizes = [16, 17], strides = [1, 1]} : vector<16x21xf32> to vector<16x17xf32>
    %117 = vector.extract_strided_slice %106 {offsets = [0, 3], sizes = [16, 17], strides = [1, 1]} : vector<16x21xf32> to vector<16x17xf32>
    %118 = tpu.concatenate %116, %117 in 1 : vector<16x17xf32>, vector<16x17xf32> -> vector<16x34xf32>
    %119 = vector.extract_strided_slice %104 {offsets = [0, 4], sizes = [16, 17], strides = [1, 1]} : vector<16x21xf32> to vector<16x17xf32>
    %120 = vector.extract_strided_slice %106 {offsets = [0, 4], sizes = [16, 17], strides = [1, 1]} : vector<16x21xf32> to vector<16x17xf32>
    %121 = tpu.concatenate %119, %120 in 1 : vector<16x17xf32>, vector<16x17xf32> -> vector<16x34xf32>
    %122 = tpu.concatenate %109, %112, %115, %118, %121 in 0 : vector<16x34xf32>, vector<16x34xf32>, vector<16x34xf32>, vector<16x34xf32>, vector<16x34xf32> -> vector<80x34xf32>
    %cst_35 = arith.constant dense<0.000000e+00> : vector<16x34xf32>
    %123 = tpu.matmul %100, %122, %cst_35 {dimension_numbers = #tpu.dot_dimension_numbers<[1], [0], [0], [1], [0, 0, 1, 1], [], []>} : vector<16x80xf32>, vector<80x34xf32>, vector<16x34xf32> -> vector<16x34xf32>
    %124 = vector.broadcast %101 : vector<16x1xf32> to vector<16x34xf32>
    %125 = arith.addf %123, %124 : vector<16x34xf32>
    %cst_36 = arith.constant 0.000000e+00 : f32
    %126 = vector.broadcast %cst_36 : f32 to vector<16x34xf32>
    %127 = arith.cmpf oge, %125, %126 : vector<16x34xf32>
    %cst_37 = arith.constant 1.000000e-01 : f32
    %128 = vector.broadcast %cst_37 : f32 to vector<16x34xf32>
    %129 = arith.mulf %128, %125 : vector<16x34xf32>
    %130 = arith.select %127, %125, %129 : vector<16x34xi1>, vector<16x34xf32>
    %c0_38 = arith.constant 0 : index
    %c0_39 = arith.constant 0 : index
    %c0_40 = arith.constant 0 : index
    %131 = vector.load %arg14[%c0_38, %c0_39, %c0_40] : memref<1x16x34xf32, #tpu.memory_space<vmem>>, vector<1x16x34xf32>
    %132 = vector.shape_cast %131 : vector<1x16x34xf32> to vector<16x34xf32>
    %133 = vector.shape_cast %130 : vector<16x34xf32> to vector<1x16x34xf32>
    tpu.vector_store %arg14[%c0_38, %c0_39, %c0_40], %133 {strides = array<i32>} : memref<1x16x34xf32, #tpu.memory_space<vmem>>, vector<1x16x34xf32>,
    %c0_41 = arith.constant 0 : index
    %c0_42 = arith.constant 0 : index
    %134 = vector.load %arg9[%c0_41, %c0_42] : memref<1x48xf32, #tpu.memory_space<vmem>>, vector<1x48xf32>
    %c0_43 = arith.constant 0 : index
    %c0_44 = arith.constant 0 : index
    %135 = vector.load %arg10[%c0_43, %c0_44] : memref<1x1xf32, #tpu.memory_space<vmem>>, vector<1x1xf32>
    %cst_45 = arith.constant 0.000000e+00 : f32
    %136 = vector.broadcast %cst_45 : f32 to vector<16x1xf32>
    %137 = vector.extract_strided_slice %130 {offsets = [0, 0], sizes = [16, 17], strides = [1, 1]} : vector<16x34xf32> to vector<16x17xf32>
    %138 = tpu.concatenate %136, %137, %136 in 1 : vector<16x1xf32>, vector<16x17xf32>, vector<16x1xf32> -> vector<16x19xf32>
    %139 = vector.extract_strided_slice %130 {offsets = [0, 17], sizes = [16, 17], strides = [1, 1]} : vector<16x34xf32> to vector<16x17xf32>
    %140 = tpu.concatenate %136, %139, %136 in 1 : vector<16x1xf32>, vector<16x17xf32>, vector<16x1xf32> -> vector<16x19xf32>
    %141 = vector.extract_strided_slice %138 {offsets = [0, 0], sizes = [16, 17], strides = [1, 1]} : vector<16x19xf32> to vector<16x17xf32>
    %142 = vector.extract_strided_slice %140 {offsets = [0, 0], sizes = [16, 17], strides = [1, 1]} : vector<16x19xf32> to vector<16x17xf32>
    %143 = tpu.concatenate %141, %142 in 1 : vector<16x17xf32>, vector<16x17xf32> -> vector<16x34xf32>
    %144 = vector.extract_strided_slice %138 {offsets = [0, 1], sizes = [16, 17], strides = [1, 1]} : vector<16x19xf32> to vector<16x17xf32>
    %145 = vector.extract_strided_slice %140 {offsets = [0, 1], sizes = [16, 17], strides = [1, 1]} : vector<16x19xf32> to vector<16x17xf32>
    %146 = tpu.concatenate %144, %145 in 1 : vector<16x17xf32>, vector<16x17xf32> -> vector<16x34xf32>
    %147 = vector.extract_strided_slice %138 {offsets = [0, 2], sizes = [16, 17], strides = [1, 1]} : vector<16x19xf32> to vector<16x17xf32>
    %148 = vector.extract_strided_slice %140 {offsets = [0, 2], sizes = [16, 17], strides = [1, 1]} : vector<16x19xf32> to vector<16x17xf32>
    %149 = tpu.concatenate %147, %148 in 1 : vector<16x17xf32>, vector<16x17xf32> -> vector<16x34xf32>
    %150 = tpu.concatenate %143, %146, %149 in 0 : vector<16x34xf32>, vector<16x34xf32>, vector<16x34xf32> -> vector<48x34xf32>
    %cst_46 = arith.constant dense<0.000000e+00> : vector<1x34xf32>
    %151 = tpu.matmul %134, %150, %cst_46 {dimension_numbers = #tpu.dot_dimension_numbers<[1], [0], [0], [1], [0, 0, 1, 1], [], []>} : vector<1x48xf32>, vector<48x34xf32>, vector<1x34xf32> -> vector<1x34xf32>
    %152 = vector.broadcast %135 : vector<1x1xf32> to vector<1x34xf32>
    %153 = arith.addf %151, %152 : vector<1x34xf32>
    %c0_47 = arith.constant 0 : index
    %c0_48 = arith.constant 0 : index
    %c0_49 = arith.constant 0 : index
    %154 = vector.load %arg15[%c0_47, %c0_48, %c0_49] : memref<1x1x34xf32, #tpu.memory_space<vmem>>, vector<1x1x34xf32>
    %155 = vector.shape_cast %154 : vector<1x1x34xf32> to vector<1x34xf32>
    %156 = vector.shape_cast %153 : vector<1x34xf32> to vector<1x1x34xf32>
    tpu.vector_store %arg15[%c0_47, %c0_48, %c0_49], %156 {strides = array<i32>} : memref<1x1x34xf32, #tpu.memory_space<vmem>>, vector<1x1x34xf32>,
    return
  }
  func.func @transform_0(%arg0: i32) -> (i32, i32, i32) {
    %c0_i32 = arith.constant 0 : i32
    %c0_i32_0 = arith.constant 0 : i32
    %c0_i32_1 = arith.constant 0 : i32
    return %arg0, %c0_i32, %c0_i32_0 : i32, i32, i32
  }
  func.func @transform_1(%arg0: i32) -> (i32, i32) {
    %c0_i32 = arith.constant 0 : i32
    %c0_i32_0 = arith.constant 0 : i32
    %c0_i32_1 = arith.constant 0 : i32
    return %c0_i32, %c0_i32_0 : i32, i32
  }
  func.func @transform_2(%arg0: i32) -> (i32, i32) {
    %c0_i32 = arith.constant 0 : i32
    %c0_i32_0 = arith.constant 0 : i32
    %c0_i32_1 = arith.constant 0 : i32
    return %c0_i32, %c0_i32_0 : i32, i32
  }
  func.func @transform_3(%arg0: i32) -> (i32, i32) {
    %c0_i32 = arith.constant 0 : i32
    %c0_i32_0 = arith.constant 0 : i32
    %c0_i32_1 = arith.constant 0 : i32
    return %c0_i32, %c0_i32_0 : i32, i32
  }
  func.func @transform_4(%arg0: i32) -> (i32, i32) {
    %c0_i32 = arith.constant 0 : i32
    %c0_i32_0 = arith.constant 0 : i32
    %c0_i32_1 = arith.constant 0 : i32
    return %c0_i32, %c0_i32_0 : i32, i32
  }
  func.func @transform_5(%arg0: i32) -> (i32, i32) {
    %c0_i32 = arith.constant 0 : i32
    %c0_i32_0 = arith.constant 0 : i32
    %c0_i32_1 = arith.constant 0 : i32
    return %c0_i32, %c0_i32_0 : i32, i32
  }
  func.func @transform_6(%arg0: i32) -> (i32, i32) {
    %c0_i32 = arith.constant 0 : i32
    %c0_i32_0 = arith.constant 0 : i32
    %c0_i32_1 = arith.constant 0 : i32
    return %c0_i32, %c0_i32_0 : i32, i32
  }
  func.func @transform_7(%arg0: i32) -> (i32, i32) {
    %c0_i32 = arith.constant 0 : i32
    %c0_i32_0 = arith.constant 0 : i32
    %c0_i32_1 = arith.constant 0 : i32
    return %c0_i32, %c0_i32_0 : i32, i32
  }
  func.func @transform_8(%arg0: i32) -> (i32, i32) {
    %c0_i32 = arith.constant 0 : i32
    %c0_i32_0 = arith.constant 0 : i32
    %c0_i32_1 = arith.constant 0 : i32
    return %c0_i32, %c0_i32_0 : i32, i32
  }
  func.func @transform_9(%arg0: i32) -> (i32, i32) {
    %c0_i32 = arith.constant 0 : i32
    %c0_i32_0 = arith.constant 0 : i32
    %c0_i32_1 = arith.constant 0 : i32
    return %c0_i32, %c0_i32_0 : i32, i32
  }
  func.func @transform_10(%arg0: i32) -> (i32, i32) {
    %c0_i32 = arith.constant 0 : i32
    %c0_i32_0 = arith.constant 0 : i32
    %c0_i32_1 = arith.constant 0 : i32
    return %c0_i32, %c0_i32_0 : i32, i32
  }
  func.func @transform_11(%arg0: i32) -> (i32, i32, i32) {
    %c0_i32 = arith.constant 0 : i32
    %c0_i32_0 = arith.constant 0 : i32
    %c0_i32_1 = arith.constant 0 : i32
    return %arg0, %c0_i32, %c0_i32_0 : i32, i32, i32
  }
  func.func @transform_12(%arg0: i32) -> (i32, i32, i32) {
    %c0_i32 = arith.constant 0 : i32
    %c0_i32_0 = arith.constant 0 : i32
    %c0_i32_1 = arith.constant 0 : i32
    return %arg0, %c0_i32, %c0_i32_0 : i32, i32, i32
  }
  func.func @transform_13(%arg0: i32) -> (i32, i32, i32) {
    %c0_i32 = arith.constant 0 : i32
    %c0_i32_0 = arith.constant 0 : i32
    %c0_i32_1 = arith.constant 0 : i32
    return %arg0, %c0_i32, %c0_i32_0 : i32, i32, i32
  }
  func.func @transform_14(%arg0: i32) -> (i32, i32, i32) {
    %c0_i32 = arith.constant 0 : i32
    %c0_i32_0 = arith.constant 0 : i32
    %c0_i32_1 = arith.constant 0 : i32
    return %arg0, %c0_i32, %c0_i32_0 : i32, i32, i32
  }
}

module attributes {stable_mosaic.version = 11 : i64} {
  func.func @_scale_block_kernel(%arg0: i32, %arg1: memref<1x1x128xf32, #tpu.memory_space<vmem>>, %arg2: memref<8x5xf32, #tpu.memory_space<vmem>>, %arg3: memref<8x1xf32, #tpu.memory_space<vmem>>, %arg4: memref<16x40xf32, #tpu.memory_space<vmem>>, %arg5: memref<16x1xf32, #tpu.memory_space<vmem>>, %arg6: memref<16x80xf32, #tpu.memory_space<vmem>>, %arg7: memref<16x1xf32, #tpu.memory_space<vmem>>, %arg8: memref<1x48xf32, #tpu.memory_space<vmem>>, %arg9: memref<1x1xf32, #tpu.memory_space<vmem>>, %arg10: memref<128x64xf32, #tpu.memory_space<vmem>>, %arg11: memref<1x8x128xf32, #tpu.memory_space<vmem>>, %arg12: memref<1x16x64xf32, #tpu.memory_space<vmem>>, %arg13: memref<1x16x64xf32, #tpu.memory_space<vmem>>, %arg14: memref<1x1x64xf32, #tpu.memory_space<vmem>>) attributes {dimension_semantics = [#tpu.dimension_semantics<parallel>], iteration_bounds = array<i64: 2>, scalar_prefetch = 0 : i64, scratch_operands = 0 : i64, tpu.core_type = #tpu.core_type<tc>, window_params = [{transform_indices = @transform_0, window_bounds = array<i64: 1, 1, 128>}, {pipeline_mode = #tpu.pipeline_mode<synchronous>, transform_indices = @transform_1, window_bounds = array<i64: 8, 5>}, {pipeline_mode = #tpu.pipeline_mode<synchronous>, transform_indices = @transform_2, window_bounds = array<i64: 8, 1>}, {pipeline_mode = #tpu.pipeline_mode<synchronous>, transform_indices = @transform_3, window_bounds = array<i64: 16, 40>}, {pipeline_mode = #tpu.pipeline_mode<synchronous>, transform_indices = @transform_4, window_bounds = array<i64: 16, 1>}, {pipeline_mode = #tpu.pipeline_mode<synchronous>, transform_indices = @transform_5, window_bounds = array<i64: 16, 80>}, {pipeline_mode = #tpu.pipeline_mode<synchronous>, transform_indices = @transform_6, window_bounds = array<i64: 16, 1>}, {pipeline_mode = #tpu.pipeline_mode<synchronous>, transform_indices = @transform_7, window_bounds = array<i64: 1, 48>}, {pipeline_mode = #tpu.pipeline_mode<synchronous>, transform_indices = @transform_8, window_bounds = array<i64: 1, 1>}, {pipeline_mode = #tpu.pipeline_mode<synchronous>, transform_indices = @transform_9, window_bounds = array<i64: 128, 64>}, {transform_indices = @transform_10, window_bounds = array<i64: 1, 8, 128>}, {transform_indices = @transform_11, window_bounds = array<i64: 1, 16, 64>}, {transform_indices = @transform_12, window_bounds = array<i64: 1, 16, 64>}, {transform_indices = @transform_13, window_bounds = array<i64: 1, 1, 64>}]} {
    %c0 = arith.constant 0 : index
    %c0_0 = arith.constant 0 : index
    %c0_1 = arith.constant 0 : index
    %0 = vector.load %arg1[%c0, %c0_0, %c0_1] : memref<1x1x128xf32, #tpu.memory_space<vmem>>, vector<1x1x128xf32>
    %1 = vector.shape_cast %0 : vector<1x1x128xf32> to vector<1x128xf32>
    %c0_2 = arith.constant 0 : index
    %c0_3 = arith.constant 0 : index
    %2 = vector.load %arg2[%c0_2, %c0_3] : memref<8x5xf32, #tpu.memory_space<vmem>>, vector<8x5xf32>
    %c0_4 = arith.constant 0 : index
    %c0_5 = arith.constant 0 : index
    %3 = vector.load %arg3[%c0_4, %c0_5] : memref<8x1xf32, #tpu.memory_space<vmem>>, vector<8x1xf32>
    %cst = arith.constant 0.000000e+00 : f32
    %4 = vector.broadcast %cst : f32 to vector<1x2xf32>
    %5 = vector.extract_strided_slice %1 {offsets = [0, 0], sizes = [1, 64], strides = [1, 1]} : vector<1x128xf32> to vector<1x64xf32>
    %6 = tpu.concatenate %4, %5, %4 in 1 : vector<1x2xf32>, vector<1x64xf32>, vector<1x2xf32> -> vector<1x68xf32>
    %7 = vector.extract_strided_slice %1 {offsets = [0, 64], sizes = [1, 64], strides = [1, 1]} : vector<1x128xf32> to vector<1x64xf32>
    %8 = tpu.concatenate %4, %7, %4 in 1 : vector<1x2xf32>, vector<1x64xf32>, vector<1x2xf32> -> vector<1x68xf32>
    %cst_6 = arith.constant 0.000000e+00 : f32
    %9 = vector.broadcast %cst_6 : f32 to vector<8x128xf32>
    %10 = vector.extract_strided_slice %6 {offsets = [0, 0], sizes = [1, 64], strides = [1, 1]} : vector<1x68xf32> to vector<1x64xf32>
    %11 = vector.extract_strided_slice %8 {offsets = [0, 0], sizes = [1, 64], strides = [1, 1]} : vector<1x68xf32> to vector<1x64xf32>
    %12 = tpu.concatenate %10, %11 in 1 : vector<1x64xf32>, vector<1x64xf32> -> vector<1x128xf32>
    %13 = vector.extract_strided_slice %2 {offsets = [0, 0], sizes = [8, 1], strides = [1, 1]} : vector<8x5xf32> to vector<8x1xf32>
    %14 = vector.broadcast %13 : vector<8x1xf32> to vector<8x128xf32>
    %15 = vector.broadcast %12 : vector<1x128xf32> to vector<8x128xf32>
    %16 = arith.mulf %14, %15 : vector<8x128xf32>
    %17 = arith.addf %9, %16 : vector<8x128xf32>
    %18 = vector.extract_strided_slice %6 {offsets = [0, 1], sizes = [1, 64], strides = [1, 1]} : vector<1x68xf32> to vector<1x64xf32>
    %19 = vector.extract_strided_slice %8 {offsets = [0, 1], sizes = [1, 64], strides = [1, 1]} : vector<1x68xf32> to vector<1x64xf32>
    %20 = tpu.concatenate %18, %19 in 1 : vector<1x64xf32>, vector<1x64xf32> -> vector<1x128xf32>
    %21 = vector.extract_strided_slice %2 {offsets = [0, 1], sizes = [8, 1], strides = [1, 1]} : vector<8x5xf32> to vector<8x1xf32>
    %22 = vector.broadcast %21 : vector<8x1xf32> to vector<8x128xf32>
    %23 = vector.broadcast %20 : vector<1x128xf32> to vector<8x128xf32>
    %24 = arith.mulf %22, %23 : vector<8x128xf32>
    %25 = arith.addf %17, %24 : vector<8x128xf32>
    %26 = vector.extract_strided_slice %6 {offsets = [0, 2], sizes = [1, 64], strides = [1, 1]} : vector<1x68xf32> to vector<1x64xf32>
    %27 = vector.extract_strided_slice %8 {offsets = [0, 2], sizes = [1, 64], strides = [1, 1]} : vector<1x68xf32> to vector<1x64xf32>
    %28 = tpu.concatenate %26, %27 in 1 : vector<1x64xf32>, vector<1x64xf32> -> vector<1x128xf32>
    %29 = vector.extract_strided_slice %2 {offsets = [0, 2], sizes = [8, 1], strides = [1, 1]} : vector<8x5xf32> to vector<8x1xf32>
    %30 = vector.broadcast %29 : vector<8x1xf32> to vector<8x128xf32>
    %31 = vector.broadcast %28 : vector<1x128xf32> to vector<8x128xf32>
    %32 = arith.mulf %30, %31 : vector<8x128xf32>
    %33 = arith.addf %25, %32 : vector<8x128xf32>
    %34 = vector.extract_strided_slice %6 {offsets = [0, 3], sizes = [1, 64], strides = [1, 1]} : vector<1x68xf32> to vector<1x64xf32>
    %35 = vector.extract_strided_slice %8 {offsets = [0, 3], sizes = [1, 64], strides = [1, 1]} : vector<1x68xf32> to vector<1x64xf32>
    %36 = tpu.concatenate %34, %35 in 1 : vector<1x64xf32>, vector<1x64xf32> -> vector<1x128xf32>
    %37 = vector.extract_strided_slice %2 {offsets = [0, 3], sizes = [8, 1], strides = [1, 1]} : vector<8x5xf32> to vector<8x1xf32>
    %38 = vector.broadcast %37 : vector<8x1xf32> to vector<8x128xf32>
    %39 = vector.broadcast %36 : vector<1x128xf32> to vector<8x128xf32>
    %40 = arith.mulf %38, %39 : vector<8x128xf32>
    %41 = arith.addf %33, %40 : vector<8x128xf32>
    %42 = vector.extract_strided_slice %6 {offsets = [0, 4], sizes = [1, 64], strides = [1, 1]} : vector<1x68xf32> to vector<1x64xf32>
    %43 = vector.extract_strided_slice %8 {offsets = [0, 4], sizes = [1, 64], strides = [1, 1]} : vector<1x68xf32> to vector<1x64xf32>
    %44 = tpu.concatenate %42, %43 in 1 : vector<1x64xf32>, vector<1x64xf32> -> vector<1x128xf32>
    %45 = vector.extract_strided_slice %2 {offsets = [0, 4], sizes = [8, 1], strides = [1, 1]} : vector<8x5xf32> to vector<8x1xf32>
    %46 = vector.broadcast %45 : vector<8x1xf32> to vector<8x128xf32>
    %47 = vector.broadcast %44 : vector<1x128xf32> to vector<8x128xf32>
    %48 = arith.mulf %46, %47 : vector<8x128xf32>
    %49 = arith.addf %41, %48 : vector<8x128xf32>
    %50 = vector.broadcast %3 : vector<8x1xf32> to vector<8x128xf32>
    %51 = arith.addf %49, %50 : vector<8x128xf32>
    %cst_7 = arith.constant 0.000000e+00 : f32
    %52 = vector.broadcast %cst_7 : f32 to vector<8x128xf32>
    %53 = arith.cmpf oge, %51, %52 : vector<8x128xf32>
    %cst_8 = arith.constant 1.000000e-01 : f32
    %54 = vector.broadcast %cst_8 : f32 to vector<8x128xf32>
    %55 = arith.mulf %54, %51 : vector<8x128xf32>
    %56 = arith.select %53, %51, %55 : vector<8x128xi1>, vector<8x128xf32>
    %c0_9 = arith.constant 0 : index
    %c0_10 = arith.constant 0 : index
    %c0_11 = arith.constant 0 : index
    %57 = vector.load %arg11[%c0_9, %c0_10, %c0_11] : memref<1x8x128xf32, #tpu.memory_space<vmem>>, vector<1x8x128xf32>
    %58 = vector.shape_cast %57 : vector<1x8x128xf32> to vector<8x128xf32>
    %59 = vector.shape_cast %56 : vector<8x128xf32> to vector<1x8x128xf32>
    tpu.vector_store %arg11[%c0_9, %c0_10, %c0_11], %59 {strides = array<i32>} : memref<1x8x128xf32, #tpu.memory_space<vmem>>, vector<1x8x128xf32>,
    %c0_12 = arith.constant 0 : index
    %c0_13 = arith.constant 0 : index
    %60 = vector.load %arg10[%c0_12, %c0_13] : memref<128x64xf32, #tpu.memory_space<vmem>>, vector<128x64xf32>
    %c0_14 = arith.constant 0 : index
    %c0_15 = arith.constant 0 : index
    %61 = vector.load %arg4[%c0_14, %c0_15] : memref<16x40xf32, #tpu.memory_space<vmem>>, vector<16x40xf32>
    %c0_16 = arith.constant 0 : index
    %c0_17 = arith.constant 0 : index
    %62 = vector.load %arg5[%c0_16, %c0_17] : memref<16x1xf32, #tpu.memory_space<vmem>>, vector<16x1xf32>
    %cst_18 = arith.constant 0.000000e+00 : f32
    %63 = vector.broadcast %cst_18 : f32 to vector<8x2xf32>
    %64 = vector.extract_strided_slice %56 {offsets = [0, 0], sizes = [8, 64], strides = [1, 1]} : vector<8x128xf32> to vector<8x64xf32>
    %65 = tpu.concatenate %63, %64, %63 in 1 : vector<8x2xf32>, vector<8x64xf32>, vector<8x2xf32> -> vector<8x68xf32>
    %66 = vector.extract_strided_slice %56 {offsets = [0, 64], sizes = [8, 64], strides = [1, 1]} : vector<8x128xf32> to vector<8x64xf32>
    %67 = tpu.concatenate %63, %66, %63 in 1 : vector<8x2xf32>, vector<8x64xf32>, vector<8x2xf32> -> vector<8x68xf32>
    %68 = vector.extract_strided_slice %65 {offsets = [0, 0], sizes = [8, 64], strides = [1, 1]} : vector<8x68xf32> to vector<8x64xf32>
    %69 = vector.extract_strided_slice %67 {offsets = [0, 0], sizes = [8, 64], strides = [1, 1]} : vector<8x68xf32> to vector<8x64xf32>
    %70 = tpu.concatenate %68, %69 in 1 : vector<8x64xf32>, vector<8x64xf32> -> vector<8x128xf32>
    %71 = vector.extract_strided_slice %65 {offsets = [0, 1], sizes = [8, 64], strides = [1, 1]} : vector<8x68xf32> to vector<8x64xf32>
    %72 = vector.extract_strided_slice %67 {offsets = [0, 1], sizes = [8, 64], strides = [1, 1]} : vector<8x68xf32> to vector<8x64xf32>
    %73 = tpu.concatenate %71, %72 in 1 : vector<8x64xf32>, vector<8x64xf32> -> vector<8x128xf32>
    %74 = vector.extract_strided_slice %65 {offsets = [0, 2], sizes = [8, 64], strides = [1, 1]} : vector<8x68xf32> to vector<8x64xf32>
    %75 = vector.extract_strided_slice %67 {offsets = [0, 2], sizes = [8, 64], strides = [1, 1]} : vector<8x68xf32> to vector<8x64xf32>
    %76 = tpu.concatenate %74, %75 in 1 : vector<8x64xf32>, vector<8x64xf32> -> vector<8x128xf32>
    %77 = vector.extract_strided_slice %65 {offsets = [0, 3], sizes = [8, 64], strides = [1, 1]} : vector<8x68xf32> to vector<8x64xf32>
    %78 = vector.extract_strided_slice %67 {offsets = [0, 3], sizes = [8, 64], strides = [1, 1]} : vector<8x68xf32> to vector<8x64xf32>
    %79 = tpu.concatenate %77, %78 in 1 : vector<8x64xf32>, vector<8x64xf32> -> vector<8x128xf32>
    %80 = vector.extract_strided_slice %65 {offsets = [0, 4], sizes = [8, 64], strides = [1, 1]} : vector<8x68xf32> to vector<8x64xf32>
    %81 = vector.extract_strided_slice %67 {offsets = [0, 4], sizes = [8, 64], strides = [1, 1]} : vector<8x68xf32> to vector<8x64xf32>
    %82 = tpu.concatenate %80, %81 in 1 : vector<8x64xf32>, vector<8x64xf32> -> vector<8x128xf32>
    %83 = tpu.concatenate %70, %73, %76, %79, %82 in 0 : vector<8x128xf32>, vector<8x128xf32>, vector<8x128xf32>, vector<8x128xf32>, vector<8x128xf32> -> vector<40x128xf32>
    %cst_19 = arith.constant dense<0.000000e+00> : vector<16x128xf32>
    %84 = tpu.matmul %61, %83, %cst_19 {dimension_numbers = #tpu.dot_dimension_numbers<[1], [0], [0], [1], [0, 0, 1, 1], [], []>} : vector<16x40xf32>, vector<40x128xf32>, vector<16x128xf32> -> vector<16x128xf32>
    %cst_20 = arith.constant dense<0.000000e+00> : vector<16x64xf32>
    %85 = tpu.matmul %84, %60, %cst_20 {dimension_numbers = #tpu.dot_dimension_numbers<[1], [0], [0], [1], [0, 0, 1, 1], [], []>} : vector<16x128xf32>, vector<128x64xf32>, vector<16x64xf32> -> vector<16x64xf32>
    %86 = vector.broadcast %62 : vector<16x1xf32> to vector<16x64xf32>
    %87 = arith.addf %85, %86 : vector<16x64xf32>
    %cst_21 = arith.constant 0.000000e+00 : f32
    %88 = vector.broadcast %cst_21 : f32 to vector<16x64xf32>
    %89 = arith.cmpf oge, %87, %88 : vector<16x64xf32>
    %cst_22 = arith.constant 1.000000e-01 : f32
    %90 = vector.broadcast %cst_22 : f32 to vector<16x64xf32>
    %91 = arith.mulf %90, %87 : vector<16x64xf32>
    %92 = arith.select %89, %87, %91 : vector<16x64xi1>, vector<16x64xf32>
    %c0_23 = arith.constant 0 : index
    %c0_24 = arith.constant 0 : index
    %c0_25 = arith.constant 0 : index
    %93 = vector.load %arg12[%c0_23, %c0_24, %c0_25] : memref<1x16x64xf32, #tpu.memory_space<vmem>>, vector<1x16x64xf32>
    %94 = vector.shape_cast %93 : vector<1x16x64xf32> to vector<16x64xf32>
    %95 = vector.shape_cast %92 : vector<16x64xf32> to vector<1x16x64xf32>
    tpu.vector_store %arg12[%c0_23, %c0_24, %c0_25], %95 {strides = array<i32>} : memref<1x16x64xf32, #tpu.memory_space<vmem>>, vector<1x16x64xf32>,
    %c0_26 = arith.constant 0 : index
    %c0_27 = arith.constant 0 : index
    %96 = vector.load %arg6[%c0_26, %c0_27] : memref<16x80xf32, #tpu.memory_space<vmem>>, vector<16x80xf32>
    %c0_28 = arith.constant 0 : index
    %c0_29 = arith.constant 0 : index
    %97 = vector.load %arg7[%c0_28, %c0_29] : memref<16x1xf32, #tpu.memory_space<vmem>>, vector<16x1xf32>
    %cst_30 = arith.constant 0.000000e+00 : f32
    %98 = vector.broadcast %cst_30 : f32 to vector<16x2xf32>
    %99 = vector.extract_strided_slice %92 {offsets = [0, 0], sizes = [16, 32], strides = [1, 1]} : vector<16x64xf32> to vector<16x32xf32>
    %100 = tpu.concatenate %98, %99, %98 in 1 : vector<16x2xf32>, vector<16x32xf32>, vector<16x2xf32> -> vector<16x36xf32>
    %101 = vector.extract_strided_slice %92 {offsets = [0, 32], sizes = [16, 32], strides = [1, 1]} : vector<16x64xf32> to vector<16x32xf32>
    %102 = tpu.concatenate %98, %101, %98 in 1 : vector<16x2xf32>, vector<16x32xf32>, vector<16x2xf32> -> vector<16x36xf32>
    %103 = vector.extract_strided_slice %100 {offsets = [0, 0], sizes = [16, 32], strides = [1, 1]} : vector<16x36xf32> to vector<16x32xf32>
    %104 = vector.extract_strided_slice %102 {offsets = [0, 0], sizes = [16, 32], strides = [1, 1]} : vector<16x36xf32> to vector<16x32xf32>
    %105 = tpu.concatenate %103, %104 in 1 : vector<16x32xf32>, vector<16x32xf32> -> vector<16x64xf32>
    %106 = vector.extract_strided_slice %100 {offsets = [0, 1], sizes = [16, 32], strides = [1, 1]} : vector<16x36xf32> to vector<16x32xf32>
    %107 = vector.extract_strided_slice %102 {offsets = [0, 1], sizes = [16, 32], strides = [1, 1]} : vector<16x36xf32> to vector<16x32xf32>
    %108 = tpu.concatenate %106, %107 in 1 : vector<16x32xf32>, vector<16x32xf32> -> vector<16x64xf32>
    %109 = vector.extract_strided_slice %100 {offsets = [0, 2], sizes = [16, 32], strides = [1, 1]} : vector<16x36xf32> to vector<16x32xf32>
    %110 = vector.extract_strided_slice %102 {offsets = [0, 2], sizes = [16, 32], strides = [1, 1]} : vector<16x36xf32> to vector<16x32xf32>
    %111 = tpu.concatenate %109, %110 in 1 : vector<16x32xf32>, vector<16x32xf32> -> vector<16x64xf32>
    %112 = vector.extract_strided_slice %100 {offsets = [0, 3], sizes = [16, 32], strides = [1, 1]} : vector<16x36xf32> to vector<16x32xf32>
    %113 = vector.extract_strided_slice %102 {offsets = [0, 3], sizes = [16, 32], strides = [1, 1]} : vector<16x36xf32> to vector<16x32xf32>
    %114 = tpu.concatenate %112, %113 in 1 : vector<16x32xf32>, vector<16x32xf32> -> vector<16x64xf32>
    %115 = vector.extract_strided_slice %100 {offsets = [0, 4], sizes = [16, 32], strides = [1, 1]} : vector<16x36xf32> to vector<16x32xf32>
    %116 = vector.extract_strided_slice %102 {offsets = [0, 4], sizes = [16, 32], strides = [1, 1]} : vector<16x36xf32> to vector<16x32xf32>
    %117 = tpu.concatenate %115, %116 in 1 : vector<16x32xf32>, vector<16x32xf32> -> vector<16x64xf32>
    %118 = tpu.concatenate %105, %108, %111, %114, %117 in 0 : vector<16x64xf32>, vector<16x64xf32>, vector<16x64xf32>, vector<16x64xf32>, vector<16x64xf32> -> vector<80x64xf32>
    %cst_31 = arith.constant dense<0.000000e+00> : vector<16x64xf32>
    %119 = tpu.matmul %96, %118, %cst_31 {dimension_numbers = #tpu.dot_dimension_numbers<[1], [0], [0], [1], [0, 0, 1, 1], [], []>} : vector<16x80xf32>, vector<80x64xf32>, vector<16x64xf32> -> vector<16x64xf32>
    %120 = vector.broadcast %97 : vector<16x1xf32> to vector<16x64xf32>
    %121 = arith.addf %119, %120 : vector<16x64xf32>
    %cst_32 = arith.constant 0.000000e+00 : f32
    %122 = vector.broadcast %cst_32 : f32 to vector<16x64xf32>
    %123 = arith.cmpf oge, %121, %122 : vector<16x64xf32>
    %cst_33 = arith.constant 1.000000e-01 : f32
    %124 = vector.broadcast %cst_33 : f32 to vector<16x64xf32>
    %125 = arith.mulf %124, %121 : vector<16x64xf32>
    %126 = arith.select %123, %121, %125 : vector<16x64xi1>, vector<16x64xf32>
    %c0_34 = arith.constant 0 : index
    %c0_35 = arith.constant 0 : index
    %c0_36 = arith.constant 0 : index
    %127 = vector.load %arg13[%c0_34, %c0_35, %c0_36] : memref<1x16x64xf32, #tpu.memory_space<vmem>>, vector<1x16x64xf32>
    %128 = vector.shape_cast %127 : vector<1x16x64xf32> to vector<16x64xf32>
    %129 = vector.shape_cast %126 : vector<16x64xf32> to vector<1x16x64xf32>
    tpu.vector_store %arg13[%c0_34, %c0_35, %c0_36], %129 {strides = array<i32>} : memref<1x16x64xf32, #tpu.memory_space<vmem>>, vector<1x16x64xf32>,
    %c0_37 = arith.constant 0 : index
    %c0_38 = arith.constant 0 : index
    %130 = vector.load %arg8[%c0_37, %c0_38] : memref<1x48xf32, #tpu.memory_space<vmem>>, vector<1x48xf32>
    %c0_39 = arith.constant 0 : index
    %c0_40 = arith.constant 0 : index
    %131 = vector.load %arg9[%c0_39, %c0_40] : memref<1x1xf32, #tpu.memory_space<vmem>>, vector<1x1xf32>
    %cst_41 = arith.constant 0.000000e+00 : f32
    %132 = vector.broadcast %cst_41 : f32 to vector<16x1xf32>
    %133 = vector.extract_strided_slice %126 {offsets = [0, 0], sizes = [16, 32], strides = [1, 1]} : vector<16x64xf32> to vector<16x32xf32>
    %134 = tpu.concatenate %132, %133, %132 in 1 : vector<16x1xf32>, vector<16x32xf32>, vector<16x1xf32> -> vector<16x34xf32>
    %135 = vector.extract_strided_slice %126 {offsets = [0, 32], sizes = [16, 32], strides = [1, 1]} : vector<16x64xf32> to vector<16x32xf32>
    %136 = tpu.concatenate %132, %135, %132 in 1 : vector<16x1xf32>, vector<16x32xf32>, vector<16x1xf32> -> vector<16x34xf32>
    %137 = vector.extract_strided_slice %134 {offsets = [0, 0], sizes = [16, 32], strides = [1, 1]} : vector<16x34xf32> to vector<16x32xf32>
    %138 = vector.extract_strided_slice %136 {offsets = [0, 0], sizes = [16, 32], strides = [1, 1]} : vector<16x34xf32> to vector<16x32xf32>
    %139 = tpu.concatenate %137, %138 in 1 : vector<16x32xf32>, vector<16x32xf32> -> vector<16x64xf32>
    %140 = vector.extract_strided_slice %134 {offsets = [0, 1], sizes = [16, 32], strides = [1, 1]} : vector<16x34xf32> to vector<16x32xf32>
    %141 = vector.extract_strided_slice %136 {offsets = [0, 1], sizes = [16, 32], strides = [1, 1]} : vector<16x34xf32> to vector<16x32xf32>
    %142 = tpu.concatenate %140, %141 in 1 : vector<16x32xf32>, vector<16x32xf32> -> vector<16x64xf32>
    %143 = vector.extract_strided_slice %134 {offsets = [0, 2], sizes = [16, 32], strides = [1, 1]} : vector<16x34xf32> to vector<16x32xf32>
    %144 = vector.extract_strided_slice %136 {offsets = [0, 2], sizes = [16, 32], strides = [1, 1]} : vector<16x34xf32> to vector<16x32xf32>
    %145 = tpu.concatenate %143, %144 in 1 : vector<16x32xf32>, vector<16x32xf32> -> vector<16x64xf32>
    %146 = tpu.concatenate %139, %142, %145 in 0 : vector<16x64xf32>, vector<16x64xf32>, vector<16x64xf32> -> vector<48x64xf32>
    %cst_42 = arith.constant dense<0.000000e+00> : vector<1x64xf32>
    %147 = tpu.matmul %130, %146, %cst_42 {dimension_numbers = #tpu.dot_dimension_numbers<[1], [0], [0], [1], [0, 0, 1, 1], [], []>} : vector<1x48xf32>, vector<48x64xf32>, vector<1x64xf32> -> vector<1x64xf32>
    %148 = vector.broadcast %131 : vector<1x1xf32> to vector<1x64xf32>
    %149 = arith.addf %147, %148 : vector<1x64xf32>
    %c0_43 = arith.constant 0 : index
    %c0_44 = arith.constant 0 : index
    %c0_45 = arith.constant 0 : index
    %150 = vector.load %arg14[%c0_43, %c0_44, %c0_45] : memref<1x1x64xf32, #tpu.memory_space<vmem>>, vector<1x1x64xf32>
    %151 = vector.shape_cast %150 : vector<1x1x64xf32> to vector<1x64xf32>
    %152 = vector.shape_cast %149 : vector<1x64xf32> to vector<1x1x64xf32>
    tpu.vector_store %arg14[%c0_43, %c0_44, %c0_45], %152 {strides = array<i32>} : memref<1x1x64xf32, #tpu.memory_space<vmem>>, vector<1x1x64xf32>,
    return
  }
  func.func @transform_0(%arg0: i32) -> (i32, i32, i32) {
    %c0_i32 = arith.constant 0 : i32
    %c0_i32_0 = arith.constant 0 : i32
    %c0_i32_1 = arith.constant 0 : i32
    return %arg0, %c0_i32, %c0_i32_0 : i32, i32, i32
  }
  func.func @transform_1(%arg0: i32) -> (i32, i32) {
    %c0_i32 = arith.constant 0 : i32
    %c0_i32_0 = arith.constant 0 : i32
    %c0_i32_1 = arith.constant 0 : i32
    return %c0_i32, %c0_i32_0 : i32, i32
  }
  func.func @transform_2(%arg0: i32) -> (i32, i32) {
    %c0_i32 = arith.constant 0 : i32
    %c0_i32_0 = arith.constant 0 : i32
    %c0_i32_1 = arith.constant 0 : i32
    return %c0_i32, %c0_i32_0 : i32, i32
  }
  func.func @transform_3(%arg0: i32) -> (i32, i32) {
    %c0_i32 = arith.constant 0 : i32
    %c0_i32_0 = arith.constant 0 : i32
    %c0_i32_1 = arith.constant 0 : i32
    return %c0_i32, %c0_i32_0 : i32, i32
  }
  func.func @transform_4(%arg0: i32) -> (i32, i32) {
    %c0_i32 = arith.constant 0 : i32
    %c0_i32_0 = arith.constant 0 : i32
    %c0_i32_1 = arith.constant 0 : i32
    return %c0_i32, %c0_i32_0 : i32, i32
  }
  func.func @transform_5(%arg0: i32) -> (i32, i32) {
    %c0_i32 = arith.constant 0 : i32
    %c0_i32_0 = arith.constant 0 : i32
    %c0_i32_1 = arith.constant 0 : i32
    return %c0_i32, %c0_i32_0 : i32, i32
  }
  func.func @transform_6(%arg0: i32) -> (i32, i32) {
    %c0_i32 = arith.constant 0 : i32
    %c0_i32_0 = arith.constant 0 : i32
    %c0_i32_1 = arith.constant 0 : i32
    return %c0_i32, %c0_i32_0 : i32, i32
  }
  func.func @transform_7(%arg0: i32) -> (i32, i32) {
    %c0_i32 = arith.constant 0 : i32
    %c0_i32_0 = arith.constant 0 : i32
    %c0_i32_1 = arith.constant 0 : i32
    return %c0_i32, %c0_i32_0 : i32, i32
  }
  func.func @transform_8(%arg0: i32) -> (i32, i32) {
    %c0_i32 = arith.constant 0 : i32
    %c0_i32_0 = arith.constant 0 : i32
    %c0_i32_1 = arith.constant 0 : i32
    return %c0_i32, %c0_i32_0 : i32, i32
  }
  func.func @transform_9(%arg0: i32) -> (i32, i32) {
    %c0_i32 = arith.constant 0 : i32
    %c0_i32_0 = arith.constant 0 : i32
    %c0_i32_1 = arith.constant 0 : i32
    return %c0_i32, %c0_i32_0 : i32, i32
  }
  func.func @transform_10(%arg0: i32) -> (i32, i32, i32) {
    %c0_i32 = arith.constant 0 : i32
    %c0_i32_0 = arith.constant 0 : i32
    %c0_i32_1 = arith.constant 0 : i32
    return %arg0, %c0_i32, %c0_i32_0 : i32, i32, i32
  }
  func.func @transform_11(%arg0: i32) -> (i32, i32, i32) {
    %c0_i32 = arith.constant 0 : i32
    %c0_i32_0 = arith.constant 0 : i32
    %c0_i32_1 = arith.constant 0 : i32
    return %arg0, %c0_i32, %c0_i32_0 : i32, i32, i32
  }
  func.func @transform_12(%arg0: i32) -> (i32, i32, i32) {
    %c0_i32 = arith.constant 0 : i32
    %c0_i32_0 = arith.constant 0 : i32
    %c0_i32_1 = arith.constant 0 : i32
    return %arg0, %c0_i32, %c0_i32_0 : i32, i32, i32
  }
  func.func @transform_13(%arg0: i32) -> (i32, i32, i32) {
    %c0_i32 = arith.constant 0 : i32
    %c0_i32_0 = arith.constant 0 : i32
    %c0_i32_1 = arith.constant 0 : i32
    return %arg0, %c0_i32, %c0_i32_0 : i32, i32, i32
  }
}

module attributes {stable_mosaic.version = 11 : i64} {
  func.func @_scale_block_kernel(%arg0: i32, %arg1: memref<1x1x128xf32, #tpu.memory_space<vmem>>, %arg2: memref<128x66xf32, #tpu.memory_space<vmem>>, %arg3: memref<66x34xf32, #tpu.memory_space<vmem>>, %arg4: memref<8x5xf32, #tpu.memory_space<vmem>>, %arg5: memref<8x1xf32, #tpu.memory_space<vmem>>, %arg6: memref<16x40xf32, #tpu.memory_space<vmem>>, %arg7: memref<16x1xf32, #tpu.memory_space<vmem>>, %arg8: memref<16x80xf32, #tpu.memory_space<vmem>>, %arg9: memref<16x1xf32, #tpu.memory_space<vmem>>, %arg10: memref<1x48xf32, #tpu.memory_space<vmem>>, %arg11: memref<1x1xf32, #tpu.memory_space<vmem>>, %arg12: memref<34x18xf32, #tpu.memory_space<vmem>>, %arg13: memref<1x8x34xf32, #tpu.memory_space<vmem>>, %arg14: memref<1x16x18xf32, #tpu.memory_space<vmem>>, %arg15: memref<1x16x18xf32, #tpu.memory_space<vmem>>, %arg16: memref<1x1x18xf32, #tpu.memory_space<vmem>>) attributes {dimension_semantics = [#tpu.dimension_semantics<parallel>], iteration_bounds = array<i64: 2>, scalar_prefetch = 0 : i64, scratch_operands = 0 : i64, tpu.core_type = #tpu.core_type<tc>, window_params = [{transform_indices = @transform_0, window_bounds = array<i64: 1, 1, 128>}, {pipeline_mode = #tpu.pipeline_mode<synchronous>, transform_indices = @transform_1, window_bounds = array<i64: 128, 66>}, {pipeline_mode = #tpu.pipeline_mode<synchronous>, transform_indices = @transform_2, window_bounds = array<i64: 66, 34>}, {pipeline_mode = #tpu.pipeline_mode<synchronous>, transform_indices = @transform_3, window_bounds = array<i64: 8, 5>}, {pipeline_mode = #tpu.pipeline_mode<synchronous>, transform_indices = @transform_4, window_bounds = array<i64: 8, 1>}, {pipeline_mode = #tpu.pipeline_mode<synchronous>, transform_indices = @transform_5, window_bounds = array<i64: 16, 40>}, {pipeline_mode = #tpu.pipeline_mode<synchronous>, transform_indices = @transform_6, window_bounds = array<i64: 16, 1>}, {pipeline_mode = #tpu.pipeline_mode<synchronous>, transform_indices = @transform_7, window_bounds = array<i64: 16, 80>}, {pipeline_mode = #tpu.pipeline_mode<synchronous>, transform_indices = @transform_8, window_bounds = array<i64: 16, 1>}, {pipeline_mode = #tpu.pipeline_mode<synchronous>, transform_indices = @transform_9, window_bounds = array<i64: 1, 48>}, {pipeline_mode = #tpu.pipeline_mode<synchronous>, transform_indices = @transform_10, window_bounds = array<i64: 1, 1>}, {pipeline_mode = #tpu.pipeline_mode<synchronous>, transform_indices = @transform_11, window_bounds = array<i64: 34, 18>}, {transform_indices = @transform_12, window_bounds = array<i64: 1, 8, 34>}, {transform_indices = @transform_13, window_bounds = array<i64: 1, 16, 18>}, {transform_indices = @transform_14, window_bounds = array<i64: 1, 16, 18>}, {transform_indices = @transform_15, window_bounds = array<i64: 1, 1, 18>}]} {
    %c0 = arith.constant 0 : index
    %c0_0 = arith.constant 0 : index
    %c0_1 = arith.constant 0 : index
    %0 = vector.load %arg1[%c0, %c0_0, %c0_1] : memref<1x1x128xf32, #tpu.memory_space<vmem>>, vector<1x1x128xf32>
    %1 = vector.shape_cast %0 : vector<1x1x128xf32> to vector<1x128xf32>
    %c0_2 = arith.constant 0 : index
    %c0_3 = arith.constant 0 : index
    %2 = vector.load %arg2[%c0_2, %c0_3] : memref<128x66xf32, #tpu.memory_space<vmem>>, vector<128x66xf32>
    %cst = arith.constant dense<0.000000e+00> : vector<1x66xf32>
    %3 = tpu.matmul %1, %2, %cst {dimension_numbers = #tpu.dot_dimension_numbers<[1], [0], [0], [1], [0, 0, 1, 1], [], []>} : vector<1x128xf32>, vector<128x66xf32>, vector<1x66xf32> -> vector<1x66xf32>
    %cst_4 = arith.constant 2.500000e-01 : f32
    %4 = vector.broadcast %cst_4 : f32 to vector<1x66xf32>
    %5 = arith.mulf %4, %3 : vector<1x66xf32>
    %c0_5 = arith.constant 0 : index
    %c0_6 = arith.constant 0 : index
    %6 = vector.load %arg3[%c0_5, %c0_6] : memref<66x34xf32, #tpu.memory_space<vmem>>, vector<66x34xf32>
    %cst_7 = arith.constant dense<0.000000e+00> : vector<1x34xf32>
    %7 = tpu.matmul %5, %6, %cst_7 {dimension_numbers = #tpu.dot_dimension_numbers<[1], [0], [0], [1], [0, 0, 1, 1], [], []>} : vector<1x66xf32>, vector<66x34xf32>, vector<1x34xf32> -> vector<1x34xf32>
    %cst_8 = arith.constant 2.500000e-01 : f32
    %8 = vector.broadcast %cst_8 : f32 to vector<1x34xf32>
    %9 = arith.mulf %8, %7 : vector<1x34xf32>
    %c0_9 = arith.constant 0 : index
    %c0_10 = arith.constant 0 : index
    %10 = vector.load %arg4[%c0_9, %c0_10] : memref<8x5xf32, #tpu.memory_space<vmem>>, vector<8x5xf32>
    %c0_11 = arith.constant 0 : index
    %c0_12 = arith.constant 0 : index
    %11 = vector.load %arg5[%c0_11, %c0_12] : memref<8x1xf32, #tpu.memory_space<vmem>>, vector<8x1xf32>
    %cst_13 = arith.constant 0.000000e+00 : f32
    %12 = vector.broadcast %cst_13 : f32 to vector<1x2xf32>
    %13 = vector.extract_strided_slice %9 {offsets = [0, 0], sizes = [1, 17], strides = [1, 1]} : vector<1x34xf32> to vector<1x17xf32>
    %14 = tpu.concatenate %12, %13, %12 in 1 : vector<1x2xf32>, vector<1x17xf32>, vector<1x2xf32> -> vector<1x21xf32>
    %15 = vector.extract_strided_slice %9 {offsets = [0, 17], sizes = [1, 17], strides = [1, 1]} : vector<1x34xf32> to vector<1x17xf32>
    %16 = tpu.concatenate %12, %15, %12 in 1 : vector<1x2xf32>, vector<1x17xf32>, vector<1x2xf32> -> vector<1x21xf32>
    %cst_14 = arith.constant 0.000000e+00 : f32
    %17 = vector.broadcast %cst_14 : f32 to vector<8x34xf32>
    %18 = vector.extract_strided_slice %14 {offsets = [0, 0], sizes = [1, 17], strides = [1, 1]} : vector<1x21xf32> to vector<1x17xf32>
    %19 = vector.extract_strided_slice %16 {offsets = [0, 0], sizes = [1, 17], strides = [1, 1]} : vector<1x21xf32> to vector<1x17xf32>
    %20 = tpu.concatenate %18, %19 in 1 : vector<1x17xf32>, vector<1x17xf32> -> vector<1x34xf32>
    %21 = vector.extract_strided_slice %10 {offsets = [0, 0], sizes = [8, 1], strides = [1, 1]} : vector<8x5xf32> to vector<8x1xf32>
    %22 = vector.broadcast %21 : vector<8x1xf32> to vector<8x34xf32>
    %23 = vector.broadcast %20 : vector<1x34xf32> to vector<8x34xf32>
    %24 = arith.mulf %22, %23 : vector<8x34xf32>
    %25 = arith.addf %17, %24 : vector<8x34xf32>
    %26 = vector.extract_strided_slice %14 {offsets = [0, 1], sizes = [1, 17], strides = [1, 1]} : vector<1x21xf32> to vector<1x17xf32>
    %27 = vector.extract_strided_slice %16 {offsets = [0, 1], sizes = [1, 17], strides = [1, 1]} : vector<1x21xf32> to vector<1x17xf32>
    %28 = tpu.concatenate %26, %27 in 1 : vector<1x17xf32>, vector<1x17xf32> -> vector<1x34xf32>
    %29 = vector.extract_strided_slice %10 {offsets = [0, 1], sizes = [8, 1], strides = [1, 1]} : vector<8x5xf32> to vector<8x1xf32>
    %30 = vector.broadcast %29 : vector<8x1xf32> to vector<8x34xf32>
    %31 = vector.broadcast %28 : vector<1x34xf32> to vector<8x34xf32>
    %32 = arith.mulf %30, %31 : vector<8x34xf32>
    %33 = arith.addf %25, %32 : vector<8x34xf32>
    %34 = vector.extract_strided_slice %14 {offsets = [0, 2], sizes = [1, 17], strides = [1, 1]} : vector<1x21xf32> to vector<1x17xf32>
    %35 = vector.extract_strided_slice %16 {offsets = [0, 2], sizes = [1, 17], strides = [1, 1]} : vector<1x21xf32> to vector<1x17xf32>
    %36 = tpu.concatenate %34, %35 in 1 : vector<1x17xf32>, vector<1x17xf32> -> vector<1x34xf32>
    %37 = vector.extract_strided_slice %10 {offsets = [0, 2], sizes = [8, 1], strides = [1, 1]} : vector<8x5xf32> to vector<8x1xf32>
    %38 = vector.broadcast %37 : vector<8x1xf32> to vector<8x34xf32>
    %39 = vector.broadcast %36 : vector<1x34xf32> to vector<8x34xf32>
    %40 = arith.mulf %38, %39 : vector<8x34xf32>
    %41 = arith.addf %33, %40 : vector<8x34xf32>
    %42 = vector.extract_strided_slice %14 {offsets = [0, 3], sizes = [1, 17], strides = [1, 1]} : vector<1x21xf32> to vector<1x17xf32>
    %43 = vector.extract_strided_slice %16 {offsets = [0, 3], sizes = [1, 17], strides = [1, 1]} : vector<1x21xf32> to vector<1x17xf32>
    %44 = tpu.concatenate %42, %43 in 1 : vector<1x17xf32>, vector<1x17xf32> -> vector<1x34xf32>
    %45 = vector.extract_strided_slice %10 {offsets = [0, 3], sizes = [8, 1], strides = [1, 1]} : vector<8x5xf32> to vector<8x1xf32>
    %46 = vector.broadcast %45 : vector<8x1xf32> to vector<8x34xf32>
    %47 = vector.broadcast %44 : vector<1x34xf32> to vector<8x34xf32>
    %48 = arith.mulf %46, %47 : vector<8x34xf32>
    %49 = arith.addf %41, %48 : vector<8x34xf32>
    %50 = vector.extract_strided_slice %14 {offsets = [0, 4], sizes = [1, 17], strides = [1, 1]} : vector<1x21xf32> to vector<1x17xf32>
    %51 = vector.extract_strided_slice %16 {offsets = [0, 4], sizes = [1, 17], strides = [1, 1]} : vector<1x21xf32> to vector<1x17xf32>
    %52 = tpu.concatenate %50, %51 in 1 : vector<1x17xf32>, vector<1x17xf32> -> vector<1x34xf32>
    %53 = vector.extract_strided_slice %10 {offsets = [0, 4], sizes = [8, 1], strides = [1, 1]} : vector<8x5xf32> to vector<8x1xf32>
    %54 = vector.broadcast %53 : vector<8x1xf32> to vector<8x34xf32>
    %55 = vector.broadcast %52 : vector<1x34xf32> to vector<8x34xf32>
    %56 = arith.mulf %54, %55 : vector<8x34xf32>
    %57 = arith.addf %49, %56 : vector<8x34xf32>
    %58 = vector.broadcast %11 : vector<8x1xf32> to vector<8x34xf32>
    %59 = arith.addf %57, %58 : vector<8x34xf32>
    %cst_15 = arith.constant 0.000000e+00 : f32
    %60 = vector.broadcast %cst_15 : f32 to vector<8x34xf32>
    %61 = arith.cmpf oge, %59, %60 : vector<8x34xf32>
    %cst_16 = arith.constant 1.000000e-01 : f32
    %62 = vector.broadcast %cst_16 : f32 to vector<8x34xf32>
    %63 = arith.mulf %62, %59 : vector<8x34xf32>
    %64 = arith.select %61, %59, %63 : vector<8x34xi1>, vector<8x34xf32>
    %c0_17 = arith.constant 0 : index
    %c0_18 = arith.constant 0 : index
    %c0_19 = arith.constant 0 : index
    %65 = vector.load %arg13[%c0_17, %c0_18, %c0_19] : memref<1x8x34xf32, #tpu.memory_space<vmem>>, vector<1x8x34xf32>
    %66 = vector.shape_cast %65 : vector<1x8x34xf32> to vector<8x34xf32>
    %67 = vector.shape_cast %64 : vector<8x34xf32> to vector<1x8x34xf32>
    tpu.vector_store %arg13[%c0_17, %c0_18, %c0_19], %67 {strides = array<i32>} : memref<1x8x34xf32, #tpu.memory_space<vmem>>, vector<1x8x34xf32>,
    %c0_20 = arith.constant 0 : index
    %c0_21 = arith.constant 0 : index
    %68 = vector.load %arg12[%c0_20, %c0_21] : memref<34x18xf32, #tpu.memory_space<vmem>>, vector<34x18xf32>
    %c0_22 = arith.constant 0 : index
    %c0_23 = arith.constant 0 : index
    %69 = vector.load %arg6[%c0_22, %c0_23] : memref<16x40xf32, #tpu.memory_space<vmem>>, vector<16x40xf32>
    %c0_24 = arith.constant 0 : index
    %c0_25 = arith.constant 0 : index
    %70 = vector.load %arg7[%c0_24, %c0_25] : memref<16x1xf32, #tpu.memory_space<vmem>>, vector<16x1xf32>
    %cst_26 = arith.constant 0.000000e+00 : f32
    %71 = vector.broadcast %cst_26 : f32 to vector<8x2xf32>
    %72 = vector.extract_strided_slice %64 {offsets = [0, 0], sizes = [8, 17], strides = [1, 1]} : vector<8x34xf32> to vector<8x17xf32>
    %73 = tpu.concatenate %71, %72, %71 in 1 : vector<8x2xf32>, vector<8x17xf32>, vector<8x2xf32> -> vector<8x21xf32>
    %74 = vector.extract_strided_slice %64 {offsets = [0, 17], sizes = [8, 17], strides = [1, 1]} : vector<8x34xf32> to vector<8x17xf32>
    %75 = tpu.concatenate %71, %74, %71 in 1 : vector<8x2xf32>, vector<8x17xf32>, vector<8x2xf32> -> vector<8x21xf32>
    %76 = vector.extract_strided_slice %73 {offsets = [0, 0], sizes = [8, 17], strides = [1, 1]} : vector<8x21xf32> to vector<8x17xf32>
    %77 = vector.extract_strided_slice %75 {offsets = [0, 0], sizes = [8, 17], strides = [1, 1]} : vector<8x21xf32> to vector<8x17xf32>
    %78 = tpu.concatenate %76, %77 in 1 : vector<8x17xf32>, vector<8x17xf32> -> vector<8x34xf32>
    %79 = vector.extract_strided_slice %73 {offsets = [0, 1], sizes = [8, 17], strides = [1, 1]} : vector<8x21xf32> to vector<8x17xf32>
    %80 = vector.extract_strided_slice %75 {offsets = [0, 1], sizes = [8, 17], strides = [1, 1]} : vector<8x21xf32> to vector<8x17xf32>
    %81 = tpu.concatenate %79, %80 in 1 : vector<8x17xf32>, vector<8x17xf32> -> vector<8x34xf32>
    %82 = vector.extract_strided_slice %73 {offsets = [0, 2], sizes = [8, 17], strides = [1, 1]} : vector<8x21xf32> to vector<8x17xf32>
    %83 = vector.extract_strided_slice %75 {offsets = [0, 2], sizes = [8, 17], strides = [1, 1]} : vector<8x21xf32> to vector<8x17xf32>
    %84 = tpu.concatenate %82, %83 in 1 : vector<8x17xf32>, vector<8x17xf32> -> vector<8x34xf32>
    %85 = vector.extract_strided_slice %73 {offsets = [0, 3], sizes = [8, 17], strides = [1, 1]} : vector<8x21xf32> to vector<8x17xf32>
    %86 = vector.extract_strided_slice %75 {offsets = [0, 3], sizes = [8, 17], strides = [1, 1]} : vector<8x21xf32> to vector<8x17xf32>
    %87 = tpu.concatenate %85, %86 in 1 : vector<8x17xf32>, vector<8x17xf32> -> vector<8x34xf32>
    %88 = vector.extract_strided_slice %73 {offsets = [0, 4], sizes = [8, 17], strides = [1, 1]} : vector<8x21xf32> to vector<8x17xf32>
    %89 = vector.extract_strided_slice %75 {offsets = [0, 4], sizes = [8, 17], strides = [1, 1]} : vector<8x21xf32> to vector<8x17xf32>
    %90 = tpu.concatenate %88, %89 in 1 : vector<8x17xf32>, vector<8x17xf32> -> vector<8x34xf32>
    %91 = tpu.concatenate %78, %81, %84, %87, %90 in 0 : vector<8x34xf32>, vector<8x34xf32>, vector<8x34xf32>, vector<8x34xf32>, vector<8x34xf32> -> vector<40x34xf32>
    %cst_27 = arith.constant dense<0.000000e+00> : vector<16x34xf32>
    %92 = tpu.matmul %69, %91, %cst_27 {dimension_numbers = #tpu.dot_dimension_numbers<[1], [0], [0], [1], [0, 0, 1, 1], [], []>} : vector<16x40xf32>, vector<40x34xf32>, vector<16x34xf32> -> vector<16x34xf32>
    %cst_28 = arith.constant dense<0.000000e+00> : vector<16x18xf32>
    %93 = tpu.matmul %92, %68, %cst_28 {dimension_numbers = #tpu.dot_dimension_numbers<[1], [0], [0], [1], [0, 0, 1, 1], [], []>} : vector<16x34xf32>, vector<34x18xf32>, vector<16x18xf32> -> vector<16x18xf32>
    %94 = vector.broadcast %70 : vector<16x1xf32> to vector<16x18xf32>
    %95 = arith.addf %93, %94 : vector<16x18xf32>
    %cst_29 = arith.constant 0.000000e+00 : f32
    %96 = vector.broadcast %cst_29 : f32 to vector<16x18xf32>
    %97 = arith.cmpf oge, %95, %96 : vector<16x18xf32>
    %cst_30 = arith.constant 1.000000e-01 : f32
    %98 = vector.broadcast %cst_30 : f32 to vector<16x18xf32>
    %99 = arith.mulf %98, %95 : vector<16x18xf32>
    %100 = arith.select %97, %95, %99 : vector<16x18xi1>, vector<16x18xf32>
    %c0_31 = arith.constant 0 : index
    %c0_32 = arith.constant 0 : index
    %c0_33 = arith.constant 0 : index
    %101 = vector.load %arg14[%c0_31, %c0_32, %c0_33] : memref<1x16x18xf32, #tpu.memory_space<vmem>>, vector<1x16x18xf32>
    %102 = vector.shape_cast %101 : vector<1x16x18xf32> to vector<16x18xf32>
    %103 = vector.shape_cast %100 : vector<16x18xf32> to vector<1x16x18xf32>
    tpu.vector_store %arg14[%c0_31, %c0_32, %c0_33], %103 {strides = array<i32>} : memref<1x16x18xf32, #tpu.memory_space<vmem>>, vector<1x16x18xf32>,
    %c0_34 = arith.constant 0 : index
    %c0_35 = arith.constant 0 : index
    %104 = vector.load %arg8[%c0_34, %c0_35] : memref<16x80xf32, #tpu.memory_space<vmem>>, vector<16x80xf32>
    %c0_36 = arith.constant 0 : index
    %c0_37 = arith.constant 0 : index
    %105 = vector.load %arg9[%c0_36, %c0_37] : memref<16x1xf32, #tpu.memory_space<vmem>>, vector<16x1xf32>
    %cst_38 = arith.constant 0.000000e+00 : f32
    %106 = vector.broadcast %cst_38 : f32 to vector<16x2xf32>
    %107 = vector.extract_strided_slice %100 {offsets = [0, 0], sizes = [16, 9], strides = [1, 1]} : vector<16x18xf32> to vector<16x9xf32>
    %108 = tpu.concatenate %106, %107, %106 in 1 : vector<16x2xf32>, vector<16x9xf32>, vector<16x2xf32> -> vector<16x13xf32>
    %109 = vector.extract_strided_slice %100 {offsets = [0, 9], sizes = [16, 9], strides = [1, 1]} : vector<16x18xf32> to vector<16x9xf32>
    %110 = tpu.concatenate %106, %109, %106 in 1 : vector<16x2xf32>, vector<16x9xf32>, vector<16x2xf32> -> vector<16x13xf32>
    %111 = vector.extract_strided_slice %108 {offsets = [0, 0], sizes = [16, 9], strides = [1, 1]} : vector<16x13xf32> to vector<16x9xf32>
    %112 = vector.extract_strided_slice %110 {offsets = [0, 0], sizes = [16, 9], strides = [1, 1]} : vector<16x13xf32> to vector<16x9xf32>
    %113 = tpu.concatenate %111, %112 in 1 : vector<16x9xf32>, vector<16x9xf32> -> vector<16x18xf32>
    %114 = vector.extract_strided_slice %108 {offsets = [0, 1], sizes = [16, 9], strides = [1, 1]} : vector<16x13xf32> to vector<16x9xf32>
    %115 = vector.extract_strided_slice %110 {offsets = [0, 1], sizes = [16, 9], strides = [1, 1]} : vector<16x13xf32> to vector<16x9xf32>
    %116 = tpu.concatenate %114, %115 in 1 : vector<16x9xf32>, vector<16x9xf32> -> vector<16x18xf32>
    %117 = vector.extract_strided_slice %108 {offsets = [0, 2], sizes = [16, 9], strides = [1, 1]} : vector<16x13xf32> to vector<16x9xf32>
    %118 = vector.extract_strided_slice %110 {offsets = [0, 2], sizes = [16, 9], strides = [1, 1]} : vector<16x13xf32> to vector<16x9xf32>
    %119 = tpu.concatenate %117, %118 in 1 : vector<16x9xf32>, vector<16x9xf32> -> vector<16x18xf32>
    %120 = vector.extract_strided_slice %108 {offsets = [0, 3], sizes = [16, 9], strides = [1, 1]} : vector<16x13xf32> to vector<16x9xf32>
    %121 = vector.extract_strided_slice %110 {offsets = [0, 3], sizes = [16, 9], strides = [1, 1]} : vector<16x13xf32> to vector<16x9xf32>
    %122 = tpu.concatenate %120, %121 in 1 : vector<16x9xf32>, vector<16x9xf32> -> vector<16x18xf32>
    %123 = vector.extract_strided_slice %108 {offsets = [0, 4], sizes = [16, 9], strides = [1, 1]} : vector<16x13xf32> to vector<16x9xf32>
    %124 = vector.extract_strided_slice %110 {offsets = [0, 4], sizes = [16, 9], strides = [1, 1]} : vector<16x13xf32> to vector<16x9xf32>
    %125 = tpu.concatenate %123, %124 in 1 : vector<16x9xf32>, vector<16x9xf32> -> vector<16x18xf32>
    %126 = tpu.concatenate %113, %116, %119, %122, %125 in 0 : vector<16x18xf32>, vector<16x18xf32>, vector<16x18xf32>, vector<16x18xf32>, vector<16x18xf32> -> vector<80x18xf32>
    %cst_39 = arith.constant dense<0.000000e+00> : vector<16x18xf32>
    %127 = tpu.matmul %104, %126, %cst_39 {dimension_numbers = #tpu.dot_dimension_numbers<[1], [0], [0], [1], [0, 0, 1, 1], [], []>} : vector<16x80xf32>, vector<80x18xf32>, vector<16x18xf32> -> vector<16x18xf32>
    %128 = vector.broadcast %105 : vector<16x1xf32> to vector<16x18xf32>
    %129 = arith.addf %127, %128 : vector<16x18xf32>
    %cst_40 = arith.constant 0.000000e+00 : f32
    %130 = vector.broadcast %cst_40 : f32 to vector<16x18xf32>
    %131 = arith.cmpf oge, %129, %130 : vector<16x18xf32>
    %cst_41 = arith.constant 1.000000e-01 : f32
    %132 = vector.broadcast %cst_41 : f32 to vector<16x18xf32>
    %133 = arith.mulf %132, %129 : vector<16x18xf32>
    %134 = arith.select %131, %129, %133 : vector<16x18xi1>, vector<16x18xf32>
    %c0_42 = arith.constant 0 : index
    %c0_43 = arith.constant 0 : index
    %c0_44 = arith.constant 0 : index
    %135 = vector.load %arg15[%c0_42, %c0_43, %c0_44] : memref<1x16x18xf32, #tpu.memory_space<vmem>>, vector<1x16x18xf32>
    %136 = vector.shape_cast %135 : vector<1x16x18xf32> to vector<16x18xf32>
    %137 = vector.shape_cast %134 : vector<16x18xf32> to vector<1x16x18xf32>
    tpu.vector_store %arg15[%c0_42, %c0_43, %c0_44], %137 {strides = array<i32>} : memref<1x16x18xf32, #tpu.memory_space<vmem>>, vector<1x16x18xf32>,
    %c0_45 = arith.constant 0 : index
    %c0_46 = arith.constant 0 : index
    %138 = vector.load %arg10[%c0_45, %c0_46] : memref<1x48xf32, #tpu.memory_space<vmem>>, vector<1x48xf32>
    %c0_47 = arith.constant 0 : index
    %c0_48 = arith.constant 0 : index
    %139 = vector.load %arg11[%c0_47, %c0_48] : memref<1x1xf32, #tpu.memory_space<vmem>>, vector<1x1xf32>
    %cst_49 = arith.constant 0.000000e+00 : f32
    %140 = vector.broadcast %cst_49 : f32 to vector<16x1xf32>
    %141 = vector.extract_strided_slice %134 {offsets = [0, 0], sizes = [16, 9], strides = [1, 1]} : vector<16x18xf32> to vector<16x9xf32>
    %142 = tpu.concatenate %140, %141, %140 in 1 : vector<16x1xf32>, vector<16x9xf32>, vector<16x1xf32> -> vector<16x11xf32>
    %143 = vector.extract_strided_slice %134 {offsets = [0, 9], sizes = [16, 9], strides = [1, 1]} : vector<16x18xf32> to vector<16x9xf32>
    %144 = tpu.concatenate %140, %143, %140 in 1 : vector<16x1xf32>, vector<16x9xf32>, vector<16x1xf32> -> vector<16x11xf32>
    %145 = vector.extract_strided_slice %142 {offsets = [0, 0], sizes = [16, 9], strides = [1, 1]} : vector<16x11xf32> to vector<16x9xf32>
    %146 = vector.extract_strided_slice %144 {offsets = [0, 0], sizes = [16, 9], strides = [1, 1]} : vector<16x11xf32> to vector<16x9xf32>
    %147 = tpu.concatenate %145, %146 in 1 : vector<16x9xf32>, vector<16x9xf32> -> vector<16x18xf32>
    %148 = vector.extract_strided_slice %142 {offsets = [0, 1], sizes = [16, 9], strides = [1, 1]} : vector<16x11xf32> to vector<16x9xf32>
    %149 = vector.extract_strided_slice %144 {offsets = [0, 1], sizes = [16, 9], strides = [1, 1]} : vector<16x11xf32> to vector<16x9xf32>
    %150 = tpu.concatenate %148, %149 in 1 : vector<16x9xf32>, vector<16x9xf32> -> vector<16x18xf32>
    %151 = vector.extract_strided_slice %142 {offsets = [0, 2], sizes = [16, 9], strides = [1, 1]} : vector<16x11xf32> to vector<16x9xf32>
    %152 = vector.extract_strided_slice %144 {offsets = [0, 2], sizes = [16, 9], strides = [1, 1]} : vector<16x11xf32> to vector<16x9xf32>
    %153 = tpu.concatenate %151, %152 in 1 : vector<16x9xf32>, vector<16x9xf32> -> vector<16x18xf32>
    %154 = tpu.concatenate %147, %150, %153 in 0 : vector<16x18xf32>, vector<16x18xf32>, vector<16x18xf32> -> vector<48x18xf32>
    %cst_50 = arith.constant dense<0.000000e+00> : vector<1x18xf32>
    %155 = tpu.matmul %138, %154, %cst_50 {dimension_numbers = #tpu.dot_dimension_numbers<[1], [0], [0], [1], [0, 0, 1, 1], [], []>} : vector<1x48xf32>, vector<48x18xf32>, vector<1x18xf32> -> vector<1x18xf32>
    %156 = vector.broadcast %139 : vector<1x1xf32> to vector<1x18xf32>
    %157 = arith.addf %155, %156 : vector<1x18xf32>
    %c0_51 = arith.constant 0 : index
    %c0_52 = arith.constant 0 : index
    %c0_53 = arith.constant 0 : index
    %158 = vector.load %arg16[%c0_51, %c0_52, %c0_53] : memref<1x1x18xf32, #tpu.memory_space<vmem>>, vector<1x1x18xf32>
    %159 = vector.shape_cast %158 : vector<1x1x18xf32> to vector<1x18xf32>
    %160 = vector.shape_cast %157 : vector<1x18xf32> to vector<1x1x18xf32>
    tpu.vector_store %arg16[%c0_51, %c0_52, %c0_53], %160 {strides = array<i32>} : memref<1x1x18xf32, #tpu.memory_space<vmem>>, vector<1x1x18xf32>,
    return
  }
  func.func @transform_0(%arg0: i32) -> (i32, i32, i32) {
    %c0_i32 = arith.constant 0 : i32
    %c0_i32_0 = arith.constant 0 : i32
    %c0_i32_1 = arith.constant 0 : i32
    return %arg0, %c0_i32, %c0_i32_0 : i32, i32, i32
  }
  func.func @transform_1(%arg0: i32) -> (i32, i32) {
    %c0_i32 = arith.constant 0 : i32
    %c0_i32_0 = arith.constant 0 : i32
    %c0_i32_1 = arith.constant 0 : i32
    return %c0_i32, %c0_i32_0 : i32, i32
  }
  func.func @transform_2(%arg0: i32) -> (i32, i32) {
    %c0_i32 = arith.constant 0 : i32
    %c0_i32_0 = arith.constant 0 : i32
    %c0_i32_1 = arith.constant 0 : i32
    return %c0_i32, %c0_i32_0 : i32, i32
  }
  func.func @transform_3(%arg0: i32) -> (i32, i32) {
    %c0_i32 = arith.constant 0 : i32
    %c0_i32_0 = arith.constant 0 : i32
    %c0_i32_1 = arith.constant 0 : i32
    return %c0_i32, %c0_i32_0 : i32, i32
  }
  func.func @transform_4(%arg0: i32) -> (i32, i32) {
    %c0_i32 = arith.constant 0 : i32
    %c0_i32_0 = arith.constant 0 : i32
    %c0_i32_1 = arith.constant 0 : i32
    return %c0_i32, %c0_i32_0 : i32, i32
  }
  func.func @transform_5(%arg0: i32) -> (i32, i32) {
    %c0_i32 = arith.constant 0 : i32
    %c0_i32_0 = arith.constant 0 : i32
    %c0_i32_1 = arith.constant 0 : i32
    return %c0_i32, %c0_i32_0 : i32, i32
  }
  func.func @transform_6(%arg0: i32) -> (i32, i32) {
    %c0_i32 = arith.constant 0 : i32
    %c0_i32_0 = arith.constant 0 : i32
    %c0_i32_1 = arith.constant 0 : i32
    return %c0_i32, %c0_i32_0 : i32, i32
  }
  func.func @transform_7(%arg0: i32) -> (i32, i32) {
    %c0_i32 = arith.constant 0 : i32
    %c0_i32_0 = arith.constant 0 : i32
    %c0_i32_1 = arith.constant 0 : i32
    return %c0_i32, %c0_i32_0 : i32, i32
  }
  func.func @transform_8(%arg0: i32) -> (i32, i32) {
    %c0_i32 = arith.constant 0 : i32
    %c0_i32_0 = arith.constant 0 : i32
    %c0_i32_1 = arith.constant 0 : i32
    return %c0_i32, %c0_i32_0 : i32, i32
  }
  func.func @transform_9(%arg0: i32) -> (i32, i32) {
    %c0_i32 = arith.constant 0 : i32
    %c0_i32_0 = arith.constant 0 : i32
    %c0_i32_1 = arith.constant 0 : i32
    return %c0_i32, %c0_i32_0 : i32, i32
  }
  func.func @transform_10(%arg0: i32) -> (i32, i32) {
    %c0_i32 = arith.constant 0 : i32
    %c0_i32_0 = arith.constant 0 : i32
    %c0_i32_1 = arith.constant 0 : i32
    return %c0_i32, %c0_i32_0 : i32, i32
  }
  func.func @transform_11(%arg0: i32) -> (i32, i32) {
    %c0_i32 = arith.constant 0 : i32
    %c0_i32_0 = arith.constant 0 : i32
    %c0_i32_1 = arith.constant 0 : i32
    return %c0_i32, %c0_i32_0 : i32, i32
  }
  func.func @transform_12(%arg0: i32) -> (i32, i32, i32) {
    %c0_i32 = arith.constant 0 : i32
    %c0_i32_0 = arith.constant 0 : i32
    %c0_i32_1 = arith.constant 0 : i32
    return %arg0, %c0_i32, %c0_i32_0 : i32, i32, i32
  }
  func.func @transform_13(%arg0: i32) -> (i32, i32, i32) {
    %c0_i32 = arith.constant 0 : i32
    %c0_i32_0 = arith.constant 0 : i32
    %c0_i32_1 = arith.constant 0 : i32
    return %arg0, %c0_i32, %c0_i32_0 : i32, i32, i32
  }
  func.func @transform_14(%arg0: i32) -> (i32, i32, i32) {
    %c0_i32 = arith.constant 0 : i32
    %c0_i32_0 = arith.constant 0 : i32
    %c0_i32_1 = arith.constant 0 : i32
    return %arg0, %c0_i32, %c0_i32_0 : i32, i32, i32
  }
  func.func @transform_15(%arg0: i32) -> (i32, i32, i32) {
    %c0_i32 = arith.constant 0 : i32
    %c0_i32_0 = arith.constant 0 : i32
    %c0_i32_1 = arith.constant 0 : i32
    return %arg0, %c0_i32, %c0_i32_0 : i32, i32, i32
  }
}

</mosaic_0001>

<llo_original>
// kernel: squeeze.46
$region0: #{squeeze.46}
  %s0 = inlined_call_operand.vmem [shape: f32[34], index: 0, kind: input, shape index: {}]
  %s1 = inlined_call_operand.hbm [shape: f32[2,1,17], index: 1, kind: output, shape index: {}]
  $region1: #{squeeze.46} parent=0
    #allocation0 [shape = 'u8[1024]{0}', space=vmem, size = 0x400, scoped, tag = 'operand span for operand 1']
    #allocation1 [shape = 's32[1]{0}', space=sflag, size = 0x4, scoped, tag = 'scoped memory for squeeze.46']
    #allocation2 [shape = 'u8[4096]{0}', space=vmem, size = 0x1000, scoped, tag = 'scoped mem for output reshape']
    #allocation3 [shape = 'u8[4096]{0}', space=vmem, size = 0x1000, scoped, tag = 'scoped mem for input reshape']
    %2 = vsyncpa [#allocation1], 0
    %s4 = sshllo.u32 0, 1
    %v5 = vld [vmem:[%s0] sm:%s4]
    %6 = vst [vmem:[#allocation3] sm:%s4] %v5
    %v7 = vld [vmem:[#allocation3] sm:$0x1]
    %vm8 = vcmask 138240
    %9 = vst.msk [vmem:[#allocation2] sm:$0x1] %vm8, %v7
    %v10 = vld [vmem:[#allocation3] sm:$0x1]
    %11 = vrot.lane.b32.xlu0 %v10, 111
    %v12 = vpop.permute.xlu0 %11
    %vm13 = vcmask 138240
    %s14 = scalar_lea.vmem [#allocation2], 1
    %15 = vst.msk [vmem:[%s14] sm:$0x1] %vm13, %v12
    %s17 = sshllo.u32 0, 2
    %v19 = vld [vmem:[#allocation2] sm:%s17]
    %s20 = sshllo.u32 0, 2
    %21 = vst [vmem:[#allocation0] sm:%s20] %v19
    %s23 = ssub.s32 32, 32
    %24 = vsyncadd [#allocation1], %s23
    %s26 = sshll.u32 [#allocation0], 4
    %s27 = int_to_ptr.vmem [resolvable:$true] %s26
    %29 = dma.vmem_to_hbm [thread:$0]  %s27, 32, %s1, [#allocation1]
    %30 = dma.done [#allocation1], 32
    %31 = vsyncpa [#allocation1], 1

// kernel: squeeze.56
$region0: #{squeeze.56}
  %s0 = inlined_call_operand.vmem [shape: f32[18], index: 0, kind: input, shape index: {}]
  %s1 = inlined_call_operand.hbm [shape: f32[2,1,9], index: 1, kind: output, shape index: {}]
  $region1: #{squeeze.56} parent=0
    #allocation0 [shape = 'u8[1024]{0}', space=vmem, size = 0x400, scoped, tag = 'operand span for operand 1']
    #allocation1 [shape = 's32[1]{0}', space=sflag, size = 0x4, scoped, tag = 'scoped memory for squeeze.56']
    #allocation2 [shape = 'u8[4096]{0}', space=vmem, size = 0x1000, scoped, tag = 'scoped mem for output reshape']
    #allocation3 [shape = 'u8[4096]{0}', space=vmem, size = 0x1000, scoped, tag = 'scoped mem for input reshape']
    %2 = vsyncpa [#allocation1], 0
    %s4 = sshllo.u32 0, 1
    %v5 = vld [vmem:[%s0] sm:%s4]
    %6 = vst [vmem:[#allocation3] sm:%s4] %v5
    %v7 = vld [vmem:[#allocation3] sm:$0x1]
    %vm8 = vcmask 72704
    %9 = vst.msk [vmem:[#allocation2] sm:$0x1] %vm8, %v7
    %v10 = vld [vmem:[#allocation3] sm:$0x1]
    %11 = vrot.lane.b32.xlu0 %v10, 119
    %v12 = vpop.permute.xlu0 %11
    %vm13 = vcmask 72704
    %s14 = scalar_lea.vmem [#allocation2], 1
    %15 = vst.msk [vmem:[%s14] sm:$0x1] %vm13, %v12
    %s17 = sshllo.u32 0, 2
    %v19 = vld [vmem:[#allocation2] sm:%s17]
    %s20 = sshllo.u32 0, 2
    %21 = vst [vmem:[#allocation0] sm:%s20] %v19
    %s23 = ssub.s32 32, 32
    %24 = vsyncadd [#allocation1], %s23
    %s26 = sshll.u32 [#allocation0], 4
    %s27 = int_to_ptr.vmem [resolvable:$true] %s26
    %29 = dma.vmem_to_hbm [thread:$0]  %s27, 32, %s1, [#allocation1]
    %30 = dma.done [#allocation1], 32
    %31 = vsyncpa [#allocation1], 1

// kernel: squeeze.36
$region0: #{squeeze.36}
  %s0 = inlined_call_operand.vmem [shape: f32[64], index: 0, kind: input, shape index: {}]
  %s1 = inlined_call_operand.hbm [shape: f32[2,1,32], index: 1, kind: output, shape index: {}]
  $region1: #{squeeze.36} parent=0
    #allocation0 [shape = 'u8[1024]{0}', space=vmem, size = 0x400, scoped, tag = 'operand span for operand 1']
    #allocation1 [shape = 's32[1]{0}', space=sflag, size = 0x4, scoped, tag = 'scoped memory for squeeze.36']
    #allocation2 [shape = 'u8[4096]{0}', space=vmem, size = 0x1000, scoped, tag = 'scoped mem for output reshape']
    #allocation3 [shape = 'u8[4096]{0}', space=vmem, size = 0x1000, scoped, tag = 'scoped mem for input reshape']
    %2 = vsyncpa [#allocation1], 0
    %s4 = sshllo.u32 0, 1
    %v5 = vld [vmem:[%s0] sm:%s4]
    %6 = vst [vmem:[#allocation3] sm:%s4] %v5
    %v7 = vld [vmem:[#allocation3] sm:$0x1]
    %vm8 = vcmask 261120
    %9 = vst.msk [vmem:[#allocation2] sm:$0x1] %vm8, %v7
    %v10 = vld [vmem:[#allocation3] sm:$0x1]
    %11 = vrot.lane.b32.xlu0 %v10, 96
    %v12 = vpop.permute.xlu0 %11
    %vm13 = vcmask 261120
    %s14 = scalar_lea.vmem [#allocation2], 1
    %15 = vst.msk [vmem:[%s14] sm:$0x1] %vm13, %v12
    %s17 = sshllo.u32 0, 2
    %v19 = vld [vmem:[#allocation2] sm:%s17]
    %s20 = sshllo.u32 0, 2
    %21 = vst [vmem:[#allocation0] sm:%s20] %v19
    %s23 = ssub.s32 32, 32
    %24 = vsyncadd [#allocation1], %s23
    %s26 = sshll.u32 [#allocation0], 4
    %s27 = int_to_ptr.vmem [resolvable:$true] %s26
    %29 = dma.vmem_to_hbm [thread:$0]  %s27, 32, %s1, [#allocation1]
    %30 = dma.done [#allocation1], 32
    %31 = vsyncpa [#allocation1], 1

// kernel: msd_forward.3
$region0: #{msd_forward.3}
  #allocation0 [shape = 'u32[]', space=smem, size = 0x4, offset = 0x4, fixed_abs, tag = 'smem constant byte address 0x4 - core index']
  #allocation1 [shape = 'u32[144,128]{1,0:T(1,128)}', space=vmem, size = 0x12000, scoped, tag = 'internal scratch']
  #allocation2 [shape = 'f32[1,1]{1,0:T(1,128)S(1)}', space=vmem, size = 0x200, scoped, tag = 'scoped memory for msd_forward.3']
  %s0 = inlined_call_operand.vmem [shape: f32[2,1,128], index: 0, kind: input, shape index: {}]
  %s1 = inlined_call_operand.vmem [shape: f32[8,5], index: 1, kind: input, shape index: {}]
  %s2 = inlined_call_operand.vmem [shape: f32[8,1], index: 2, kind: input, shape index: {}]
  %s3 = inlined_call_operand.vmem [shape: f32[16,40], index: 3, kind: input, shape index: {}]
  %s4 = inlined_call_operand.vmem [shape: f32[16,1], index: 4, kind: input, shape index: {}]
  %s5 = inlined_call_operand.vmem [shape: f32[16,80], index: 5, kind: input, shape index: {}]
  %s6 = inlined_call_operand.vmem [shape: f32[16,1], index: 6, kind: input, shape index: {}]
  %s7 = inlined_call_operand.vmem [shape: f32[1,48], index: 7, kind: input, shape index: {}]
  %s8 = inlined_call_operand.<no memory space> [shape: f32[1,1], index: 8, kind: input, shape index: {}]
  %s9 = inlined_call_operand.vmem [shape: f32[128,64], index: 9, kind: input, shape index: {}]
  %s10 = inlined_call_operand.vmem [shape: f32[2,8,128], index: 10, kind: output, shape index: {0}]
  %s11 = inlined_call_operand.vmem [shape: f32[2,16,64], index: 11, kind: output, shape index: {1}]
  %s12 = inlined_call_operand.vmem [shape: f32[2,16,64], index: 12, kind: output, shape index: {2}]
  %s13 = inlined_call_operand.vmem [shape: f32[2,1,64], index: 13, kind: output, shape index: {3}]
  %14 = xla_tuple %s10, %s11, %s12, %s13
  %s15 = sld [smem:[#allocation0]]
  $region97: #{msd_forward.3} parent=0
    _
  %s17 = ssub.s32 1, %s15
  %s18 = scalar_select 0, %s17, %s15
  %v19 = vstv %s8
  %20 = vst [vmem:[#allocation2] sm:$0x1] %v19
  loop: start=0, step=1, limit=4
  $region2: #{msd_forward.3} parent=0 // loop_pre_header
    _
  $region3: #{msd_forward.3} parent=0 // loop_header
    %s22 = sphi 0, %s26
    %p23 = scmp.ge.s32.totalorder %s22, 4
    %s32 = sphi 0, %s34
    %s35 = sphi 0, %s32
    %s36 = sphi 0, %s35
    %s52 = sphi 0, %s36
    %s56 = sphi 0, %s56
    %s58 = sphi 0, %s56
    %s59 = sphi 0, %s58
    %s73 = sphi 0, %s59
    %s77 = sphi 0, %s77
    %s79 = sphi 0, %s77
    %s80 = sphi 0, %s79
    %s94 = sphi 0, %s80
    %s98 = sphi 0, %s98
    %s100 = sphi 0, %s98
    %s101 = sphi 0, %s100
    %s115 = sphi 0, %s101
    %s119 = sphi 0, %s119
    %s121 = sphi 0, %s119
    %s122 = sphi 0, %s121
    %s136 = sphi 0, %s122
    %s140 = sphi 0, %s140
    %s142 = sphi 0, %s140
    %s143 = sphi 0, %s142
    %s157 = sphi 0, %s143
    %s161 = sphi 0, %s161
    %s163 = sphi 0, %s161
    %s164 = sphi 0, %s163
    %s178 = sphi 0, %s164
    %s182 = sphi 0, %s182
    %s184 = sphi 0, %s182
    %s185 = sphi 0, %s184
    %s199 = sphi 0, %s185
    %s203 = sphi 0, %s203
    %s205 = sphi 0, %s203
    %s206 = sphi 0, %s205
    %s220 = sphi 0, %s206
    %s224 = sphi 0, %s224
    %s226 = sphi 0, %s224
    %s227 = sphi 0, %s226
    %s241 = sphi 0, %s227
    %s247 = sphi 0, %s249
    %s250 = sphi 0, %s247
    %s251 = sphi 0, %s250
    %s267 = sphi 0, %s251
    %s273 = sphi 0, %s275
    %s276 = sphi 0, %s273
    %s277 = sphi 0, %s276
    %s293 = sphi 0, %s277
    %s299 = sphi 0, %s301
    %s302 = sphi 0, %s299
    %s303 = sphi 0, %s302
    %s319 = sphi 0, %s303
    %s325 = sphi 0, %s327
    %s328 = sphi 0, %s325
    %s329 = sphi 0, %s328
    %s345 = sphi 0, %s329
  $region4: #{msd_forward.3} parent=0 // loop_header_branch
    %25 = sbr.rel (%p23) target = $region8
  $region5: #{msd_forward.3} parent=0 // loop_body
    %s27 = ssub.s32 %s22, 1
    %s28 = ssub.s32 %s22, 2
    %s29 = sadd.s32 %s22, 1
    %s30 = ssub.s32 %s22, %s29
    %p31 = scmp.eq.s32.totalorder %s30, 0
    %s33 = sadd.s32 %s32, 1
    %s34 = scalar_select %p31, %s32, %s33
    %p37 = pneg %p31
    %p38 = scmp.eq.s32.totalorder %s22, 1
    %p39 = por %p37, %p38
    %p40 = scmp.ne.s32.totalorder %s32, %s35
    %p41 = scmp.eq.s32.totalorder %s22, 0
    %p42 = por %p40, %p41
    %p43 = scmp.ne.s32.totalorder %s32, %s35
    %p44 = scmp.eq.s32.totalorder %s27, 1
    %p45 = por %p43, %p44
    %p46 = scmp.ne.s32.totalorder %s35, %s36
    %p47 = scmp.eq.s32.totalorder %s27, 0
    %p48 = por %p46, %p47
    %p49 = scmp.ne.s32.totalorder %s35, %s36
    %p50 = scmp.eq.s32.totalorder %s28, 1
    %p51 = por %p49, %p50
    %p53 = scmp.ne.s32.totalorder %s36, %s52
    %p54 = scmp.eq.s32.totalorder %s28, 0
    %p55 = por %p53, %p54
    %s57 = sadd.s32 %s56, 1
    %p60 = scmp.eq.s32.totalorder %s22, 1
    %p61 = scmp.ne.s32.totalorder %s56, %s58
    %p62 = scmp.eq.s32.totalorder %s22, 0
    %p63 = por %p61, %p62
    %p64 = scmp.ne.s32.totalorder %s56, %s58
    %p65 = scmp.eq.s32.totalorder %s27, 1
    %p66 = por %p64, %p65
    %p67 = scmp.ne.s32.totalorder %s58, %s59
    %p68 = scmp.eq.s32.totalorder %s27, 0
    %p69 = por %p67, %p68
    %p70 = scmp.ne.s32.totalorder %s58, %s59
    %p71 = scmp.eq.s32.totalorder %s28, 1
    %p72 = por %p70, %p71
    %p74 = scmp.ne.s32.totalorder %s59, %s73
    %p75 = scmp.eq.s32.totalorder %s28, 0
    %p76 = por %p74, %p75
    %s78 = sadd.s32 %s77, 1
    %p81 = scmp.eq.s32.totalorder %s22, 1
    %p82 = scmp.ne.s32.totalorder %s77, %s79
    %p83 = scmp.eq.s32.totalorder %s22, 0
    %p84 = por %p82, %p83
    %p85 = scmp.ne.s32.totalorder %s77, %s79
    %p86 = scmp.eq.s32.totalorder %s27, 1
    %p87 = por %p85, %p86
    %p88 = scmp.ne.s32.totalorder %s79, %s80
    %p89 = scmp.eq.s32.totalorder %s27, 0
    %p90 = por %p88, %p89
    %p91 = scmp.ne.s32.totalorder %s79, %s80
    %p92 = scmp.eq.s32.totalorder %s28, 1
    %p93 = por %p91, %p92
    %p95 = scmp.ne.s32.totalorder %s80, %s94
    %p96 = scmp.eq.s32.totalorder %s28, 0
    %p97 = por %p95, %p96
    %s99 = sadd.s32 %s98, 1
    %p102 = scmp.eq.s32.totalorder %s22, 1
    %p103 = scmp.ne.s32.totalorder %s98, %s100
    %p104 = scmp.eq.s32.totalorder %s22, 0
    %p105 = por %p103, %p104
    %p106 = scmp.ne.s32.totalorder %s98, %s100
    %p107 = scmp.eq.s32.totalorder %s27, 1
    %p108 = por %p106, %p107
    %p109 = scmp.ne.s32.totalorder %s100, %s101
    %p110 = scmp.eq.s32.totalorder %s27, 0
    %p111 = por %p109, %p110
    %p112 = scmp.ne.s32.totalorder %s100, %s101
    %p113 = scmp.eq.s32.totalorder %s28, 1
    %p114 = por %p112, %p113
    %p116 = scmp.ne.s32.totalorder %s101, %s115
    %p117 = scmp.eq.s32.totalorder %s28, 0
    %p118 = por %p116, %p117
    %s120 = sadd.s32 %s119, 1
    %p123 = scmp.eq.s32.totalorder %s22, 1
    %p124 = scmp.ne.s32.totalorder %s119, %s121
    %p125 = scmp.eq.s32.totalorder %s22, 0
    %p126 = por %p124, %p125
    %p127 = scmp.ne.s32.totalorder %s119, %s121
    %p128 = scmp.eq.s32.totalorder %s27, 1
    %p129 = por %p127, %p128
    %p130 = scmp.ne.s32.totalorder %s121, %s122
    %p131 = scmp.eq.s32.totalorder %s27, 0
    %p132 = por %p130, %p131
    %p133 = scmp.ne.s32.totalorder %s121, %s122
    %p134 = scmp.eq.s32.totalorder %s28, 1
    %p135 = por %p133, %p134
    %p137 = scmp.ne.s32.totalorder %s122, %s136
    %p138 = scmp.eq.s32.totalorder %s28, 0
    %p139 = por %p137, %p138
    %s141 = sadd.s32 %s140, 1
    %p144 = scmp.eq.s32.totalorder %s22, 1
    %p145 = scmp.ne.s32.totalorder %s140, %s142
    %p146 = scmp.eq.s32.totalorder %s22, 0
    %p147 = por %p145, %p146
    %p148 = scmp.ne.s32.totalorder %s140, %s142
    %p149 = scmp.eq.s32.totalorder %s27, 1
    %p150 = por %p148, %p149
    %p151 = scmp.ne.s32.totalorder %s142, %s143
    %p152 = scmp.eq.s32.totalorder %s27, 0
    %p153 = por %p151, %p152
    %p154 = scmp.ne.s32.totalorder %s142, %s143
    %p155 = scmp.eq.s32.totalorder %s28, 1
    %p156 = por %p154, %p155
    %p158 = scmp.ne.s32.totalorder %s143, %s157
    %p159 = scmp.eq.s32.totalorder %s28, 0
    %p160 = por %p158, %p159
    %s162 = sadd.s32 %s161, 1
    %p165 = scmp.eq.s32.totalorder %s22, 1
    %p166 = scmp.ne.s32.totalorder %s161, %s163
    %p167 = scmp.eq.s32.totalorder %s22, 0
    %p168 = por %p166, %p167
    %p169 = scmp.ne.s32.totalorder %s161, %s163
    %p170 = scmp.eq.s32.totalorder %s27, 1
    %p171 = por %p169, %p170
    %p172 = scmp.ne.s32.totalorder %s163, %s164
    %p173 = scmp.eq.s32.totalorder %s27, 0
    %p174 = por %p172, %p173
    %p175 = scmp.ne.s32.totalorder %s163, %s164
    %p176 = scmp.eq.s32.totalorder %s28, 1
    %p177 = por %p175, %p176
    %p179 = scmp.ne.s32.totalorder %s164, %s178
    %p180 = scmp.eq.s32.totalorder %s28, 0
    %p181 = por %p179, %p180
    %s183 = sadd.s32 %s182, 1
    %p186 = scmp.eq.s32.totalorder %s22, 1
    %p187 = scmp.ne.s32.totalorder %s182, %s184
    %p188 = scmp.eq.s32.totalorder %s22, 0
    %p189 = por %p187, %p188
    %p190 = scmp.ne.s32.totalorder %s182, %s184
    %p191 = scmp.eq.s32.totalorder %s27, 1
    %p192 = por %p190, %p191
    %p193 = scmp.ne.s32.totalorder %s184, %s185
    %p194 = scmp.eq.s32.totalorder %s27, 0
    %p195 = por %p193, %p194
    %p196 = scmp.ne.s32.totalorder %s184, %s185
    %p197 = scmp.eq.s32.totalorder %s28, 1
    %p198 = por %p196, %p197
    %p200 = scmp.ne.s32.totalorder %s185, %s199
    %p201 = scmp.eq.s32.totalorder %s28, 0
    %p202 = por %p200, %p201
    %s204 = sadd.s32 %s203, 1
    %p207 = scmp.eq.s32.totalorder %s22, 1
    %p208 = scmp.ne.s32.totalorder %s203, %s205
    %p209 = scmp.eq.s32.totalorder %s22, 0
    %p210 = por %p208, %p209
    %p211 = scmp.ne.s32.totalorder %s203, %s205
    %p212 = scmp.eq.s32.totalorder %s27, 1
    %p213 = por %p211, %p212
    %p214 = scmp.ne.s32.totalorder %s205, %s206
    %p215 = scmp.eq.s32.totalorder %s27, 0
    %p216 = por %p214, %p215
    %p217 = scmp.ne.s32.totalorder %s205, %s206
    %p218 = scmp.eq.s32.totalorder %s28, 1
    %p219 = por %p217, %p218
    %p221 = scmp.ne.s32.totalorder %s206, %s220
    %p222 = scmp.eq.s32.totalorder %s28, 0
    %p223 = por %p221, %p222
    %s225 = sadd.s32 %s224, 1
    %p228 = scmp.eq.s32.totalorder %s22, 1
    %p229 = scmp.ne.s32.totalorder %s224, %s226
    %p230 = scmp.eq.s32.totalorder %s22, 0
    %p231 = por %p229, %p230
    %p232 = scmp.ne.s32.totalorder %s224, %s226
    %p233 = scmp.eq.s32.totalorder %s27, 1
    %p234 = por %p232, %p233
    %p235 = scmp.ne.s32.totalorder %s226, %s227
    %p236 = scmp.eq.s32.totalorder %s27, 0
    %p237 = por %p235, %p236
    %p238 = scmp.ne.s32.totalorder %s226, %s227
    %p239 = scmp.eq.s32.totalorder %s28, 1
    %p240 = por %p238, %p239
    %p242 = scmp.ne.s32.totalorder %s227, %s241
    %p243 = scmp.eq.s32.totalorder %s28, 0
    %p244 = por %p242, %p243
    %s245 = ssub.s32 %s22, %s29
    %p246 = scmp.eq.s32.totalorder %s245, 0
    %s248 = sadd.s32 %s247, 1
    %s249 = scalar_select %p246, %s247, %s248
    %p252 = pneg %p246
    %p253 = scmp.eq.s32.totalorder %s22, 1
    %p254 = por %p252, %p253
    %p255 = scmp.ne.s32.totalorder %s247, %s250
    %p256 = scmp.eq.s32.totalorder %s22, 0
    %p257 = por %p255, %p256
    %p258 = scmp.ne.s32.totalorder %s247, %s250
    %p259 = scmp.eq.s32.totalorder %s27, 1
    %p260 = por %p258, %p259
    %p261 = scmp.ne.s32.totalorder %s250, %s251
    %p262 = scmp.eq.s32.totalorder %s27, 0
    %p263 = por %p261, %p262
    %p264 = scmp.ne.s32.totalorder %s250, %s251
    %p265 = scmp.eq.s32.totalorder %s28, 1
    %p266 = por %p264, %p265
    %p268 = scmp.ne.s32.totalorder %s251, %s267
    %p269 = scmp.eq.s32.totalorder %s28, 0
    %p270 = por %p268, %p269
    %s271 = ssub.s32 %s22, %s29
    %p272 = scmp.eq.s32.totalorder %s271, 0
    %s274 = sadd.s32 %s273, 1
    %s275 = scalar_select %p272, %s273, %s274
    %p278 = pneg %p272
    %p279 = scmp.eq.s32.totalorder %s22, 1
    %p280 = por %p278, %p279
    %p281 = scmp.ne.s32.totalorder %s273, %s276
    %p282 = scmp.eq.s32.totalorder %s22, 0
    %p283 = por %p281, %p282
    %p284 = scmp.ne.s32.totalorder %s273, %s276
    %p285 = scmp.eq.s32.totalorder %s27, 1
    %p286 = por %p284, %p285
    %p287 = scmp.ne.s32.totalorder %s276, %s277
    %p288 = scmp.eq.s32.totalorder %s27, 0
    %p289 = por %p287, %p288
    %p290 = scmp.ne.s32.totalorder %s276, %s277
    %p291 = scmp.eq.s32.totalorder %s28, 1
    %p292 = por %p290, %p291
    %p294 = scmp.ne.s32.totalorder %s277, %s293
    %p295 = scmp.eq.s32.totalorder %s28, 0
    %p296 = por %p294, %p295
    %s297 = ssub.s32 %s22, %s29
    %p298 = scmp.eq.s32.totalorder %s297, 0
    %s300 = sadd.s32 %s299, 1
    %s301 = scalar_select %p298, %s299, %s300
    %p304 = pneg %p298
    %p305 = scmp.eq.s32.totalorder %s22, 1
    %p306 = por %p304, %p305
    %p307 = scmp.ne.s32.totalorder %s299, %s302
    %p308 = scmp.eq.s32.totalorder %s22, 0
    %p309 = por %p307, %p308
    %p310 = scmp.ne.s32.totalorder %s299, %s302
    %p311 = scmp.eq.s32.totalorder %s27, 1
    %p312 = por %p310, %p311
    %p313 = scmp.ne.s32.totalorder %s302, %s303
    %p314 = scmp.eq.s32.totalorder %s27, 0
    %p315 = por %p313, %p314
    %p316 = scmp.ne.s32.totalorder %s302, %s303
    %p317 = scmp.eq.s32.totalorder %s28, 1
    %p318 = por %p316, %p317
    %p320 = scmp.ne.s32.totalorder %s303, %s319
    %p321 = scmp.eq.s32.totalorder %s28, 0
    %p322 = por %p320, %p321
    %s323 = ssub.s32 %s22, %s29
    %p324 = scmp.eq.s32.totalorder %s323, 0
    %s326 = sadd.s32 %s325, 1
    %s327 = scalar_select %p324, %s325, %s326
    %p330 = pneg %p324
    %p331 = scmp.eq.s32.totalorder %s22, 1
    %p332 = por %p330, %p331
    %p333 = scmp.ne.s32.totalorder %s325, %s328
    %p334 = scmp.eq.s32.totalorder %s22, 0
    %p335 = por %p333, %p334
    %p336 = scmp.ne.s32.totalorder %s325, %s328
    %p337 = scmp.eq.s32.totalorder %s27, 1
    %p338 = por %p336, %p337
    %p339 = scmp.ne.s32.totalorder %s328, %s329
    %p340 = scmp.eq.s32.totalorder %s27, 0
    %p341 = por %p339, %p340
    %p342 = scmp.ne.s32.totalorder %s328, %s329
    %p343 = scmp.eq.s32.totalorder %s28, 1
    %p344 = por %p342, %p343
    %p346 = scmp.ne.s32.totalorder %s329, %s345
    %p347 = scmp.eq.s32.totalorder %s28, 0
    %p348 = por %p346, %p347
    %p349 = scmp.le.s32.totalorder 1, %s22
    %p350 = scmp.lt.s32.totalorder %s22, 3
    %p351 = pnand %p349, %p350
    %p352 = pneg %p351
    // Predicated region
    $region9: #{msd_forward.3} parent=5 // pred_check
      _
    $region10: #{msd_forward.3} parent=5 // pred_check_branch
      %354 = sbr.rel (%p351) target = $region12
    $region11: #{msd_forward.3} parent=5 // pred_region
      %s355 = ssub.s32 %s22, 1
      // Predicated region
      $region13: #{msd_forward.3} parent=11 // pred_check
        %p356 = pneg %p69
      $region14: #{msd_forward.3} parent=11 // pred_check_branch
        %358 = sbr.rel (%p356) target = $region16
      $region15: #{msd_forward.3} parent=11 // pred_region
        _
      $region16: #{msd_forward.3} parent=11 // pred_fallthru
        _
      // Predicated region
      $region17: #{msd_forward.3} parent=11 // pred_check
        %p359 = pneg %p90
      $region18: #{msd_forward.3} parent=11 // pred_check_branch
        %361 = sbr.rel (%p359) target = $region20
      $region19: #{msd_forward.3} parent=11 // pred_region
        _
      $region20: #{msd_forward.3} parent=11 // pred_fallthru
        _
      // Predicated region
      $region21: #{msd_forward.3} parent=11 // pred_check
        %p362 = pneg %p111
      $region22: #{msd_forward.3} parent=11 // pred_check_branch
        %364 = sbr.rel (%p362) target = $region24
      $region23: #{msd_forward.3} parent=11 // pred_region
        _
      $region24: #{msd_forward.3} parent=11 // pred_fallthru
        _
      // Predicated region
      $region25: #{msd_forward.3} parent=11 // pred_check
        %p365 = pneg %p132
      $region26: #{msd_forward.3} parent=11 // pred_check_branch
        %367 = sbr.rel (%p365) target = $region28
      $region27: #{msd_forward.3} parent=11 // pred_region
        _
      $region28: #{msd_forward.3} parent=11 // pred_fallthru
        _
      // Predicated region
      $region29: #{msd_forward.3} parent=11 // pred_check
        %p368 = pneg %p153
      $region30: #{msd_forward.3} parent=11 // pred_check_branch
        %370 = sbr.rel (%p368) target = $region32
      $region31: #{msd_forward.3} parent=11 // pred_region
        _
      $region32: #{msd_forward.3} parent=11 // pred_fallthru
        _
      // Predicated region
      $region33: #{msd_forward.3} parent=11 // pred_check
        %p371 = pneg %p174
      $region34: #{msd_forward.3} parent=11 // pred_check_branch
        %373 = sbr.rel (%p371) target = $region36
      $region35: #{msd_forward.3} parent=11 // pred_region
        _
      $region36: #{msd_forward.3} parent=11 // pred_fallthru
        _
      // Predicated region
      $region37: #{msd_forward.3} parent=11 // pred_check
        %p374 = pneg %p195
      $region38: #{msd_forward.3} parent=11 // pred_check_branch
        %376 = sbr.rel (%p374) target = $region40
      $region39: #{msd_forward.3} parent=11 // pred_region
        _
      $region40: #{msd_forward.3} parent=11 // pred_fallthru
        _
      // Predicated region
      $region41: #{msd_forward.3} parent=11 // pred_check
        %p377 = pneg %p216
      $region42: #{msd_forward.3} parent=11 // pred_check_branch
        %379 = sbr.rel (%p377) target = $region44
      $region43: #{msd_forward.3} parent=11 // pred_region
        _
      $region44: #{msd_forward.3} parent=11 // pred_fallthru
        _
      // Predicated region
      $region45: #{msd_forward.3} parent=11 // pred_check
        %p380 = pneg %p237
      $region46: #{msd_forward.3} parent=11 // pred_check_branch
        %382 = sbr.rel (%p380) target = $region48
      $region47: #{msd_forward.3} parent=11 // pred_region
        _
      $region48: #{msd_forward.3} parent=11 // pred_fallthru
        _
    $region12: #{msd_forward.3} parent=5 // pred_fallthru
      _
    %p383 = scmp.lt.s32.totalorder %s22, 2
    // Predicated region
    $region49: #{msd_forward.3} parent=5 // pred_check
      %p384 = pneg %p383
    $region50: #{msd_forward.3} parent=5 // pred_check_branch
      %386 = sbr.rel (%p384) target = $region52
    $region51: #{msd_forward.3} parent=5 // pred_region
      // Predicated region
      $region53: #{msd_forward.3} parent=51 // pred_check
        %p387 = pneg %p42
      $region54: #{msd_forward.3} parent=51 // pred_check_branch
        %389 = sbr.rel (%p387) target = $region56
      $region55: #{msd_forward.3} parent=51 // pred_region
        %p390 = scmp.lt.s32.totalorder %s22, 1
        %s391 = scalar_select %p390, %s22, 1
        %s392 = scalar_lea.vmem %s0, %s391
      $region56: #{msd_forward.3} parent=51 // pred_fallthru
        _
    $region52: #{msd_forward.3} parent=5 // pred_fallthru
      _
    %p393 = scmp.le.s32.totalorder 1, %s22
    %p394 = scmp.lt.s32.totalorder %s22, 3
    %p395 = pnand %p393, %p394
    %p396 = pneg %p395
    // Predicated region
    $region57: #{msd_forward.3} parent=5 // pred_check
      _
    $region58: #{msd_forward.3} parent=5 // pred_check_branch
      %398 = sbr.rel (%p395) target = $region60
    $region59: #{msd_forward.3} parent=5 // pred_region
      %s399 = ssub.s32 %s22, 1
      %p400 = scmp.lt.s32.totalorder %s27, 1
      %s401 = scalar_select %p400, %s27, 1
      %s402 = scalar_lea.vmem %s0, %s401
      %p403 = pneg %p48
      %p404 = pneg %p45
      %p405 = pneg %p69
      %p406 = pneg %p66
      %p407 = pneg %p90
      %p408 = pneg %p87
      %p409 = pneg %p111
      %p410 = pneg %p108
      %p411 = pneg %p132
      %p412 = pneg %p129
      %p413 = pneg %p153
      %p414 = pneg %p150
      %p415 = pneg %p174
      %p416 = pneg %p171
      %p417 = pneg %p195
      %p418 = pneg %p192
      %p419 = pneg %p216
      %p420 = pneg %p213
      %p421 = pneg %p237
      %p422 = pneg %p234
      %p423 = pneg %p263
      %p424 = pneg %p260
      %p425 = scmp.lt.s32.totalorder %s27, 1
      %s426 = scalar_select %p425, %s27, 1
      %s427 = smul.addr %s426, 8
      %s428 = scalar_lea.vmem %s10, %s427
      %p429 = pneg %p289
      %p430 = pneg %p286
      %p431 = scmp.lt.s32.totalorder %s27, 1
      %s432 = scalar_select %p431, %s27, 1
      %s433 = smul.addr %s432, 2
      %s434 = smul.addr %s433, 8
      %s435 = scalar_lea.vmem %s11, %s434
      %p436 = pneg %p315
      %p437 = pneg %p312
      %p438 = scmp.lt.s32.totalorder %s27, 1
      %s439 = scalar_select %p438, %s27, 1
      %s440 = smul.addr %s439, 2
      %s441 = smul.addr %s440, 8
      %s442 = scalar_lea.vmem %s12, %s441
      %p443 = pneg %p341
      %p444 = pneg %p338
      %p445 = scmp.lt.s32.totalorder %s27, 1
      %s446 = scalar_select %p445, %s27, 1
      %s447 = scalar_lea.vmem %s13, %s446
      %p448 = scmp.lt.s32.totalorder %s27, 1
      %s449 = scalar_select %p448, %s27, 1
      %s450 = scalar_lea.vmem %s0, %s449
      %p451 = scmp.lt.s32.totalorder %s27, 1
      %s452 = scalar_select %p451, %s27, 1
      %s453 = smul.addr %s452, 8
      %s454 = scalar_lea.vmem %s10, %s453
      %p455 = scmp.lt.s32.totalorder %s27, 1
      %s456 = scalar_select %p455, %s27, 1
      %s457 = smul.addr %s456, 2
      %s458 = smul.addr %s457, 8
      %s459 = scalar_lea.vmem %s11, %s458
      %p460 = scmp.lt.s32.totalorder %s27, 1
      %s461 = scalar_select %p460, %s27, 1
      %s462 = smul.addr %s461, 2
      %s463 = smul.addr %s462, 8
      %s464 = scalar_lea.vmem %s12, %s463
      %p465 = scmp.lt.s32.totalorder %s27, 1
      %s466 = scalar_select %p465, %s27, 1
      %s467 = scalar_lea.vmem %s13, %s466
      %v468 = vld [vmem:[%s450] sm:$0x1]
      %v469 = vld [vmem:[%s1] sm:$0xff]
      %v470 = vld [vmem:[%s2] sm:$0xff]
      %v472 = vlaneseq
      %v473 = vshrl.u32 %v472, 7
      %v474 = vsub.s32 0, %v473
      %v475 = vrot.slane %v468, %v474
      %476 = vrot.lane.b32.xlu0 %v475, 2
      %v477 = vpop.permute.xlu0 %476
      %vm479 = vcmask 15360
      %v480 = vsel %vm479, 0.0, %v477
      %vm481 = vcmask 539648
      %v482 = vsel %vm481, %v480, 0.0
      %483 = vrot.lane.b32.xlu0 %v475, 66
      %v484 = vpop.permute.xlu0 %483
      %v486 = vsel %vm479, 0.0, %v484
      %v487 = vsel %vm481, %v486, 0.0
      %489 = vrot.lane.b32.xlu0 %v487, 64
      %v490 = vpop.permute.xlu0 %489
      %vm492 = vcmask 523264
      %v493 = vsel %vm492, %v482, %v490
      %495 = vset.pattern.permute.xlu0 0
      %496 = vperm.xlu0 %495, %v469
      %v497 = vpop.permute.xlu0 %496
      %v499 = vlaneseq
      %v500 = vshrl.u32 %v499, 7
      %v501 = vsub.s32 0, %v500
      %v502 = vrot.slane %v493, %v501
      %v503 = vmul.f32 %v497, %v502
      %v504 = vadd.f32 %v503, 0.0
      %506 = vrot.lane.b32.xlu0 %v482, 127
      %v507 = vpop.permute.xlu0 %506
      %509 = vrot.lane.b32.xlu0 %v487, 63
      %v510 = vpop.permute.xlu0 %509
      %v512 = vsel %vm492, %v507, %v510
      %513 = vset.pattern.permute.xlu0 1
      %514 = vperm.xlu0 %513, %v469
      %v515 = vpop.permute.xlu0 %514
      %v517 = vlaneseq
      %v518 = vshrl.u32 %v517, 7
      %v519 = vsub.s32 0, %v518
      %v520 = vrot.slane %v512, %v519
      %v521 = vmul.f32 %v515, %v520
      %v522 = vadd.f32 %v504, %v521
      %523 = vrot.lane.b32.xlu0 %v482, 126
      %v524 = vpop.permute.xlu0 %523
      %526 = vrot.lane.b32.xlu0 %v487, 62
      %v527 = vpop.permute.xlu0 %526
      %v529 = vsel %vm492, %v524, %v527
      %530 = vset.pattern.permute.xlu0 2
      %531 = vperm.xlu0 %530, %v469
      %v532 = vpop.permute.xlu0 %531
      %v534 = vlaneseq
      %v535 = vshrl.u32 %v534, 7
      %v536 = vsub.s32 0, %v535
      %v537 = vrot.slane %v529, %v536
      %v538 = vmul.f32 %v532, %v537
      %v539 = vadd.f32 %v522, %v538
      %540 = vrot.lane.b32.xlu0 %v482, 125
      %v541 = vpop.permute.xlu0 %540
      %543 = vrot.lane.b32.xlu0 %v487, 61
      %v544 = vpop.permute.xlu0 %543
      %v546 = vsel %vm492, %v541, %v544
      %547 = vset.pattern.permute.xlu0 3
      %548 = vperm.xlu0 %547, %v469
      %v549 = vpop.permute.xlu0 %548
      %v551 = vlaneseq
      %v552 = vshrl.u32 %v551, 7
      %v553 = vsub.s32 0, %v552
      %v554 = vrot.slane %v546, %v553
      %v555 = vmul.f32 %v549, %v554
      %v556 = vadd.f32 %v539, %v555
      %557 = vrot.lane.b32.xlu0 %v482, 124
      %v558 = vpop.permute.xlu0 %557
      %560 = vrot.lane.b32.xlu0 %v487, 60
      %v561 = vpop.permute.xlu0 %560
      %v563 = vsel %vm492, %v558, %v561
      %564 = vset.pattern.permute.xlu0 4
      %565 = vperm.xlu0 %564, %v469
      %v566 = vpop.permute.xlu0 %565
      %v568 = vlaneseq
      %v569 = vshrl.u32 %v568, 7
      %v570 = vsub.s32 0, %v569
      %v571 = vrot.slane %v563, %v570
      %v572 = vmul.f32 %v566, %v571
      %v573 = vadd.f32 %v556, %v572
      %575 = vset.pattern.permute.xlu0 0
      %576 = vperm.xlu0 %575, %v470
      %v577 = vpop.permute.xlu0 %576
      %v579 = vadd.f32 %v573, %v577
      %vm580 = vcmp.ge.f32.partialorder %v579, 0.0
      %v581 = vmul.f32 %v579, 0.1
      %v582 = vsel %vm580, %v579, %v581
      %583 = vst [vmem:[%s454] sm:$0xff] %v582
      %v584 = vld [vmem:[%s9] sm:$0xff]
      %v585 = vld [vmem:[%s9 + $0x8] sm:$0xff]
      %v586 = vld [vmem:[%s9 + $0x10] sm:$0xff]
      %v587 = vld [vmem:[%s9 + $0x18] sm:$0xff]
      %v588 = vld [vmem:[%s9 + $0x20] sm:$0xff]
      %v589 = vld [vmem:[%s9 + $0x28] sm:$0xff]
      %v590 = vld [vmem:[%s9 + $0x30] sm:$0xff]
      %v591 = vld [vmem:[%s9 + $0x38] sm:$0xff]
      %v592 = vld [vmem:[%s9 + $0x40] sm:$0xff]
      %v593 = vld [vmem:[%s9 + $0x48] sm:$0xff]
      %v594 = vld [vmem:[%s9 + $0x50] sm:$0xff]
      %v595 = vld [vmem:[%s9 + $0x58] sm:$0xff]
      %v596 = vld [vmem:[%s9 + $0x60] sm:$0xff]
      %v597 = vld [vmem:[%s9 + $0x68] sm:$0xff]
      %v598 = vld [vmem:[%s9 + $0x70] sm:$0xff]
      %v599 = vld [vmem:[%s9 + $0x78] sm:$0xff]
      %v600 = vld [vmem:[%s3] sm:$0xff]
      %v601 = vld [vmem:[%s3 + $0x8] sm:$0xff]
      %v602 = vld [vmem:[%s4] sm:$0xff]
      %v603 = vld [vmem:[%s4 + $0x8] sm:$0xff]
      %605 = vrot.lane.b32.xlu0 %v582, 2
      %v606 = vpop.permute.xlu0 %605
      %v608 = vsel %vm479, 0.0, %v606
      %v609 = vsel %vm481, %v608, 0.0
      %610 = vrot.lane.b32.xlu0 %v582, 66
      %v611 = vpop.permute.xlu0 %610
      %v613 = vsel %vm479, 0.0, %v611
      %v614 = vsel %vm481, %v613, 0.0
      %616 = vrot.lane.b32.xlu0 %v614, 64
      %v617 = vpop.permute.xlu0 %616
      %v619 = vsel %vm492, %v609, %v617
      %621 = vrot.lane.b32.xlu0 %v609, 127
      %v622 = vpop.permute.xlu0 %621
      %624 = vrot.lane.b32.xlu0 %v614, 63
      %v625 = vpop.permute.xlu0 %624
      %v627 = vsel %vm492, %v622, %v625
      %628 = vrot.lane.b32.xlu0 %v609, 126
      %v629 = vpop.permute.xlu0 %628
      %631 = vrot.lane.b32.xlu0 %v614, 62
      %v632 = vpop.permute.xlu0 %631
      %v634 = vsel %vm492, %v629, %v632
      %635 = vrot.lane.b32.xlu0 %v609, 125
      %v636 = vpop.permute.xlu0 %635
      %638 = vrot.lane.b32.xlu0 %v614, 61
      %v639 = vpop.permute.xlu0 %638
      %v641 = vsel %vm492, %v636, %v639
      %642 = vrot.lane.b32.xlu0 %v609, 124
      %v643 = vpop.permute.xlu0 %642
      %645 = vrot.lane.b32.xlu0 %v614, 60
      %v646 = vpop.permute.xlu0 %645
      %v648 = vsel %vm492, %v643, %v646
      %vm649 = vcmask 326656
      %v651 = vsel %vm649, %v600, 0
      %v654 = vsel %vm649, %v601, 0
      %656 = vmatprep.subr.mxu0 0.0
      %657 = vmatpush1.msra.mxu0 %v619
      %658 = vmatprep.subr.mxu0 0.0
      %659 = vmatpush1.msra.mxu0 %v627
      %660 = vmatprep.subr.mxu0 0.0
      %661 = vmatpush1.msra.mxu0 %v634
      %662 = vmatprep.subr.mxu0 0.0
      %663 = vmatpush1.msra.mxu0 %v641
      %664 = vmatprep.subr.mxu0 0.0
      %665 = vmatpush1.msra.mxu0 %v648
      %666 = vmatprep.subr.mxu0 0.0
      %667 = vmatpush1.msra.mxu0 0.0
      %668 = vmatprep.subr.mxu0 0.0
      %669 = vmatpush1.msra.mxu0 0.0
      %670 = vmatprep.subr.mxu0 0.0
      %671 = vmatpush1.msra.mxu0 0.0
      %672 = vmatprep.subr.mxu0 0.0
      %673 = vmatpush1.msra.mxu0 0.0
      %674 = vmatprep.subr.mxu0 0.0
      %675 = vmatpush1.msra.mxu0 0.0
      %676 = vmatprep.subr.mxu0 0.0
      %677 = vmatpush1.msra.mxu0 0.0
      %678 = vmatprep.subr.mxu0 0.0
      %679 = vmatpush1.msra.mxu0 0.0
      %680 = vmatprep.subr.mxu0 0.0
      %681 = vmatpush1.msra.mxu0 0.0
      %682 = vmatprep.subr.mxu0 0.0
      %683 = vmatpush1.msra.mxu0 0.0
      %684 = vmatprep.subr.mxu0 0.0
      %685 = vmatpush1.msra.mxu0 0.0
      %686 = vmatprep.subr.mxu0 0.0
      %687 = vmatpush1.msra.mxu0 0.0
      %688 = vmatprep.subr.mxu0 0.0
      %689 = vmatpush1.msra.mxu0 0.0
      %690 = vmatprep.subr.mxu0 0.0
      %691 = vmatpush1.msra.mxu0 0.0
      %692 = vmatprep.subr.mxu0 0.0
      %693 = vmatpush1.msra.mxu0 0.0
      %694 = vmatprep.subr.mxu0 0.0
      %695 = vmatpush1.msra.mxu0 0.0
      %696 = vmatprep.subr.mxu0 0.0
      %697 = vmatpush1.msra.mxu0 0.0
      %698 = vmatprep.subr.mxu0 0.0
      %699 = vmatpush1.msra.mxu0 0.0
      %700 = vmatprep.subr.mxu0 0.0
      %701 = vmatpush1.msra.mxu0 0.0
      %702 = vmatprep.subr.mxu0 0.0
      %703 = vmatpush1.msra.mxu0 0.0
      %704 = vmatprep.subr.mxu0 0.0
      %705 = vmatpush1.msra.mxu0 0.0
      %706 = vmatprep.subr.mxu0 0.0
      %707 = vmatpush1.msra.mxu0 0.0
      %708 = vmatprep.subr.mxu0 0.0
      %709 = vmatpush1.msra.mxu0 0.0
      %710 = vmatprep.subr.mxu0 0.0
      %711 = vmatpush1.msra.mxu0 0.0
      %712 = vmatprep.subr.mxu0 0.0
      %713 = vmatpush1.msra.mxu0 0.0
      %714 = vmatprep.subr.mxu0 0.0
      %715 = vmatpush1.msra.mxu0 0.0
      %716 = vmatprep.subr.mxu0 0.0
      %717 = vmatpush1.msra.mxu0 0.0
      %718 = vmatprep.subr.mxu0 0.0
      %719 = vmatpush1.msra.mxu0 0.0
      %720 = vmatprep.mubr.f32.mxu0 0.0
      %721 = vmatmul.mubr.f32.gmra.mrb[0].mxu0 %v651
      %v722 = vpop.f32.mrb[0].mxu0
      %v723 = vadd.f32 0.0, %v722
      %v724 = vpop.f32.mrb[0].mxu0
      %725 = vmatprep.mubr.f32.mxu0 0.0
      %726 = vmatmul.mubr.f32.gmra.mrb[0].mxu0 %v654
      %v727 = vpop.f32.mrb[0].mxu0
      %v728 = vadd.f32 0.0, %v727
      %v729 = vpop.f32.mrb[0].mxu0
      %730 = vdwg.mxu0
      %732 = vset.pattern.permute.xlu0 0
      %733 = vperm.xlu0 %732, %v602
      %v734 = vpop.permute.xlu0 %733
      %737 = vset.pattern.permute.xlu0 0
      %738 = vperm.xlu0 %737, %v603
      %v739 = vpop.permute.xlu0 %738
      %741 = vmatprep.subr.mxu0 0.0
      %742 = vmatpush1.msra.mxu0 %v584
      %743 = vmatprep.subr.mxu0 0.0
      %744 = vmatpush1.msra.mxu0 %v585
      %745 = vmatprep.subr.mxu0 0.0
      %746 = vmatpush1.msra.mxu0 %v586
      %747 = vmatprep.subr.mxu0 0.0
      %748 = vmatpush1.msra.mxu0 %v587
      %749 = vmatprep.subr.mxu0 0.0
      %750 = vmatpush1.msra.mxu0 %v588
      %751 = vmatprep.subr.mxu0 0.0
      %752 = vmatpush1.msra.mxu0 %v589
      %753 = vmatprep.subr.mxu0 0.0
      %754 = vmatpush1.msra.mxu0 %v590
      %755 = vmatprep.subr.mxu0 0.0
      %756 = vmatpush1.msra.mxu0 %v591
      %757 = vmatprep.subr.mxu0 0.0
      %758 = vmatpush1.msra.mxu0 %v592
      %759 = vmatprep.subr.mxu0 0.0
      %760 = vmatpush1.msra.mxu0 %v593
      %761 = vmatprep.subr.mxu0 0.0
      %762 = vmatpush1.msra.mxu0 %v594
      %763 = vmatprep.subr.mxu0 0.0
      %764 = vmatpush1.msra.mxu0 %v595
      %765 = vmatprep.subr.mxu0 0.0
      %766 = vmatpush1.msra.mxu0 %v596
      %767 = vmatprep.subr.mxu0 0.0
      %768 = vmatpush1.msra.mxu0 %v597
      %769 = vmatprep.subr.mxu0 0.0
      %770 = vmatpush1.msra.mxu0 %v598
      %771 = vmatprep.subr.mxu0 0.0
      %772 = vmatpush1.msra.mxu0 %v599
      %773 = vmatprep.subr.mxu0 0.0
      %774 = vmatpush1.msra.mxu0 0.0
      %775 = vmatprep.subr.mxu0 0.0
      %776 = vmatpush1.msra.mxu0 0.0
      %777 = vmatprep.subr.mxu0 0.0
      %778 = vmatpush1.msra.mxu0 0.0
      %779 = vmatprep.subr.mxu0 0.0
      %780 = vmatpush1.msra.mxu0 0.0
      %781 = vmatprep.subr.mxu0 0.0
      %782 = vmatpush1.msra.mxu0 0.0
      %783 = vmatprep.subr.mxu0 0.0
      %784 = vmatpush1.msra.mxu0 0.0
      %785 = vmatprep.subr.mxu0 0.0
      %786 = vmatpush1.msra.mxu0 0.0
      %787 = vmatprep.subr.mxu0 0.0
      %788 = vmatpush1.msra.mxu0 0.0
      %789 = vmatprep.subr.mxu0 0.0
      %790 = vmatpush1.msra.mxu0 0.0
      %791 = vmatprep.subr.mxu0 0.0
      %792 = vmatpush1.msra.mxu0 0.0
      %793 = vmatprep.subr.mxu0 0.0
      %794 = vmatpush1.msra.mxu0 0.0
      %795 = vmatprep.subr.mxu0 0.0
      %796 = vmatpush1.msra.mxu0 0.0
      %797 = vmatprep.subr.mxu0 0.0
      %798 = vmatpush1.msra.mxu0 0.0
      %799 = vmatprep.subr.mxu0 0.0
      %800 = vmatpush1.msra.mxu0 0.0
      %801 = vmatprep.subr.mxu0 0.0
      %802 = vmatpush1.msra.mxu0 0.0
      %803 = vmatprep.subr.mxu0 0.0
      %804 = vmatpush1.msra.mxu0 0.0
      %805 = vmatprep.mubr.f32.mxu0 0.0
      %806 = vmatmul.mubr.f32.gmra.mrb[0].mxu0 %v723
      %v807 = vpop.f32.mrb[0].mxu0
      %v808 = vadd.f32 %v734, %v807
      %v809 = vpop.f32.mrb[0].mxu0
      %810 = vmatprep.mubr.f32.mxu0 0.0
      %811 = vmatmul.mubr.f32.gmra.mrb[0].mxu0 %v728
      %v812 = vpop.f32.mrb[0].mxu0
      %v813 = vadd.f32 %v739, %v812
      %v814 = vpop.f32.mrb[0].mxu0
      %815 = vdwg.mxu0
      %vm816 = vcmp.ge.f32.partialorder %v808, 0.0
      %vm817 = vcmp.ge.f32.partialorder %v813, 0.0
      %v818 = vmul.f32 %v808, 0.1
      %v819 = vmul.f32 %v813, 0.1
      %v820 = vsel %vm816, %v808, %v818
      %v821 = vsel %vm817, %v813, %v819
      %822 = vst.msk [vmem:[%s459] sm:$0xff] %vm492, %v820
      %823 = vst.msk [vmem:[%s459 + $0x8] sm:$0xff] %vm492, %v821
      %v824 = vld [vmem:[%s5] sm:$0xff]
      %v825 = vld [vmem:[%s5 + $0x8] sm:$0xff]
      %v826 = vld [vmem:[%s6] sm:$0xff]
      %v827 = vld [vmem:[%s6 + $0x8] sm:$0xff]
      %830 = vrot.lane.b32.xlu0 %v820, 2
      %v831 = vpop.permute.xlu0 %830
      %832 = vrot.lane.b32.xlu0 %v821, 2
      %v833 = vpop.permute.xlu0 %832
      %v836 = vsel %vm479, 0.0, %v831
      %v837 = vsel %vm479, 0.0, %v833
      %vm838 = vcmask 277504
      %v839 = vsel %vm838, %v836, 0.0
      %v840 = vsel %vm838, %v837, 0.0
      %841 = vrot.lane.b32.xlu0 %v820, 98
      %v842 = vpop.permute.xlu0 %841
      %843 = vrot.lane.b32.xlu0 %v821, 98
      %v844 = vpop.permute.xlu0 %843
      %v847 = vsel %vm479, 0.0, %v842
      %v848 = vsel %vm479, 0.0, %v844
      %v849 = vsel %vm838, %v847, 0.0
      %v850 = vsel %vm838, %v848, 0.0
      %853 = vrot.lane.b32.xlu0 %v849, 32
      %v854 = vpop.permute.xlu0 %853
      %855 = vrot.lane.b32.xlu0 %v850, 32
      %v856 = vpop.permute.xlu0 %855
      %vm859 = vcmask 261120
      %v860 = vsel %vm859, %v839, %v854
      %v861 = vsel %vm859, %v840, %v856
      %864 = vrot.lane.b32.xlu0 %v839, 127
      %v865 = vpop.permute.xlu0 %864
      %866 = vrot.lane.b32.xlu0 %v840, 127
      %v867 = vpop.permute.xlu0 %866
      %870 = vrot.lane.b32.xlu0 %v849, 31
      %v871 = vpop.permute.xlu0 %870
      %872 = vrot.lane.b32.xlu0 %v850, 31
      %v873 = vpop.permute.xlu0 %872
      %v876 = vsel %vm859, %v865, %v871
      %v877 = vsel %vm859, %v867, %v873
      %878 = vrot.lane.b32.xlu0 %v839, 126
      %v879 = vpop.permute.xlu0 %878
      %880 = vrot.lane.b32.xlu0 %v840, 126
      %v881 = vpop.permute.xlu0 %880
      %884 = vrot.lane.b32.xlu0 %v849, 30
      %v885 = vpop.permute.xlu0 %884
      %886 = vrot.lane.b32.xlu0 %v850, 30
      %v887 = vpop.permute.xlu0 %886
      %v890 = vsel %vm859, %v879, %v885
      %v891 = vsel %vm859, %v881, %v887
      %892 = vrot.lane.b32.xlu0 %v839, 125
      %v893 = vpop.permute.xlu0 %892
      %894 = vrot.lane.b32.xlu0 %v840, 125
      %v895 = vpop.permute.xlu0 %894
      %898 = vrot.lane.b32.xlu0 %v849, 29
      %v899 = vpop.permute.xlu0 %898
      %900 = vrot.lane.b32.xlu0 %v850, 29
      %v901 = vpop.permute.xlu0 %900
      %v904 = vsel %vm859, %v893, %v899
      %v905 = vsel %vm859, %v895, %v901
      %906 = vrot.lane.b32.xlu0 %v839, 124
      %v907 = vpop.permute.xlu0 %906
      %908 = vrot.lane.b32.xlu0 %v840, 124
      %v909 = vpop.permute.xlu0 %908
      %912 = vrot.lane.b32.xlu0 %v849, 28
      %v913 = vpop.permute.xlu0 %912
      %914 = vrot.lane.b32.xlu0 %v850, 28
      %v915 = vpop.permute.xlu0 %914
      %v918 = vsel %vm859, %v907, %v913
      %v919 = vsel %vm859, %v909, %v915
      %921 = vset.pattern.permute.xlu0 0
      %922 = vperm.xlu0 %921, %v826
      %v923 = vpop.permute.xlu0 %922
      %926 = vset.pattern.permute.xlu0 0
      %927 = vperm.xlu0 %926, %v827
      %v928 = vpop.permute.xlu0 %927
      %vm930 = vcmask 654336
      %v932 = vsel %vm930, %v824, 0
      %v935 = vsel %vm930, %v825, 0
      %937 = vmatprep.subr.mxu0 0.0
      %938 = vmatpush1.msra.mxu0 %v860
      %939 = vmatprep.subr.mxu0 0.0
      %940 = vmatpush1.msra.mxu0 %v861
      %941 = vmatprep.subr.mxu0 0.0
      %942 = vmatpush1.msra.mxu0 %v876
      %943 = vmatprep.subr.mxu0 0.0
      %944 = vmatpush1.msra.mxu0 %v877
      %945 = vmatprep.subr.mxu0 0.0
      %946 = vmatpush1.msra.mxu0 %v890
      %947 = vmatprep.subr.mxu0 0.0
      %948 = vmatpush1.msra.mxu0 %v891
      %949 = vmatprep.subr.mxu0 0.0
      %950 = vmatpush1.msra.mxu0 %v904
      %951 = vmatprep.subr.mxu0 0.0
      %952 = vmatpush1.msra.mxu0 %v905
      %953 = vmatprep.subr.mxu0 0.0
      %954 = vmatpush1.msra.mxu0 %v918
      %955 = vmatprep.subr.mxu0 0.0
      %956 = vmatpush1.msra.mxu0 %v919
      %957 = vmatprep.subr.mxu0 0.0
      %958 = vmatpush1.msra.mxu0 0.0
      %959 = vmatprep.subr.mxu0 0.0
      %960 = vmatpush1.msra.mxu0 0.0
      %961 = vmatprep.subr.mxu0 0.0
      %962 = vmatpush1.msra.mxu0 0.0
      %963 = vmatprep.subr.mxu0 0.0
      %964 = vmatpush1.msra.mxu0 0.0
      %965 = vmatprep.subr.mxu0 0.0
      %966 = vmatpush1.msra.mxu0 0.0
      %967 = vmatprep.subr.mxu0 0.0
      %968 = vmatpush1.msra.mxu0 0.0
      %969 = vmatprep.subr.mxu0 0.0
      %970 = vmatpush1.msra.mxu0 0.0
      %971 = vmatprep.subr.mxu0 0.0
      %972 = vmatpush1.msra.mxu0 0.0
      %973 = vmatprep.subr.mxu0 0.0
      %974 = vmatpush1.msra.mxu0 0.0
      %975 = vmatprep.subr.mxu0 0.0
      %976 = vmatpush1.msra.mxu0 0.0
      %977 = vmatprep.subr.mxu0 0.0
      %978 = vmatpush1.msra.mxu0 0.0
      %979 = vmatprep.subr.mxu0 0.0
      %980 = vmatpush1.msra.mxu0 0.0
      %981 = vmatprep.subr.mxu0 0.0
      %982 = vmatpush1.msra.mxu0 0.0
      %983 = vmatprep.subr.mxu0 0.0
      %984 = vmatpush1.msra.mxu0 0.0
      %985 = vmatprep.subr.mxu0 0.0
      %986 = vmatpush1.msra.mxu0 0.0
      %987 = vmatprep.subr.mxu0 0.0
      %988 = vmatpush1.msra.mxu0 0.0
      %989 = vmatprep.subr.mxu0 0.0
      %990 = vmatpush1.msra.mxu0 0.0
      %991 = vmatprep.subr.mxu0 0.0
      %992 = vmatpush1.msra.mxu0 0.0
      %993 = vmatprep.subr.mxu0 0.0
      %994 = vmatpush1.msra.mxu0 0.0
      %995 = vmatprep.subr.mxu0 0.0
      %996 = vmatpush1.msra.mxu0 0.0
      %997 = vmatprep.subr.mxu0 0.0
      %998 = vmatpush1.msra.mxu0 0.0
      %999 = vmatprep.subr.mxu0 0.0
      %1000 = vmatpush1.msra.mxu0 0.0
      %1001 = vmatprep.mubr.f32.mxu0 0.0
      %1002 = vmatmul.mubr.f32.gmra.mrb[0].mxu0 %v932
      %v1003 = vpop.f32.mrb[0].mxu0
      %v1004 = vadd.f32 %v923, %v1003
      %v1005 = vpop.f32.mrb[0].mxu0
      %1006 = vmatprep.mubr.f32.mxu0 0.0
      %1007 = vmatmul.mubr.f32.gmra.mrb[0].mxu0 %v935
      %v1008 = vpop.f32.mrb[0].mxu0
      %v1009 = vadd.f32 %v928, %v1008
      %v1010 = vpop.f32.mrb[0].mxu0
      %1011 = vdwg.mxu0
      %vm1012 = vcmp.ge.f32.partialorder %v1004, 0.0
      %vm1013 = vcmp.ge.f32.partialorder %v1009, 0.0
      %v1014 = vmul.f32 %v1004, 0.1
      %v1015 = vmul.f32 %v1009, 0.1
      %v1016 = vsel %vm1012, %v1004, %v1014
      %v1017 = vsel %vm1013, %v1009, %v1015
      %1018 = vst.msk [vmem:[%s464] sm:$0xff] %vm492, %v1016
      %1019 = vst.msk [vmem:[%s464 + $0x8] sm:$0xff] %vm492, %v1017
      %v1020 = vld [vmem:[%s7] sm:$0x1]
      %v1021 = vld [vmem:[#allocation2] sm:$0x1]
      %1024 = vrot.lane.b32.xlu0 %v1016, 1
      %v1025 = vpop.permute.xlu0 %1024
      %1026 = vrot.lane.b32.xlu0 %v1017, 1
      %v1027 = vpop.permute.xlu0 %1026
      %vm1030 = vcmask 7168
      %v1031 = vsel %vm1030, 0.0, %v1025
      %v1032 = vsel %vm1030, 0.0, %v1027
      %vm1033 = vcmask 269312
      %v1034 = vsel %vm1033, %v1031, 0.0
      %v1035 = vsel %vm1033, %v1032, 0.0
      %1036 = vrot.lane.b32.xlu0 %v1016, 97
      %v1037 = vpop.permute.xlu0 %1036
      %1038 = vrot.lane.b32.xlu0 %v1017, 97
      %v1039 = vpop.permute.xlu0 %1038
      %v1042 = vsel %vm1030, 0.0, %v1037
      %v1043 = vsel %vm1030, 0.0, %v1039
      %v1044 = vsel %vm1033, %v1042, 0.0
      %v1045 = vsel %vm1033, %v1043, 0.0
      %1048 = vrot.lane.b32.xlu0 %v1044, 32
      %v1049 = vpop.permute.xlu0 %1048
      %1050 = vrot.lane.b32.xlu0 %v1045, 32
      %v1051 = vpop.permute.xlu0 %1050
      %v1054 = vsel %vm859, %v1034, %v1049
      %v1055 = vsel %vm859, %v1035, %v1051
      %1058 = vrot.lane.b32.xlu0 %v1034, 127
      %v1059 = vpop.permute.xlu0 %1058
      %1060 = vrot.lane.b32.xlu0 %v1035, 127
      %v1061 = vpop.permute.xlu0 %1060
      %1064 = vrot.lane.b32.xlu0 %v1044, 31
      %v1065 = vpop.permute.xlu0 %1064
      %1066 = vrot.lane.b32.xlu0 %v1045, 31
      %v1067 = vpop.permute.xlu0 %1066
      %v1070 = vsel %vm859, %v1059, %v1065
      %v1071 = vsel %vm859, %v1061, %v1067
      %1072 = vrot.lane.b32.xlu0 %v1034, 126
      %v1073 = vpop.permute.xlu0 %1072
      %1074 = vrot.lane.b32.xlu0 %v1035, 126
      %v1075 = vpop.permute.xlu0 %1074
      %1078 = vrot.lane.b32.xlu0 %v1044, 30
      %v1079 = vpop.permute.xlu0 %1078
      %1080 = vrot.lane.b32.xlu0 %v1045, 30
      %v1081 = vpop.permute.xlu0 %1080
      %v1084 = vsel %vm859, %v1073, %v1079
      %v1085 = vsel %vm859, %v1075, %v1081
      %1087 = vset.pattern.permute.xlu0 0
      %1088 = vperm.xlu0 %1087, %v1021
      %v1089 = vpop.permute.xlu0 %1088
      %v1091 = vlaneseq
      %v1092 = vshrl.u32 %v1091, 7
      %v1093 = vsub.s32 0, %v1092
      %v1094 = vrot.slane %v1089, %v1093
      %vm1095 = vcmask 392192
      %v1097 = vsel %vm1095, %v1020, 0
      %1099 = vmatprep.subr.mxu0 0.0
      %1100 = vmatpush1.msra.mxu0 %v1054
      %1101 = vmatprep.subr.mxu0 0.0
      %1102 = vmatpush1.msra.mxu0 %v1055
      %1103 = vmatprep.subr.mxu0 0.0
      %1104 = vmatpush1.msra.mxu0 %v1070
      %1105 = vmatprep.subr.mxu0 0.0
      %1106 = vmatpush1.msra.mxu0 %v1071
      %1107 = vmatprep.subr.mxu0 0.0
      %1108 = vmatpush1.msra.mxu0 %v1084
      %1109 = vmatprep.subr.mxu0 0.0
      %1110 = vmatpush1.msra.mxu0 %v1085
      %1111 = vmatprep.subr.mxu0 0.0
      %1112 = vmatpush1.msra.mxu0 0.0
      %1113 = vmatprep.subr.mxu0 0.0
      %1114 = vmatpush1.msra.mxu0 0.0
      %1115 = vmatprep.subr.mxu0 0.0
      %1116 = vmatpush1.msra.mxu0 0.0
      %1117 = vmatprep.subr.mxu0 0.0
      %1118 = vmatpush1.msra.mxu0 0.0
      %1119 = vmatprep.subr.mxu0 0.0
      %1120 = vmatpush1.msra.mxu0 0.0
      %1121 = vmatprep.subr.mxu0 0.0
      %1122 = vmatpush1.msra.mxu0 0.0
      %1123 = vmatprep.subr.mxu0 0.0
      %1124 = vmatpush1.msra.mxu0 0.0
      %1125 = vmatprep.subr.mxu0 0.0
      %1126 = vmatpush1.msra.mxu0 0.0
      %1127 = vmatprep.subr.mxu0 0.0
      %1128 = vmatpush1.msra.mxu0 0.0
      %1129 = vmatprep.subr.mxu0 0.0
      %1130 = vmatpush1.msra.mxu0 0.0
      %1131 = vmatprep.subr.mxu0 0.0
      %1132 = vmatpush1.msra.mxu0 0.0
      %1133 = vmatprep.subr.mxu0 0.0
      %1134 = vmatpush1.msra.mxu0 0.0
      %1135 = vmatprep.subr.mxu0 0.0
      %1136 = vmatpush1.msra.mxu0 0.0
      %1137 = vmatprep.subr.mxu0 0.0
      %1138 = vmatpush1.msra.mxu0 0.0
      %1139 = vmatprep.subr.mxu0 0.0
      %1140 = vmatpush1.msra.mxu0 0.0
      %1141 = vmatprep.subr.mxu0 0.0
      %1142 = vmatpush1.msra.mxu0 0.0
      %1143 = vmatprep.subr.mxu0 0.0
      %1144 = vmatpush1.msra.mxu0 0.0
      %1145 = vmatprep.subr.mxu0 0.0
      %1146 = vmatpush1.msra.mxu0 0.0
      %1147 = vmatprep.subr.mxu0 0.0
      %1148 = vmatpush1.msra.mxu0 0.0
      %1149 = vmatprep.subr.mxu0 0.0
      %1150 = vmatpush1.msra.mxu0 0.0
      %1151 = vmatprep.subr.mxu0 0.0
      %1152 = vmatpush1.msra.mxu0 0.0
      %1153 = vmatprep.subr.mxu0 0.0
      %1154 = vmatpush1.msra.mxu0 0.0
      %1155 = vmatprep.subr.mxu0 0.0
      %1156 = vmatpush1.msra.mxu0 0.0
      %1157 = vmatprep.subr.mxu0 0.0
      %1158 = vmatpush1.msra.mxu0 0.0
      %1159 = vmatprep.subr.mxu0 0.0
      %1160 = vmatpush1.msra.mxu0 0.0
      %1161 = vmatprep.subr.mxu0 0.0
      %1162 = vmatpush1.msra.mxu0 0.0
      %1163 = vmatprep.mubr.f32.mxu0 0.0
      %1164 = vmatmul.mubr.f32.gmra.mrb[0].mxu0 %v1097
      %v1165 = vpop.f32.mrb[0].mxu0
      %v1166 = vadd.f32 %v1094, %v1165
      %v1167 = vpop.f32.mrb[0].mxu0
      %1168 = vdwg.mxu0
      %vm1169 = vcmask 516096
      %1170 = vst.msk [vmem:[%s467] sm:$0x1] %vm1169, %v1166
      %p1171 = scmp.lt.s32.totalorder %s27, 1
      %s1172 = scalar_select %p1171, %s27, 1
      %s1173 = smul.addr %s1172, 8
      %s1174 = scalar_lea.vmem %s10, %s1173
      %p1175 = scmp.lt.s32.totalorder %s27, 1
      %s1176 = scalar_select %p1175, %s27, 1
      %s1177 = smul.addr %s1176, 2
      %s1178 = smul.addr %s1177, 8
      %s1179 = scalar_lea.vmem %s11, %s1178
      %p1180 = scmp.lt.s32.totalorder %s27, 1
      %s1181 = scalar_select %p1180, %s27, 1
      %s1182 = smul.addr %s1181, 2
      %s1183 = smul.addr %s1182, 8
      %s1184 = scalar_lea.vmem %s12, %s1183
      %p1185 = scmp.lt.s32.totalorder %s27, 1
      %s1186 = scalar_select %p1185, %s27, 1
      %s1187 = scalar_lea.vmem %s13, %s1186
      // Predicated region
      $region61: #{msd_forward.3} parent=59 // pred_check
        %p1188 = pneg %p260
      $region62: #{msd_forward.3} parent=59 // pred_check_branch
        %1190 = sbr.rel (%p1188) target = $region64
      $region63: #{msd_forward.3} parent=59 // pred_region
        _
      $region64: #{msd_forward.3} parent=59 // pred_fallthru
        _
      // Predicated region
      $region65: #{msd_forward.3} parent=59 // pred_check
        %p1191 = pneg %p286
      $region66: #{msd_forward.3} parent=59 // pred_check_branch
        %1193 = sbr.rel (%p1191) target = $region68
      $region67: #{msd_forward.3} parent=59 // pred_region
        _
      $region68: #{msd_forward.3} parent=59 // pred_fallthru
        _
      // Predicated region
      $region69: #{msd_forward.3} parent=59 // pred_check
        %p1194 = pneg %p312
      $region70: #{msd_forward.3} parent=59 // pred_check_branch
        %1196 = sbr.rel (%p1194) target = $region72
      $region71: #{msd_forward.3} parent=59 // pred_region
        _
      $region72: #{msd_forward.3} parent=59 // pred_fallthru
        _
      // Predicated region
      $region73: #{msd_forward.3} parent=59 // pred_check
        %p1197 = pneg %p338
      $region74: #{msd_forward.3} parent=59 // pred_check_branch
        %1199 = sbr.rel (%p1197) target = $region76
      $region75: #{msd_forward.3} parent=59 // pred_region
        _
      $region76: #{msd_forward.3} parent=59 // pred_fallthru
        _
    $region60: #{msd_forward.3} parent=5 // pred_fallthru
      _
    %p1200 = scmp.le.s32.totalorder 2, %s22
    // Predicated region
    $region77: #{msd_forward.3} parent=5 // pred_check
      %p1201 = pneg %p1200
    $region78: #{msd_forward.3} parent=5 // pred_check_branch
      %1203 = sbr.rel (%p1201) target = $region80
    $region79: #{msd_forward.3} parent=5 // pred_region
      %s1204 = ssub.s32 %s22, 2
      // Predicated region
      $region81: #{msd_forward.3} parent=79 // pred_check
        %p1205 = pneg %p266
      $region82: #{msd_forward.3} parent=79 // pred_check_branch
        %1207 = sbr.rel (%p1205) target = $region84
      $region83: #{msd_forward.3} parent=79 // pred_region
        %p1208 = scmp.lt.s32.totalorder %s28, 1
        %s1209 = scalar_select %p1208, %s28, 1
        %s1210 = smul.addr %s1209, 8
        %s1211 = scalar_lea.vmem %s10, %s1210
      $region84: #{msd_forward.3} parent=79 // pred_fallthru
        _
      // Predicated region
      $region85: #{msd_forward.3} parent=79 // pred_check
        %p1212 = pneg %p292
      $region86: #{msd_forward.3} parent=79 // pred_check_branch
        %1214 = sbr.rel (%p1212) target = $region88
      $region87: #{msd_forward.3} parent=79 // pred_region
        %p1215 = scmp.lt.s32.totalorder %s28, 1
        %s1216 = scalar_select %p1215, %s28, 1
        %s1217 = smul.addr %s1216, 2
        %s1218 = smul.addr %s1217, 8
        %s1219 = scalar_lea.vmem %s11, %s1218
      $region88: #{msd_forward.3} parent=79 // pred_fallthru
        _
      // Predicated region
      $region89: #{msd_forward.3} parent=79 // pred_check
        %p1220 = pneg %p318
      $region90: #{msd_forward.3} parent=79 // pred_check_branch
        %1222 = sbr.rel (%p1220) target = $region92
      $region91: #{msd_forward.3} parent=79 // pred_region
        %p1223 = scmp.lt.s32.totalorder %s28, 1
        %s1224 = scalar_select %p1223, %s28, 1
        %s1225 = smul.addr %s1224, 2
        %s1226 = smul.addr %s1225, 8
        %s1227 = scalar_lea.vmem %s12, %s1226
      $region92: #{msd_forward.3} parent=79 // pred_fallthru
        _
      // Predicated region
      $region93: #{msd_forward.3} parent=79 // pred_check
        %p1228 = pneg %p344
      $region94: #{msd_forward.3} parent=79 // pred_check_branch
        %1230 = sbr.rel (%p1228) target = $region96
      $region95: #{msd_forward.3} parent=79 // pred_region
        %p1231 = scmp.lt.s32.totalorder %s28, 1
        %s1232 = scalar_select %p1231, %s28, 1
        %s1233 = scalar_lea.vmem %s13, %s1232
      $region96: #{msd_forward.3} parent=79 // pred_fallthru
        _
    $region80: #{msd_forward.3} parent=5 // pred_fallthru
      _
  $region6: #{msd_forward.3} parent=0 // loop_footer
    %s26 = sadd.s32 1, %s22
  $region7: #{msd_forward.3} parent=0 // loop_footer_branch
    %21 = sbr.rel target = $region3
  $region8: #{msd_forward.3} parent=0 // loop_exit
    _

// kernel: msd_forward.4
$region0: #{msd_forward.4}
  #allocation0 [shape = 'u32[]', space=smem, size = 0x4, offset = 0x4, fixed_abs, tag = 'smem constant byte address 0x4 - core index']
  #allocation1 [shape = 'u32[144,128]{1,0:T(1,128)}', space=vmem, size = 0x12000, scoped, tag = 'internal scratch']
  #allocation2 [shape = 'f32[1,1]{1,0:T(1,128)S(1)}', space=vmem, size = 0x200, scoped, tag = 'scoped memory for msd_forward.4']
  %s0 = inlined_call_operand.vmem [shape: f32[2,1,128], index: 0, kind: input, shape index: {}]
  %s1 = inlined_call_operand.vmem [shape: f32[128,66], index: 1, kind: input, shape index: {}]
  %s2 = inlined_call_operand.vmem [shape: f32[8,5], index: 2, kind: input, shape index: {}]
  %s3 = inlined_call_operand.vmem [shape: f32[8,1], index: 3, kind: input, shape index: {}]
  %s4 = inlined_call_operand.vmem [shape: f32[16,40], index: 4, kind: input, shape index: {}]
  %s5 = inlined_call_operand.vmem [shape: f32[16,1], index: 5, kind: input, shape index: {}]
  %s6 = inlined_call_operand.vmem [shape: f32[16,80], index: 6, kind: input, shape index: {}]
  %s7 = inlined_call_operand.vmem [shape: f32[16,1], index: 7, kind: input, shape index: {}]
  %s8 = inlined_call_operand.vmem [shape: f32[1,48], index: 8, kind: input, shape index: {}]
  %s9 = inlined_call_operand.<no memory space> [shape: f32[1,1], index: 9, kind: input, shape index: {}]
  %s10 = inlined_call_operand.hbm [shape: f32[66,34], index: 10, kind: input, shape index: {}]
  %s11 = inlined_call_operand.vmem [shape: f32[2,8,66], index: 11, kind: output, shape index: {0}]
  %s12 = inlined_call_operand.vmem [shape: f32[2,16,34], index: 12, kind: output, shape index: {1}]
  %s13 = inlined_call_operand.vmem [shape: f32[2,16,34], index: 13, kind: output, shape index: {2}]
  %s14 = inlined_call_operand.vmem [shape: f32[2,1,34], index: 14, kind: output, shape index: {3}]
  %15 = xla_tuple %s11, %s12, %s13, %s14
  %s16 = sld [smem:[#allocation0]]
  $region105: #{msd_forward.4} parent=0
    _
  %s18 = ssub.s32 1, %s16
  %s19 = scalar_select 0, %s18, %s16
  %v20 = vstv %s9
  %21 = vst [vmem:[#allocation2] sm:$0x1] %v20
  $region1: #{msd_forward.4} parent=0
    #allocation3 [shape = 'u8[36864]{0}', space=vmem, size = 0x9000, scoped, tag = 'input window, operand 10, single buffered']
    #allocation4 [shape = 's32[2]{0}', space=sflag, size = 0x8, scoped, tag = 'scoped memory for msd_forward.4']
    %22 = vsyncpa [#allocation4], 0
    loop: start=0, step=1, limit=4
    $region2: #{msd_forward.4} parent=1 // loop_pre_header
      _
    $region3: #{msd_forward.4} parent=1 // loop_header
      %s24 = sphi 0, %s28
      %p25 = scmp.ge.s32.totalorder %s24, 4
      %s34 = sphi 0, %s36
      %s37 = sphi 0, %s34
      %s38 = sphi 0, %s37
      %s54 = sphi 0, %s38
      %s58 = sphi 0, %s58
      %s60 = sphi 0, %s58
      %s61 = sphi 0, %s60
      %s75 = sphi 0, %s61
      %s79 = sphi 0, %s79
      %s81 = sphi 0, %s79
      %s82 = sphi 0, %s81
      %s96 = sphi 0, %s82
      %s100 = sphi 0, %s100
      %s102 = sphi 0, %s100
      %s103 = sphi 0, %s102
      %s117 = sphi 0, %s103
      %s121 = sphi 0, %s121
      %s123 = sphi 0, %s121
      %s124 = sphi 0, %s123
      %s138 = sphi 0, %s124
      %s142 = sphi 0, %s142
      %s144 = sphi 0, %s142
      %s145 = sphi 0, %s144
      %s159 = sphi 0, %s145
      %s163 = sphi 0, %s163
      %s165 = sphi 0, %s163
      %s166 = sphi 0, %s165
      %s180 = sphi 0, %s166
      %s184 = sphi 0, %s184
      %s186 = sphi 0, %s184
      %s187 = sphi 0, %s186
      %s201 = sphi 0, %s187
      %s205 = sphi 0, %s205
      %s207 = sphi 0, %s205
      %s208 = sphi 0, %s207
      %s222 = sphi 0, %s208
      %s226 = sphi 0, %s226
      %s228 = sphi 0, %s226
      %s229 = sphi 0, %s228
      %s243 = sphi 0, %s229
      %s247 = sphi 0, %s247
      %s249 = sphi 0, %s247
      %s250 = sphi 0, %s249
      %s264 = sphi 0, %s250
      %s270 = sphi 0, %s272
      %s273 = sphi 0, %s270
      %s274 = sphi 0, %s273
      %s290 = sphi 0, %s274
      %s296 = sphi 0, %s298
      %s299 = sphi 0, %s296
      %s300 = sphi 0, %s299
      %s316 = sphi 0, %s300
      %s322 = sphi 0, %s324
      %s325 = sphi 0, %s322
      %s326 = sphi 0, %s325
      %s342 = sphi 0, %s326
      %s348 = sphi 0, %s350
      %s351 = sphi 0, %s348
      %s352 = sphi 0, %s351
      %s368 = sphi 0, %s352
    $region4: #{msd_forward.4} parent=1 // loop_header_branch
      %27 = sbr.rel (%p25) target = $region8
    $region5: #{msd_forward.4} parent=1 // loop_body
      %s29 = ssub.s32 %s24, 1
      %s30 = ssub.s32 %s24, 2
      %s31 = sadd.s32 %s24, 1
      %s32 = ssub.s32 %s24, %s31
      %p33 = scmp.eq.s32.totalorder %s32, 0
      %s35 = sadd.s32 %s34, 1
      %s36 = scalar_select %p33, %s34, %s35
      %p39 = pneg %p33
      %p40 = scmp.eq.s32.totalorder %s24, 1
      %p41 = por %p39, %p40
      %p42 = scmp.ne.s32.totalorder %s34, %s37
      %p43 = scmp.eq.s32.totalorder %s24, 0
      %p44 = por %p42, %p43
      %p45 = scmp.ne.s32.totalorder %s34, %s37
      %p46 = scmp.eq.s32.totalorder %s29, 1
      %p47 = por %p45, %p46
      %p48 = scmp.ne.s32.totalorder %s37, %s38
      %p49 = scmp.eq.s32.totalorder %s29, 0
      %p50 = por %p48, %p49
      %p51 = scmp.ne.s32.totalorder %s37, %s38
      %p52 = scmp.eq.s32.totalorder %s30, 1
      %p53 = por %p51, %p52
      %p55 = scmp.ne.s32.totalorder %s38, %s54
      %p56 = scmp.eq.s32.totalorder %s30, 0
      %p57 = por %p55, %p56
      %s59 = sadd.s32 %s58, 1
      %p62 = scmp.eq.s32.totalorder %s24, 1
      %p63 = scmp.ne.s32.totalorder %s58, %s60
      %p64 = scmp.eq.s32.totalorder %s24, 0
      %p65 = por %p63, %p64
      %p66 = scmp.ne.s32.totalorder %s58, %s60
      %p67 = scmp.eq.s32.totalorder %s29, 1
      %p68 = por %p66, %p67
      %p69 = scmp.ne.s32.totalorder %s60, %s61
      %p70 = scmp.eq.s32.totalorder %s29, 0
      %p71 = por %p69, %p70
      %p72 = scmp.ne.s32.totalorder %s60, %s61
      %p73 = scmp.eq.s32.totalorder %s30, 1
      %p74 = por %p72, %p73
      %p76 = scmp.ne.s32.totalorder %s61, %s75
      %p77 = scmp.eq.s32.totalorder %s30, 0
      %p78 = por %p76, %p77
      %s80 = sadd.s32 %s79, 1
      %p83 = scmp.eq.s32.totalorder %s24, 1
      %p84 = scmp.ne.s32.totalorder %s79, %s81
      %p85 = scmp.eq.s32.totalorder %s24, 0
      %p86 = por %p84, %p85
      %p87 = scmp.ne.s32.totalorder %s79, %s81
      %p88 = scmp.eq.s32.totalorder %s29, 1
      %p89 = por %p87, %p88
      %p90 = scmp.ne.s32.totalorder %s81, %s82
      %p91 = scmp.eq.s32.totalorder %s29, 0
      %p92 = por %p90, %p91
      %p93 = scmp.ne.s32.totalorder %s81, %s82
      %p94 = scmp.eq.s32.totalorder %s30, 1
      %p95 = por %p93, %p94
      %p97 = scmp.ne.s32.totalorder %s82, %s96
      %p98 = scmp.eq.s32.totalorder %s30, 0
      %p99 = por %p97, %p98
      %s101 = sadd.s32 %s100, 1
      %p104 = scmp.eq.s32.totalorder %s24, 1
      %p105 = scmp.ne.s32.totalorder %s100, %s102
      %p106 = scmp.eq.s32.totalorder %s24, 0
      %p107 = por %p105, %p106
      %p108 = scmp.ne.s32.totalorder %s100, %s102
      %p109 = scmp.eq.s32.totalorder %s29, 1
      %p110 = por %p108, %p109
      %p111 = scmp.ne.s32.totalorder %s102, %s103
      %p112 = scmp.eq.s32.totalorder %s29, 0
      %p113 = por %p111, %p112
      %p114 = scmp.ne.s32.totalorder %s102, %s103
      %p115 = scmp.eq.s32.totalorder %s30, 1
      %p116 = por %p114, %p115
      %p118 = scmp.ne.s32.totalorder %s103, %s117
      %p119 = scmp.eq.s32.totalorder %s30, 0
      %p120 = por %p118, %p119
      %s122 = sadd.s32 %s121, 1
      %p125 = scmp.eq.s32.totalorder %s24, 1
      %p126 = scmp.ne.s32.totalorder %s121, %s123
      %p127 = scmp.eq.s32.totalorder %s24, 0
      %p128 = por %p126, %p127
      %p129 = scmp.ne.s32.totalorder %s121, %s123
      %p130 = scmp.eq.s32.totalorder %s29, 1
      %p131 = por %p129, %p130
      %p132 = scmp.ne.s32.totalorder %s123, %s124
      %p133 = scmp.eq.s32.totalorder %s29, 0
      %p134 = por %p132, %p133
      %p135 = scmp.ne.s32.totalorder %s123, %s124
      %p136 = scmp.eq.s32.totalorder %s30, 1
      %p137 = por %p135, %p136
      %p139 = scmp.ne.s32.totalorder %s124, %s138
      %p140 = scmp.eq.s32.totalorder %s30, 0
      %p141 = por %p139, %p140
      %s143 = sadd.s32 %s142, 1
      %p146 = scmp.eq.s32.totalorder %s24, 1
      %p147 = scmp.ne.s32.totalorder %s142, %s144
      %p148 = scmp.eq.s32.totalorder %s24, 0
      %p149 = por %p147, %p148
      %p150 = scmp.ne.s32.totalorder %s142, %s144
      %p151 = scmp.eq.s32.totalorder %s29, 1
      %p152 = por %p150, %p151
      %p153 = scmp.ne.s32.totalorder %s144, %s145
      %p154 = scmp.eq.s32.totalorder %s29, 0
      %p155 = por %p153, %p154
      %p156 = scmp.ne.s32.totalorder %s144, %s145
      %p157 = scmp.eq.s32.totalorder %s30, 1
      %p158 = por %p156, %p157
      %p160 = scmp.ne.s32.totalorder %s145, %s159
      %p161 = scmp.eq.s32.totalorder %s30, 0
      %p162 = por %p160, %p161
      %s164 = sadd.s32 %s163, 1
      %p167 = scmp.eq.s32.totalorder %s24, 1
      %p168 = scmp.ne.s32.totalorder %s163, %s165
      %p169 = scmp.eq.s32.totalorder %s24, 0
      %p170 = por %p168, %p169
      %p171 = scmp.ne.s32.totalorder %s163, %s165
      %p172 = scmp.eq.s32.totalorder %s29, 1
      %p173 = por %p171, %p172
      %p174 = scmp.ne.s32.totalorder %s165, %s166
      %p175 = scmp.eq.s32.totalorder %s29, 0
      %p176 = por %p174, %p175
      %p177 = scmp.ne.s32.totalorder %s165, %s166
      %p178 = scmp.eq.s32.totalorder %s30, 1
      %p179 = por %p177, %p178
      %p181 = scmp.ne.s32.totalorder %s166, %s180
      %p182 = scmp.eq.s32.totalorder %s30, 0
      %p183 = por %p181, %p182
      %s185 = sadd.s32 %s184, 1
      %p188 = scmp.eq.s32.totalorder %s24, 1
      %p189 = scmp.ne.s32.totalorder %s184, %s186
      %p190 = scmp.eq.s32.totalorder %s24, 0
      %p191 = por %p189, %p190
      %p192 = scmp.ne.s32.totalorder %s184, %s186
      %p193 = scmp.eq.s32.totalorder %s29, 1
      %p194 = por %p192, %p193
      %p195 = scmp.ne.s32.totalorder %s186, %s187
      %p196 = scmp.eq.s32.totalorder %s29, 0
      %p197 = por %p195, %p196
      %p198 = scmp.ne.s32.totalorder %s186, %s187
      %p199 = scmp.eq.s32.totalorder %s30, 1
      %p200 = por %p198, %p199
      %p202 = scmp.ne.s32.totalorder %s187, %s201
      %p203 = scmp.eq.s32.totalorder %s30, 0
      %p204 = por %p202, %p203
      %s206 = sadd.s32 %s205, 1
      %p209 = scmp.eq.s32.totalorder %s24, 1
      %p210 = scmp.ne.s32.totalorder %s205, %s207
      %p211 = scmp.eq.s32.totalorder %s24, 0
      %p212 = por %p210, %p211
      %p213 = scmp.ne.s32.totalorder %s205, %s207
      %p214 = scmp.eq.s32.totalorder %s29, 1
      %p215 = por %p213, %p214
      %p216 = scmp.ne.s32.totalorder %s207, %s208
      %p217 = scmp.eq.s32.totalorder %s29, 0
      %p218 = por %p216, %p217
      %p219 = scmp.ne.s32.totalorder %s207, %s208
      %p220 = scmp.eq.s32.totalorder %s30, 1
      %p221 = por %p219, %p220
      %p223 = scmp.ne.s32.totalorder %s208, %s222
      %p224 = scmp.eq.s32.totalorder %s30, 0
      %p225 = por %p223, %p224
      %s227 = sadd.s32 %s226, 1
      %p230 = scmp.eq.s32.totalorder %s24, 1
      %p231 = scmp.ne.s32.totalorder %s226, %s228
      %p232 = scmp.eq.s32.totalorder %s24, 0
      %p233 = por %p231, %p232
      %p234 = scmp.ne.s32.totalorder %s226, %s228
      %p235 = scmp.eq.s32.totalorder %s29, 1
      %p236 = por %p234, %p235
      %p237 = scmp.ne.s32.totalorder %s228, %s229
      %p238 = scmp.eq.s32.totalorder %s29, 0
      %p239 = por %p237, %p238
      %p240 = scmp.ne.s32.totalorder %s228, %s229
      %p241 = scmp.eq.s32.totalorder %s30, 1
      %p242 = por %p240, %p241
      %p244 = scmp.ne.s32.totalorder %s229, %s243
      %p245 = scmp.eq.s32.totalorder %s30, 0
      %p246 = por %p244, %p245
      %s248 = sadd.s32 %s247, 1
      %p251 = scmp.eq.s32.totalorder %s24, 1
      %p252 = scmp.ne.s32.totalorder %s247, %s249
      %p253 = scmp.eq.s32.totalorder %s24, 0
      %p254 = por %p252, %p253
      %p255 = scmp.ne.s32.totalorder %s247, %s249
      %p256 = scmp.eq.s32.totalorder %s29, 1
      %p257 = por %p255, %p256
      %p258 = scmp.ne.s32.totalorder %s249, %s250
      %p259 = scmp.eq.s32.totalorder %s29, 0
      %p260 = por %p258, %p259
      %p261 = scmp.ne.s32.totalorder %s249, %s250
      %p262 = scmp.eq.s32.totalorder %s30, 1
      %p263 = por %p261, %p262
      %p265 = scmp.ne.s32.totalorder %s250, %s264
      %p266 = scmp.eq.s32.totalorder %s30, 0
      %p267 = por %p265, %p266
      %s268 = ssub.s32 %s24, %s31
      %p269 = scmp.eq.s32.totalorder %s268, 0
      %s271 = sadd.s32 %s270, 1
      %s272 = scalar_select %p269, %s270, %s271
      %p275 = pneg %p269
      %p276 = scmp.eq.s32.totalorder %s24, 1
      %p277 = por %p275, %p276
      %p278 = scmp.ne.s32.totalorder %s270, %s273
      %p279 = scmp.eq.s32.totalorder %s24, 0
      %p280 = por %p278, %p279
      %p281 = scmp.ne.s32.totalorder %s270, %s273
      %p282 = scmp.eq.s32.totalorder %s29, 1
      %p283 = por %p281, %p282
      %p284 = scmp.ne.s32.totalorder %s273, %s274
      %p285 = scmp.eq.s32.totalorder %s29, 0
      %p286 = por %p284, %p285
      %p287 = scmp.ne.s32.totalorder %s273, %s274
      %p288 = scmp.eq.s32.totalorder %s30, 1
      %p289 = por %p287, %p288
      %p291 = scmp.ne.s32.totalorder %s274, %s290
      %p292 = scmp.eq.s32.totalorder %s30, 0
      %p293 = por %p291, %p292
      %s294 = ssub.s32 %s24, %s31
      %p295 = scmp.eq.s32.totalorder %s294, 0
      %s297 = sadd.s32 %s296, 1
      %s298 = scalar_select %p295, %s296, %s297
      %p301 = pneg %p295
      %p302 = scmp.eq.s32.totalorder %s24, 1
      %p303 = por %p301, %p302
      %p304 = scmp.ne.s32.totalorder %s296, %s299
      %p305 = scmp.eq.s32.totalorder %s24, 0
      %p306 = por %p304, %p305
      %p307 = scmp.ne.s32.totalorder %s296, %s299
      %p308 = scmp.eq.s32.totalorder %s29, 1
      %p309 = por %p307, %p308
      %p310 = scmp.ne.s32.totalorder %s299, %s300
      %p311 = scmp.eq.s32.totalorder %s29, 0
      %p312 = por %p310, %p311
      %p313 = scmp.ne.s32.totalorder %s299, %s300
      %p314 = scmp.eq.s32.totalorder %s30, 1
      %p315 = por %p313, %p314
      %p317 = scmp.ne.s32.totalorder %s300, %s316
      %p318 = scmp.eq.s32.totalorder %s30, 0
      %p319 = por %p317, %p318
      %s320 = ssub.s32 %s24, %s31
      %p321 = scmp.eq.s32.totalorder %s320, 0
      %s323 = sadd.s32 %s322, 1
      %s324 = scalar_select %p321, %s322, %s323
      %p327 = pneg %p321
      %p328 = scmp.eq.s32.totalorder %s24, 1
      %p329 = por %p327, %p328
      %p330 = scmp.ne.s32.totalorder %s322, %s325
      %p331 = scmp.eq.s32.totalorder %s24, 0
      %p332 = por %p330, %p331
      %p333 = scmp.ne.s32.totalorder %s322, %s325
      %p334 = scmp.eq.s32.totalorder %s29, 1
      %p335 = por %p333, %p334
      %p336 = scmp.ne.s32.totalorder %s325, %s326
      %p337 = scmp.eq.s32.totalorder %s29, 0
      %p338 = por %p336, %p337
      %p339 = scmp.ne.s32.totalorder %s325, %s326
      %p340 = scmp.eq.s32.totalorder %s30, 1
      %p341 = por %p339, %p340
      %p343 = scmp.ne.s32.totalorder %s326, %s342
      %p344 = scmp.eq.s32.totalorder %s30, 0
      %p345 = por %p343, %p344
      %s346 = ssub.s32 %s24, %s31
      %p347 = scmp.eq.s32.totalorder %s346, 0
      %s349 = sadd.s32 %s348, 1
      %s350 = scalar_select %p347, %s348, %s349
      %p353 = pneg %p347
      %p354 = scmp.eq.s32.totalorder %s24, 1
      %p355 = por %p353, %p354
      %p356 = scmp.ne.s32.totalorder %s348, %s351
      %p357 = scmp.eq.s32.totalorder %s24, 0
      %p358 = por %p356, %p357
      %p359 = scmp.ne.s32.totalorder %s348, %s351
      %p360 = scmp.eq.s32.totalorder %s29, 1
      %p361 = por %p359, %p360
      %p362 = scmp.ne.s32.totalorder %s351, %s352
      %p363 = scmp.eq.s32.totalorder %s29, 0
      %p364 = por %p362, %p363
      %p365 = scmp.ne.s32.totalorder %s351, %s352
      %p366 = scmp.eq.s32.totalorder %s30, 1
      %p367 = por %p365, %p366
      %p369 = scmp.ne.s32.totalorder %s352, %s368
      %p370 = scmp.eq.s32.totalorder %s30, 0
      %p371 = por %p369, %p370
      %p372 = scmp.le.s32.totalorder 1, %s24
      %p373 = scmp.lt.s32.totalorder %s24, 3
      %p374 = pnand %p372, %p373
      %p375 = pneg %p374
      // Predicated region
      $region9: #{msd_forward.4} parent=5 // pred_check
        _
      $region10: #{msd_forward.4} parent=5 // pred_check_branch
        %377 = sbr.rel (%p374) target = $region12
      $region11: #{msd_forward.4} parent=5 // pred_region
        %s378 = ssub.s32 %s24, 1
        // Predicated region
        $region13: #{msd_forward.4} parent=11 // pred_check
          %p379 = pneg %p71
        $region14: #{msd_forward.4} parent=11 // pred_check_branch
          %381 = sbr.rel (%p379) target = $region16
        $region15: #{msd_forward.4} parent=11 // pred_region
          _
        $region16: #{msd_forward.4} parent=11 // pred_fallthru
          _
        // Predicated region
        $region17: #{msd_forward.4} parent=11 // pred_check
          %p382 = pneg %p92
        $region18: #{msd_forward.4} parent=11 // pred_check_branch
          %384 = sbr.rel (%p382) target = $region20
        $region19: #{msd_forward.4} parent=11 // pred_region
          _
        $region20: #{msd_forward.4} parent=11 // pred_fallthru
          _
        // Predicated region
        $region21: #{msd_forward.4} parent=11 // pred_check
          %p385 = pneg %p113
        $region22: #{msd_forward.4} parent=11 // pred_check_branch
          %387 = sbr.rel (%p385) target = $region24
        $region23: #{msd_forward.4} parent=11 // pred_region
          _
        $region24: #{msd_forward.4} parent=11 // pred_fallthru
          _
        // Predicated region
        $region25: #{msd_forward.4} parent=11 // pred_check
          %p388 = pneg %p134
        $region26: #{msd_forward.4} parent=11 // pred_check_branch
          %390 = sbr.rel (%p388) target = $region28
        $region27: #{msd_forward.4} parent=11 // pred_region
          _
        $region28: #{msd_forward.4} parent=11 // pred_fallthru
          _
        // Predicated region
        $region29: #{msd_forward.4} parent=11 // pred_check
          %p391 = pneg %p155
        $region30: #{msd_forward.4} parent=11 // pred_check_branch
          %393 = sbr.rel (%p391) target = $region32
        $region31: #{msd_forward.4} parent=11 // pred_region
          _
        $region32: #{msd_forward.4} parent=11 // pred_fallthru
          _
        // Predicated region
        $region33: #{msd_forward.4} parent=11 // pred_check
          %p394 = pneg %p176
        $region34: #{msd_forward.4} parent=11 // pred_check_branch
          %396 = sbr.rel (%p394) target = $region36
        $region35: #{msd_forward.4} parent=11 // pred_region
          _
        $region36: #{msd_forward.4} parent=11 // pred_fallthru
          _
        // Predicated region
        $region37: #{msd_forward.4} parent=11 // pred_check
          %p397 = pneg %p197
        $region38: #{msd_forward.4} parent=11 // pred_check_branch
          %399 = sbr.rel (%p397) target = $region40
        $region39: #{msd_forward.4} parent=11 // pred_region
          _
        $region40: #{msd_forward.4} parent=11 // pred_fallthru
          _
        // Predicated region
        $region41: #{msd_forward.4} parent=11 // pred_check
          %p400 = pneg %p218
        $region42: #{msd_forward.4} parent=11 // pred_check_branch
          %402 = sbr.rel (%p400) target = $region44
        $region43: #{msd_forward.4} parent=11 // pred_region
          _
        $region44: #{msd_forward.4} parent=11 // pred_fallthru
          _
        // Predicated region
        $region45: #{msd_forward.4} parent=11 // pred_check
          %p403 = pneg %p239
        $region46: #{msd_forward.4} parent=11 // pred_check_branch
          %405 = sbr.rel (%p403) target = $region48
        $region47: #{msd_forward.4} parent=11 // pred_region
          _
        $region48: #{msd_forward.4} parent=11 // pred_fallthru
          _
        // Predicated region
        $region49: #{msd_forward.4} parent=11 // pred_check
          %p406 = pneg %p260
        $region50: #{msd_forward.4} parent=11 // pred_check_branch
          %408 = sbr.rel (%p406) target = $region52
        $region51: #{msd_forward.4} parent=11 // pred_region
          %s410 = ssub.s32 1152, 1152
          %411 = vsyncadd [#allocation4], %s410
          %s412 = sshll.u32 [#allocation3], 4
          %s413 = int_to_ptr.vmem [resolvable:$true] %s412
          %418 = dma.hbm_to_vmem [thread:$0]  %s10, 1152, %s413, [#allocation4], 128, 128, 8
        $region52: #{msd_forward.4} parent=11 // pred_fallthru
          _
      $region12: #{msd_forward.4} parent=5 // pred_fallthru
        _
      %p419 = scmp.lt.s32.totalorder %s24, 2
      // Predicated region
      $region53: #{msd_forward.4} parent=5 // pred_check
        %p420 = pneg %p419
      $region54: #{msd_forward.4} parent=5 // pred_check_branch
        %422 = sbr.rel (%p420) target = $region56
      $region55: #{msd_forward.4} parent=5 // pred_region
        // Predicated region
        $region57: #{msd_forward.4} parent=55 // pred_check
          %p423 = pneg %p44
        $region58: #{msd_forward.4} parent=55 // pred_check_branch
          %425 = sbr.rel (%p423) target = $region60
        $region59: #{msd_forward.4} parent=55 // pred_region
          %p426 = scmp.lt.s32.totalorder %s24, 1
          %s427 = scalar_select %p426, %s24, 1
          %s428 = scalar_lea.vmem %s0, %s427
        $region60: #{msd_forward.4} parent=55 // pred_fallthru
          _
      $region56: #{msd_forward.4} parent=5 // pred_fallthru
        _
      %p429 = scmp.le.s32.totalorder 1, %s24
      %p430 = scmp.lt.s32.totalorder %s24, 3
      %p431 = pnand %p429, %p430
      %p432 = pneg %p431
      // Predicated region
      $region61: #{msd_forward.4} parent=5 // pred_check
        _
      $region62: #{msd_forward.4} parent=5 // pred_check_branch
        %434 = sbr.rel (%p431) target = $region64
      $region63: #{msd_forward.4} parent=5 // pred_region
        %s435 = ssub.s32 %s24, 1
        // Predicated region
        $region65: #{msd_forward.4} parent=63 // pred_check
          %p436 = pneg %p260
        $region66: #{msd_forward.4} parent=63 // pred_check_branch
          %438 = sbr.rel (%p436) target = $region68
        $region67: #{msd_forward.4} parent=63 // pred_region
          %439 = dma.done [#allocation4], 1152
        $region68: #{msd_forward.4} parent=63 // pred_fallthru
          _
        %p440 = scmp.lt.s32.totalorder %s29, 1
        %s441 = scalar_select %p440, %s29, 1
        %s442 = scalar_lea.vmem %s0, %s441
        %p443 = pneg %p50
        %p444 = pneg %p47
        %p445 = pneg %p71
        %p446 = pneg %p68
        %p447 = pneg %p92
        %p448 = pneg %p89
        %p449 = pneg %p113
        %p450 = pneg %p110
        %p451 = pneg %p134
        %p452 = pneg %p131
        %p453 = pneg %p155
        %p454 = pneg %p152
        %p455 = pneg %p176
        %p456 = pneg %p173
        %p457 = pneg %p197
        %p458 = pneg %p194
        %p459 = pneg %p218
        %p460 = pneg %p215
        %p461 = pneg %p239
        %p462 = pneg %p236
        %p463 = pneg %p260
        %p464 = pneg %p257
        %p465 = pneg %p286
        %p466 = pneg %p283
        %p467 = scmp.lt.s32.totalorder %s29, 1
        %s468 = scalar_select %p467, %s29, 1
        %s469 = smul.addr %s468, 8
        %s470 = scalar_lea.vmem %s11, %s469
        %p471 = pneg %p312
        %p472 = pneg %p309
        %p473 = scmp.lt.s32.totalorder %s29, 1
        %s474 = scalar_select %p473, %s29, 1
        %s475 = smul.addr %s474, 2
        %s476 = smul.addr %s475, 8
        %s477 = scalar_lea.vmem %s12, %s476
        %p478 = pneg %p338
        %p479 = pneg %p335
        %p480 = scmp.lt.s32.totalorder %s29, 1
        %s481 = scalar_select %p480, %s29, 1
        %s482 = smul.addr %s481, 2
        %s483 = smul.addr %s482, 8
        %s484 = scalar_lea.vmem %s13, %s483
        %p485 = pneg %p364
        %p486 = pneg %p361
        %p487 = scmp.lt.s32.totalorder %s29, 1
        %s488 = scalar_select %p487, %s29, 1
        %s489 = scalar_lea.vmem %s14, %s488
        %p490 = scmp.lt.s32.totalorder %s29, 1
        %s491 = scalar_select %p490, %s29, 1
        %s492 = scalar_lea.vmem %s0, %s491
        %p493 = scmp.lt.s32.totalorder %s29, 1
        %s494 = scalar_select %p493, %s29, 1
        %s495 = smul.addr %s494, 8
        %s496 = scalar_lea.vmem %s11, %s495
        %p497 = scmp.lt.s32.totalorder %s29, 1
        %s498 = scalar_select %p497, %s29, 1
        %s499 = smul.addr %s498, 2
        %s500 = smul.addr %s499, 8
        %s501 = scalar_lea.vmem %s12, %s500
        %p502 = scmp.lt.s32.totalorder %s29, 1
        %s503 = scalar_select %p502, %s29, 1
        %s504 = smul.addr %s503, 2
        %s505 = smul.addr %s504, 8
        %s506 = scalar_lea.vmem %s13, %s505
        %p507 = scmp.lt.s32.totalorder %s29, 1
        %s508 = scalar_select %p507, %s29, 1
        %s509 = scalar_lea.vmem %s14, %s508
        %v510 = vld [vmem:[%s492] sm:$0x1]
        %v511 = vld [vmem:[%s1] sm:$0xff]
        %v512 = vld [vmem:[%s1 + $0x8] sm:$0xff]
        %v513 = vld [vmem:[%s1 + $0x10] sm:$0xff]
        %v514 = vld [vmem:[%s1 + $0x18] sm:$0xff]
        %v515 = vld [vmem:[%s1 + $0x20] sm:$0xff]
        %v516 = vld [vmem:[%s1 + $0x28] sm:$0xff]
        %v517 = vld [vmem:[%s1 + $0x30] sm:$0xff]
        %v518 = vld [vmem:[%s1 + $0x38] sm:$0xff]
        %v519 = vld [vmem:[%s1 + $0x40] sm:$0xff]
        %v520 = vld [vmem:[%s1 + $0x48] sm:$0xff]
        %v521 = vld [vmem:[%s1 + $0x50] sm:$0xff]
        %v522 = vld [vmem:[%s1 + $0x58] sm:$0xff]
        %v523 = vld [vmem:[%s1 + $0x60] sm:$0xff]
        %v524 = vld [vmem:[%s1 + $0x68] sm:$0xff]
        %v525 = vld [vmem:[%s1 + $0x70] sm:$0xff]
        %v526 = vld [vmem:[%s1 + $0x78] sm:$0xff]
        %527 = vmatprep.subr.mxu0 0.0
        %528 = vmatpush1.msra.mxu0 %v511
        %529 = vmatprep.subr.mxu0 0.0
        %530 = vmatpush1.msra.mxu0 %v512
        %531 = vmatprep.subr.mxu0 0.0
        %532 = vmatpush1.msra.mxu0 %v513
        %533 = vmatprep.subr.mxu0 0.0
        %534 = vmatpush1.msra.mxu0 %v514
        %535 = vmatprep.subr.mxu0 0.0
        %536 = vmatpush1.msra.mxu0 %v515
        %537 = vmatprep.subr.mxu0 0.0
        %538 = vmatpush1.msra.mxu0 %v516
        %539 = vmatprep.subr.mxu0 0.0
        %540 = vmatpush1.msra.mxu0 %v517
        %541 = vmatprep.subr.mxu0 0.0
        %542 = vmatpush1.msra.mxu0 %v518
        %543 = vmatprep.subr.mxu0 0.0
        %544 = vmatpush1.msra.mxu0 %v519
        %545 = vmatprep.subr.mxu0 0.0
        %546 = vmatpush1.msra.mxu0 %v520
        %547 = vmatprep.subr.mxu0 0.0
        %548 = vmatpush1.msra.mxu0 %v521
        %549 = vmatprep.subr.mxu0 0.0
        %550 = vmatpush1.msra.mxu0 %v522
        %551 = vmatprep.subr.mxu0 0.0
        %552 = vmatpush1.msra.mxu0 %v523
        %553 = vmatprep.subr.mxu0 0.0
        %554 = vmatpush1.msra.mxu0 %v524
        %555 = vmatprep.subr.mxu0 0.0
        %556 = vmatpush1.msra.mxu0 %v525
        %557 = vmatprep.subr.mxu0 0.0
        %558 = vmatpush1.msra.mxu0 %v526
        %559 = vmatprep.subr.mxu0 0.0
        %560 = vmatpush1.msra.mxu0 0.0
        %561 = vmatprep.subr.mxu0 0.0
        %562 = vmatpush1.msra.mxu0 0.0
        %563 = vmatprep.subr.mxu0 0.0
        %564 = vmatpush1.msra.mxu0 0.0
        %565 = vmatprep.subr.mxu0 0.0
        %566 = vmatpush1.msra.mxu0 0.0
        %567 = vmatprep.subr.mxu0 0.0
        %568 = vmatpush1.msra.mxu0 0.0
        %569 = vmatprep.subr.mxu0 0.0
        %570 = vmatpush1.msra.mxu0 0.0
        %571 = vmatprep.subr.mxu0 0.0
        %572 = vmatpush1.msra.mxu0 0.0
        %573 = vmatprep.subr.mxu0 0.0
        %574 = vmatpush1.msra.mxu0 0.0
        %575 = vmatprep.subr.mxu0 0.0
        %576 = vmatpush1.msra.mxu0 0.0
        %577 = vmatprep.subr.mxu0 0.0
        %578 = vmatpush1.msra.mxu0 0.0
        %579 = vmatprep.subr.mxu0 0.0
        %580 = vmatpush1.msra.mxu0 0.0
        %581 = vmatprep.subr.mxu0 0.0
        %582 = vmatpush1.msra.mxu0 0.0
        %583 = vmatprep.subr.mxu0 0.0
        %584 = vmatpush1.msra.mxu0 0.0
        %585 = vmatprep.subr.mxu0 0.0
        %586 = vmatpush1.msra.mxu0 0.0
        %587 = vmatprep.subr.mxu0 0.0
        %588 = vmatpush1.msra.mxu0 0.0
        %589 = vmatprep.subr.mxu0 0.0
        %590 = vmatpush1.msra.mxu0 0.0
        %591 = vmatprep.mubr.f32.mxu0 0.0
        %592 = vmatmul.mubr.f32.gmra.mrb[0].mxu0 %v510
        %v593 = vpop.f32.mrb[0].mxu0
        %v594 = vadd.f32 0.0, %v593
        %v595 = vpop.f32.mrb[0].mxu0
        %596 = vdwg.mxu0
        %v597 = vmul.f32 %v594, 0.25
        %v598 = vld [vmem:[%s2] sm:$0xff]
        %v599 = vld [vmem:[%s3] sm:$0xff]
        %601 = vrot.lane.b32.xlu0 %v597, 2
        %v602 = vpop.permute.xlu0 %601
        %vm604 = vcmask 15360
        %v605 = vsel %vm604, 0.0, %v602
        %vm606 = vcmask 285696
        %v607 = vsel %vm606, %v605, 0.0
        %608 = vrot.lane.b32.xlu0 %v597, 97
        %v609 = vpop.permute.xlu0 %608
        %v611 = vsel %vm604, 0.0, %v609
        %v612 = vsel %vm606, %v611, 0.0
        %614 = vrot.lane.b32.xlu0 %v612, 33
        %v615 = vpop.permute.xlu0 %614
        %vm617 = vcmask 269312
        %v618 = vsel %vm617, %v607, %v615
        %620 = vset.pattern.permute.xlu0 0
        %621 = vperm.xlu0 %620, %v598
        %v622 = vpop.permute.xlu0 %621
        %v624 = vlaneseq
        %v625 = vshrl.u32 %v624, 7
        %v626 = vsub.s32 0, %v625
        %v627 = vrot.slane %v618, %v626
        %v628 = vmul.f32 %v622, %v627
        %v629 = vadd.f32 %v628, 0.0
        %631 = vrot.lane.b32.xlu0 %v607, 127
        %v632 = vpop.permute.xlu0 %631
        %634 = vrot.lane.b32.xlu0 %v612, 32
        %v635 = vpop.permute.xlu0 %634
        %v637 = vsel %vm617, %v632, %v635
        %638 = vset.pattern.permute.xlu0 1
        %639 = vperm.xlu0 %638, %v598
        %v640 = vpop.permute.xlu0 %639
        %v642 = vlaneseq
        %v643 = vshrl.u32 %v642, 7
        %v644 = vsub.s32 0, %v643
        %v645 = vrot.slane %v637, %v644
        %v646 = vmul.f32 %v640, %v645
        %v647 = vadd.f32 %v629, %v646
        %648 = vrot.lane.b32.xlu0 %v607, 126
        %v649 = vpop.permute.xlu0 %648
        %651 = vrot.lane.b32.xlu0 %v612, 31
        %v652 = vpop.permute.xlu0 %651
        %v654 = vsel %vm617, %v649, %v652
        %655 = vset.pattern.permute.xlu0 2
        %656 = vperm.xlu0 %655, %v598
        %v657 = vpop.permute.xlu0 %656
        %v659 = vlaneseq
        %v660 = vshrl.u32 %v659, 7
        %v661 = vsub.s32 0, %v660
        %v662 = vrot.slane %v654, %v661
        %v663 = vmul.f32 %v657, %v662
        %v664 = vadd.f32 %v647, %v663
        %665 = vrot.lane.b32.xlu0 %v607, 125
        %v666 = vpop.permute.xlu0 %665
        %668 = vrot.lane.b32.xlu0 %v612, 30
        %v669 = vpop.permute.xlu0 %668
        %v671 = vsel %vm617, %v666, %v669
        %672 = vset.pattern.permute.xlu0 3
        %673 = vperm.xlu0 %672, %v598
        %v674 = vpop.permute.xlu0 %673
        %v676 = vlaneseq
        %v677 = vshrl.u32 %v676, 7
        %v678 = vsub.s32 0, %v677
        %v679 = vrot.slane %v671, %v678
        %v680 = vmul.f32 %v674, %v679
        %v681 = vadd.f32 %v664, %v680
        %682 = vrot.lane.b32.xlu0 %v607, 124
        %v683 = vpop.permute.xlu0 %682
        %685 = vrot.lane.b32.xlu0 %v612, 29
        %v686 = vpop.permute.xlu0 %685
        %v688 = vsel %vm617, %v683, %v686
        %689 = vset.pattern.permute.xlu0 4
        %690 = vperm.xlu0 %689, %v598
        %v691 = vpop.permute.xlu0 %690
        %v693 = vlaneseq
        %v694 = vshrl.u32 %v693, 7
        %v695 = vsub.s32 0, %v694
        %v696 = vrot.slane %v688, %v695
        %v697 = vmul.f32 %v691, %v696
        %v698 = vadd.f32 %v681, %v697
        %700 = vset.pattern.permute.xlu0 0
        %701 = vperm.xlu0 %700, %v599
        %v702 = vpop.permute.xlu0 %701
        %v704 = vadd.f32 %v698, %v702
        %vm705 = vcmp.ge.f32.partialorder %v704, 0.0
        %v706 = vmul.f32 %v704, 0.1
        %v707 = vsel %vm705, %v704, %v706
        %vm708 = vcmask 539648
        %709 = vst.msk [vmem:[%s496] sm:$0xff] %vm708, %v707
        %v710 = vld [vmem:[#allocation3] sm:$0xff]
        %v711 = vld [vmem:[#allocation3 + $0x8] sm:$0xff]
        %v712 = vld [vmem:[#allocation3 + $0x10] sm:$0xff]
        %v713 = vld [vmem:[#allocation3 + $0x18] sm:$0xff]
        %v714 = vld [vmem:[#allocation3 + $0x20] sm:$0xff]
        %v715 = vld [vmem:[#allocation3 + $0x28] sm:$0xff]
        %v716 = vld [vmem:[#allocation3 + $0x30] sm:$0xff]
        %v717 = vld [vmem:[#allocation3 + $0x38] sm:$0xff]
        %v718 = vld [vmem:[#allocation3 + $0x40] sm:$0x3]
        %v719 = vld [vmem:[%s4] sm:$0xff]
        %v720 = vld [vmem:[%s4 + $0x8] sm:$0xff]
        %v721 = vld [vmem:[%s5] sm:$0xff]
        %v722 = vld [vmem:[%s5 + $0x8] sm:$0xff]
        %724 = vrot.lane.b32.xlu0 %v707, 2
        %v725 = vpop.permute.xlu0 %724
        %v727 = vsel %vm604, 0.0, %v725
        %v728 = vsel %vm606, %v727, 0.0
        %729 = vrot.lane.b32.xlu0 %v707, 97
        %v730 = vpop.permute.xlu0 %729
        %v732 = vsel %vm604, 0.0, %v730
        %v733 = vsel %vm606, %v732, 0.0
        %735 = vrot.lane.b32.xlu0 %v733, 33
        %v736 = vpop.permute.xlu0 %735
        %v738 = vsel %vm617, %v728, %v736
        %740 = vrot.lane.b32.xlu0 %v728, 127
        %v741 = vpop.permute.xlu0 %740
        %743 = vrot.lane.b32.xlu0 %v733, 32
        %v744 = vpop.permute.xlu0 %743
        %v746 = vsel %vm617, %v741, %v744
        %747 = vrot.lane.b32.xlu0 %v728, 126
        %v748 = vpop.permute.xlu0 %747
        %750 = vrot.lane.b32.xlu0 %v733, 31
        %v751 = vpop.permute.xlu0 %750
        %v753 = vsel %vm617, %v748, %v751
        %754 = vrot.lane.b32.xlu0 %v728, 125
        %v755 = vpop.permute.xlu0 %754
        %757 = vrot.lane.b32.xlu0 %v733, 30
        %v758 = vpop.permute.xlu0 %757
        %v760 = vsel %vm617, %v755, %v758
        %761 = vrot.lane.b32.xlu0 %v728, 124
        %v762 = vpop.permute.xlu0 %761
        %764 = vrot.lane.b32.xlu0 %v733, 29
        %v765 = vpop.permute.xlu0 %764
        %v767 = vsel %vm617, %v762, %v765
        %vm768 = vcmask 326656
        %v770 = vsel %vm768, %v719, 0
        %v773 = vsel %vm768, %v720, 0
        %775 = vmatprep.subr.mxu0 0.0
        %776 = vmatpush1.msra.mxu0 %v738
        %777 = vmatprep.subr.mxu0 0.0
        %778 = vmatpush1.msra.mxu0 %v746
        %779 = vmatprep.subr.mxu0 0.0
        %780 = vmatpush1.msra.mxu0 %v753
        %781 = vmatprep.subr.mxu0 0.0
        %782 = vmatpush1.msra.mxu0 %v760
        %783 = vmatprep.subr.mxu0 0.0
        %784 = vmatpush1.msra.mxu0 %v767
        %785 = vmatprep.subr.mxu0 0.0
        %786 = vmatpush1.msra.mxu0 0.0
        %787 = vmatprep.subr.mxu0 0.0
        %788 = vmatpush1.msra.mxu0 0.0
        %789 = vmatprep.subr.mxu0 0.0
        %790 = vmatpush1.msra.mxu0 0.0
        %791 = vmatprep.subr.mxu0 0.0
        %792 = vmatpush1.msra.mxu0 0.0
        %793 = vmatprep.subr.mxu0 0.0
        %794 = vmatpush1.msra.mxu0 0.0
        %795 = vmatprep.subr.mxu0 0.0
        %796 = vmatpush1.msra.mxu0 0.0
        %797 = vmatprep.subr.mxu0 0.0
        %798 = vmatpush1.msra.mxu0 0.0
        %799 = vmatprep.subr.mxu0 0.0
        %800 = vmatpush1.msra.mxu0 0.0
        %801 = vmatprep.subr.mxu0 0.0
        %802 = vmatpush1.msra.mxu0 0.0
        %803 = vmatprep.subr.mxu0 0.0
        %804 = vmatpush1.msra.mxu0 0.0
        %805 = vmatprep.subr.mxu0 0.0
        %806 = vmatpush1.msra.mxu0 0.0
        %807 = vmatprep.subr.mxu0 0.0
        %808 = vmatpush1.msra.mxu0 0.0
        %809 = vmatprep.subr.mxu0 0.0
        %810 = vmatpush1.msra.mxu0 0.0
        %811 = vmatprep.subr.mxu0 0.0
        %812 = vmatpush1.msra.mxu0 0.0
        %813 = vmatprep.subr.mxu0 0.0
        %814 = vmatpush1.msra.mxu0 0.0
        %815 = vmatprep.subr.mxu0 0.0
        %816 = vmatpush1.msra.mxu0 0.0
        %817 = vmatprep.subr.mxu0 0.0
        %818 = vmatpush1.msra.mxu0 0.0
        %819 = vmatprep.subr.mxu0 0.0
        %820 = vmatpush1.msra.mxu0 0.0
        %821 = vmatprep.subr.mxu0 0.0
        %822 = vmatpush1.msra.mxu0 0.0
        %823 = vmatprep.subr.mxu0 0.0
        %824 = vmatpush1.msra.mxu0 0.0
        %825 = vmatprep.subr.mxu0 0.0
        %826 = vmatpush1.msra.mxu0 0.0
        %827 = vmatprep.subr.mxu0 0.0
        %828 = vmatpush1.msra.mxu0 0.0
        %829 = vmatprep.subr.mxu0 0.0
        %830 = vmatpush1.msra.mxu0 0.0
        %831 = vmatprep.subr.mxu0 0.0
        %832 = vmatpush1.msra.mxu0 0.0
        %833 = vmatprep.subr.mxu0 0.0
        %834 = vmatpush1.msra.mxu0 0.0
        %835 = vmatprep.subr.mxu0 0.0
        %836 = vmatpush1.msra.mxu0 0.0
        %837 = vmatprep.subr.mxu0 0.0
        %838 = vmatpush1.msra.mxu0 0.0
        %839 = vmatprep.mubr.f32.mxu0 0.0
        %840 = vmatmul.mubr.f32.gmra.mrb[0].mxu0 %v770
        %v841 = vpop.f32.mrb[0].mxu0
        %v842 = vadd.f32 0.0, %v841
        %v843 = vpop.f32.mrb[0].mxu0
        %844 = vmatprep.mubr.f32.mxu0 0.0
        %845 = vmatmul.mubr.f32.gmra.mrb[0].mxu0 %v773
        %v846 = vpop.f32.mrb[0].mxu0
        %v847 = vadd.f32 0.0, %v846
        %v848 = vpop.f32.mrb[0].mxu0
        %849 = vdwg.mxu0
        %851 = vset.pattern.permute.xlu0 0
        %852 = vperm.xlu0 %851, %v721
        %v853 = vpop.permute.xlu0 %852
        %856 = vset.pattern.permute.xlu0 0
        %857 = vperm.xlu0 %856, %v722
        %v858 = vpop.permute.xlu0 %857
        %v861 = vsel %vm708, %v842, 0
        %v864 = vsel %vm708, %v847, 0
        %vm866 = vcmask 1041408
        %v868 = vsel %vm866, %v718, 0
        %870 = vmatprep.subr.mxu0 0.0
        %871 = vmatpush1.msra.mxu0 %v710
        %872 = vmatprep.subr.mxu0 0.0
        %873 = vmatpush1.msra.mxu0 %v711
        %874 = vmatprep.subr.mxu0 0.0
        %875 = vmatpush1.msra.mxu0 %v712
        %876 = vmatprep.subr.mxu0 0.0
        %877 = vmatpush1.msra.mxu0 %v713
        %878 = vmatprep.subr.mxu0 0.0
        %879 = vmatpush1.msra.mxu0 %v714
        %880 = vmatprep.subr.mxu0 0.0
        %881 = vmatpush1.msra.mxu0 %v715
        %882 = vmatprep.subr.mxu0 0.0
        %883 = vmatpush1.msra.mxu0 %v716
        %884 = vmatprep.subr.mxu0 0.0
        %885 = vmatpush1.msra.mxu0 %v717
        %886 = vmatprep.subr.mxu0 0.0
        %887 = vmatpush1.msra.mxu0 %v868
        %888 = vmatprep.subr.mxu0 0.0
        %889 = vmatpush1.msra.mxu0 0.0
        %890 = vmatprep.subr.mxu0 0.0
        %891 = vmatpush1.msra.mxu0 0.0
        %892 = vmatprep.subr.mxu0 0.0
        %893 = vmatpush1.msra.mxu0 0.0
        %894 = vmatprep.subr.mxu0 0.0
        %895 = vmatpush1.msra.mxu0 0.0
        %896 = vmatprep.subr.mxu0 0.0
        %897 = vmatpush1.msra.mxu0 0.0
        %898 = vmatprep.subr.mxu0 0.0
        %899 = vmatpush1.msra.mxu0 0.0
        %900 = vmatprep.subr.mxu0 0.0
        %901 = vmatpush1.msra.mxu0 0.0
        %902 = vmatprep.subr.mxu0 0.0
        %903 = vmatpush1.msra.mxu0 0.0
        %904 = vmatprep.subr.mxu0 0.0
        %905 = vmatpush1.msra.mxu0 0.0
        %906 = vmatprep.subr.mxu0 0.0
        %907 = vmatpush1.msra.mxu0 0.0
        %908 = vmatprep.subr.mxu0 0.0
        %909 = vmatpush1.msra.mxu0 0.0
        %910 = vmatprep.subr.mxu0 0.0
        %911 = vmatpush1.msra.mxu0 0.0
        %912 = vmatprep.subr.mxu0 0.0
        %913 = vmatpush1.msra.mxu0 0.0
        %914 = vmatprep.subr.mxu0 0.0
        %915 = vmatpush1.msra.mxu0 0.0
        %916 = vmatprep.subr.mxu0 0.0
        %917 = vmatpush1.msra.mxu0 0.0
        %918 = vmatprep.subr.mxu0 0.0
        %919 = vmatpush1.msra.mxu0 0.0
        %920 = vmatprep.subr.mxu0 0.0
        %921 = vmatpush1.msra.mxu0 0.0
        %922 = vmatprep.subr.mxu0 0.0
        %923 = vmatpush1.msra.mxu0 0.0
        %924 = vmatprep.subr.mxu0 0.0
        %925 = vmatpush1.msra.mxu0 0.0
        %926 = vmatprep.subr.mxu0 0.0
        %927 = vmatpush1.msra.mxu0 0.0
        %928 = vmatprep.subr.mxu0 0.0
        %929 = vmatpush1.msra.mxu0 0.0
        %930 = vmatprep.subr.mxu0 0.0
        %931 = vmatpush1.msra.mxu0 0.0
        %932 = vmatprep.subr.mxu0 0.0
        %933 = vmatpush1.msra.mxu0 0.0
        %934 = vmatprep.mubr.f32.mxu0 0.0
        %935 = vmatmul.mubr.f32.gmra.mrb[0].mxu0 %v861
        %v936 = vpop.f32.mrb[0].mxu0
        %v937 = vadd.f32 %v853, %v936
        %v938 = vpop.f32.mrb[0].mxu0
        %939 = vmatprep.mubr.f32.mxu0 0.0
        %940 = vmatmul.mubr.f32.gmra.mrb[0].mxu0 %v864
        %v941 = vpop.f32.mrb[0].mxu0
        %v942 = vadd.f32 %v858, %v941
        %v943 = vpop.f32.mrb[0].mxu0
        %944 = vdwg.mxu0
        %vm945 = vcmp.ge.f32.partialorder %v937, 0.0
        %vm946 = vcmp.ge.f32.partialorder %v942, 0.0
        %v947 = vmul.f32 %v937, 0.1
        %v948 = vmul.f32 %v942, 0.1
        %v949 = vsel %vm945, %v937, %v947
        %v950 = vsel %vm946, %v942, %v948
        %vm951 = vcmask 277504
        %952 = vst.msk [vmem:[%s501] sm:$0xff] %vm951, %v949
        %953 = vst.msk [vmem:[%s501 + $0x8] sm:$0xff] %vm951, %v950
        %v954 = vld [vmem:[%s6] sm:$0xff]
        %v955 = vld [vmem:[%s6 + $0x8] sm:$0xff]
        %v956 = vld [vmem:[%s7] sm:$0xff]
        %v957 = vld [vmem:[%s7 + $0x8] sm:$0xff]
        %960 = vrot.lane.b32.xlu0 %v949, 2
        %v961 = vpop.permute.xlu0 %960
        %962 = vrot.lane.b32.xlu0 %v950, 2
        %v963 = vpop.permute.xlu0 %962
        %v966 = vsel %vm604, 0.0, %v961
        %v967 = vsel %vm604, 0.0, %v963
        %vm968 = vcmask 154624
        %v969 = vsel %vm968, %v966, 0.0
        %v970 = vsel %vm968, %v967, 0.0
        %971 = vrot.lane.b32.xlu0 %v949, 113
        %v972 = vpop.permute.xlu0 %971
        %973 = vrot.lane.b32.xlu0 %v950, 113
        %v974 = vpop.permute.xlu0 %973
        %v977 = vsel %vm604, 0.0, %v972
        %v978 = vsel %vm604, 0.0, %v974
        %v979 = vsel %vm968, %v977, 0.0
        %v980 = vsel %vm968, %v978, 0.0
        %983 = vrot.lane.b32.xlu0 %v979, 17
        %v984 = vpop.permute.xlu0 %983
        %985 = vrot.lane.b32.xlu0 %v980, 17
        %v986 = vpop.permute.xlu0 %985
        %vm989 = vcmask 138240
        %v990 = vsel %vm989, %v969, %v984
        %v991 = vsel %vm989, %v970, %v986
        %994 = vrot.lane.b32.xlu0 %v969, 127
        %v995 = vpop.permute.xlu0 %994
        %996 = vrot.lane.b32.xlu0 %v970, 127
        %v997 = vpop.permute.xlu0 %996
        %1000 = vrot.lane.b32.xlu0 %v979, 16
        %v1001 = vpop.permute.xlu0 %1000
        %1002 = vrot.lane.b32.xlu0 %v980, 16
        %v1003 = vpop.permute.xlu0 %1002
        %v1006 = vsel %vm989, %v995, %v1001
        %v1007 = vsel %vm989, %v997, %v1003
        %1008 = vrot.lane.b32.xlu0 %v969, 126
        %v1009 = vpop.permute.xlu0 %1008
        %1010 = vrot.lane.b32.xlu0 %v970, 126
        %v1011 = vpop.permute.xlu0 %1010
        %1014 = vrot.lane.b32.xlu0 %v979, 15
        %v1015 = vpop.permute.xlu0 %1014
        %1016 = vrot.lane.b32.xlu0 %v980, 15
        %v1017 = vpop.permute.xlu0 %1016
        %v1020 = vsel %vm989, %v1009, %v1015
        %v1021 = vsel %vm989, %v1011, %v1017
        %1022 = vrot.lane.b32.xlu0 %v969, 125
        %v1023 = vpop.permute.xlu0 %1022
        %1024 = vrot.lane.b32.xlu0 %v970, 125
        %v1025 = vpop.permute.xlu0 %1024
        %1028 = vrot.lane.b32.xlu0 %v979, 14
        %v1029 = vpop.permute.xlu0 %1028
        %1030 = vrot.lane.b32.xlu0 %v980, 14
        %v1031 = vpop.permute.xlu0 %1030
        %v1034 = vsel %vm989, %v1023, %v1029
        %v1035 = vsel %vm989, %v1025, %v1031
        %1036 = vrot.lane.b32.xlu0 %v969, 124
        %v1037 = vpop.permute.xlu0 %1036
        %1038 = vrot.lane.b32.xlu0 %v970, 124
        %v1039 = vpop.permute.xlu0 %1038
        %1042 = vrot.lane.b32.xlu0 %v979, 13
        %v1043 = vpop.permute.xlu0 %1042
        %1044 = vrot.lane.b32.xlu0 %v980, 13
        %v1045 = vpop.permute.xlu0 %1044
        %v1048 = vsel %vm989, %v1037, %v1043
        %v1049 = vsel %vm989, %v1039, %v1045
        %1051 = vset.pattern.permute.xlu0 0
        %1052 = vperm.xlu0 %1051, %v956
        %v1053 = vpop.permute.xlu0 %1052
        %1056 = vset.pattern.permute.xlu0 0
        %1057 = vperm.xlu0 %1056, %v957
        %v1058 = vpop.permute.xlu0 %1057
        %vm1060 = vcmask 654336
        %v1062 = vsel %vm1060, %v954, 0
        %v1065 = vsel %vm1060, %v955, 0
        %1067 = vmatprep.subr.mxu0 0.0
        %1068 = vmatpush1.msra.mxu0 %v990
        %1069 = vmatprep.subr.mxu0 0.0
        %1070 = vmatpush1.msra.mxu0 %v991
        %1071 = vmatprep.subr.mxu0 0.0
        %1072 = vmatpush1.msra.mxu0 %v1006
        %1073 = vmatprep.subr.mxu0 0.0
        %1074 = vmatpush1.msra.mxu0 %v1007
        %1075 = vmatprep.subr.mxu0 0.0
        %1076 = vmatpush1.msra.mxu0 %v1020
        %1077 = vmatprep.subr.mxu0 0.0
        %1078 = vmatpush1.msra.mxu0 %v1021
        %1079 = vmatprep.subr.mxu0 0.0
        %1080 = vmatpush1.msra.mxu0 %v1034
        %1081 = vmatprep.subr.mxu0 0.0
        %1082 = vmatpush1.msra.mxu0 %v1035
        %1083 = vmatprep.subr.mxu0 0.0
        %1084 = vmatpush1.msra.mxu0 %v1048
        %1085 = vmatprep.subr.mxu0 0.0
        %1086 = vmatpush1.msra.mxu0 %v1049
        %1087 = vmatprep.subr.mxu0 0.0
        %1088 = vmatpush1.msra.mxu0 0.0
        %1089 = vmatprep.subr.mxu0 0.0
        %1090 = vmatpush1.msra.mxu0 0.0
        %1091 = vmatprep.subr.mxu0 0.0
        %1092 = vmatpush1.msra.mxu0 0.0
        %1093 = vmatprep.subr.mxu0 0.0
        %1094 = vmatpush1.msra.mxu0 0.0
        %1095 = vmatprep.subr.mxu0 0.0
        %1096 = vmatpush1.msra.mxu0 0.0
        %1097 = vmatprep.subr.mxu0 0.0
        %1098 = vmatpush1.msra.mxu0 0.0
        %1099 = vmatprep.subr.mxu0 0.0
        %1100 = vmatpush1.msra.mxu0 0.0
        %1101 = vmatprep.subr.mxu0 0.0
        %1102 = vmatpush1.msra.mxu0 0.0
        %1103 = vmatprep.subr.mxu0 0.0
        %1104 = vmatpush1.msra.mxu0 0.0
        %1105 = vmatprep.subr.mxu0 0.0
        %1106 = vmatpush1.msra.mxu0 0.0
        %1107 = vmatprep.subr.mxu0 0.0
        %1108 = vmatpush1.msra.mxu0 0.0
        %1109 = vmatprep.subr.mxu0 0.0
        %1110 = vmatpush1.msra.mxu0 0.0
        %1111 = vmatprep.subr.mxu0 0.0
        %1112 = vmatpush1.msra.mxu0 0.0
        %1113 = vmatprep.subr.mxu0 0.0
        %1114 = vmatpush1.msra.mxu0 0.0
        %1115 = vmatprep.subr.mxu0 0.0
        %1116 = vmatpush1.msra.mxu0 0.0
        %1117 = vmatprep.subr.mxu0 0.0
        %1118 = vmatpush1.msra.mxu0 0.0
        %1119 = vmatprep.subr.mxu0 0.0
        %1120 = vmatpush1.msra.mxu0 0.0
        %1121 = vmatprep.subr.mxu0 0.0
        %1122 = vmatpush1.msra.mxu0 0.0
        %1123 = vmatprep.subr.mxu0 0.0
        %1124 = vmatpush1.msra.mxu0 0.0
        %1125 = vmatprep.subr.mxu0 0.0
        %1126 = vmatpush1.msra.mxu0 0.0
        %1127 = vmatprep.subr.mxu0 0.0
        %1128 = vmatpush1.msra.mxu0 0.0
        %1129 = vmatprep.subr.mxu0 0.0
        %1130 = vmatpush1.msra.mxu0 0.0
        %1131 = vmatprep.mubr.f32.mxu0 0.0
        %1132 = vmatmul.mubr.f32.gmra.mrb[0].mxu0 %v1062
        %v1133 = vpop.f32.mrb[0].mxu0
        %v1134 = vadd.f32 %v1053, %v1133
        %v1135 = vpop.f32.mrb[0].mxu0
        %1136 = vmatprep.mubr.f32.mxu0 0.0
        %1137 = vmatmul.mubr.f32.gmra.mrb[0].mxu0 %v1065
        %v1138 = vpop.f32.mrb[0].mxu0
        %v1139 = vadd.f32 %v1058, %v1138
        %v1140 = vpop.f32.mrb[0].mxu0
        %1141 = vdwg.mxu0
        %vm1142 = vcmp.ge.f32.partialorder %v1134, 0.0
        %vm1143 = vcmp.ge.f32.partialorder %v1139, 0.0
        %v1144 = vmul.f32 %v1134, 0.1
        %v1145 = vmul.f32 %v1139, 0.1
        %v1146 = vsel %vm1142, %v1134, %v1144
        %v1147 = vsel %vm1143, %v1139, %v1145
        %1148 = vst.msk [vmem:[%s506] sm:$0xff] %vm951, %v1146
        %1149 = vst.msk [vmem:[%s506 + $0x8] sm:$0xff] %vm951, %v1147
        %v1150 = vld [vmem:[%s8] sm:$0x1]
        %v1151 = vld [vmem:[#allocation2] sm:$0x1]
        %1154 = vrot.lane.b32.xlu0 %v1146, 1
        %v1155 = vpop.permute.xlu0 %1154
        %1156 = vrot.lane.b32.xlu0 %v1147, 1
        %v1157 = vpop.permute.xlu0 %1156
        %vm1160 = vcmask 7168
        %v1161 = vsel %vm1160, 0.0, %v1155
        %v1162 = vsel %vm1160, 0.0, %v1157
        %vm1163 = vcmask 146432
        %v1164 = vsel %vm1163, %v1161, 0.0
        %v1165 = vsel %vm1163, %v1162, 0.0
        %1166 = vrot.lane.b32.xlu0 %v1146, 112
        %v1167 = vpop.permute.xlu0 %1166
        %1168 = vrot.lane.b32.xlu0 %v1147, 112
        %v1169 = vpop.permute.xlu0 %1168
        %v1172 = vsel %vm1160, 0.0, %v1167
        %v1173 = vsel %vm1160, 0.0, %v1169
        %v1174 = vsel %vm1163, %v1172, 0.0
        %v1175 = vsel %vm1163, %v1173, 0.0
        %1178 = vrot.lane.b32.xlu0 %v1174, 17
        %v1179 = vpop.permute.xlu0 %1178
        %1180 = vrot.lane.b32.xlu0 %v1175, 17
        %v1181 = vpop.permute.xlu0 %1180
        %v1184 = vsel %vm989, %v1164, %v1179
        %v1185 = vsel %vm989, %v1165, %v1181
        %1188 = vrot.lane.b32.xlu0 %v1164, 127
        %v1189 = vpop.permute.xlu0 %1188
        %1190 = vrot.lane.b32.xlu0 %v1165, 127
        %v1191 = vpop.permute.xlu0 %1190
        %1194 = vrot.lane.b32.xlu0 %v1174, 16
        %v1195 = vpop.permute.xlu0 %1194
        %1196 = vrot.lane.b32.xlu0 %v1175, 16
        %v1197 = vpop.permute.xlu0 %1196
        %v1200 = vsel %vm989, %v1189, %v1195
        %v1201 = vsel %vm989, %v1191, %v1197
        %1202 = vrot.lane.b32.xlu0 %v1164, 126
        %v1203 = vpop.permute.xlu0 %1202
        %1204 = vrot.lane.b32.xlu0 %v1165, 126
        %v1205 = vpop.permute.xlu0 %1204
        %1208 = vrot.lane.b32.xlu0 %v1174, 15
        %v1209 = vpop.permute.xlu0 %1208
        %1210 = vrot.lane.b32.xlu0 %v1175, 15
        %v1211 = vpop.permute.xlu0 %1210
        %v1214 = vsel %vm989, %v1203, %v1209
        %v1215 = vsel %vm989, %v1205, %v1211
        %1217 = vset.pattern.permute.xlu0 0
        %1218 = vperm.xlu0 %1217, %v1151
        %v1219 = vpop.permute.xlu0 %1218
        %v1221 = vlaneseq
        %v1222 = vshrl.u32 %v1221, 7
        %v1223 = vsub.s32 0, %v1222
        %v1224 = vrot.slane %v1219, %v1223
        %vm1225 = vcmask 392192
        %v1227 = vsel %vm1225, %v1150, 0
        %1229 = vmatprep.subr.mxu0 0.0
        %1230 = vmatpush1.msra.mxu0 %v1184
        %1231 = vmatprep.subr.mxu0 0.0
        %1232 = vmatpush1.msra.mxu0 %v1185
        %1233 = vmatprep.subr.mxu0 0.0
        %1234 = vmatpush1.msra.mxu0 %v1200
        %1235 = vmatprep.subr.mxu0 0.0
        %1236 = vmatpush1.msra.mxu0 %v1201
        %1237 = vmatprep.subr.mxu0 0.0
        %1238 = vmatpush1.msra.mxu0 %v1214
        %1239 = vmatprep.subr.mxu0 0.0
        %1240 = vmatpush1.msra.mxu0 %v1215
        %1241 = vmatprep.subr.mxu0 0.0
        %1242 = vmatpush1.msra.mxu0 0.0
        %1243 = vmatprep.subr.mxu0 0.0
        %1244 = vmatpush1.msra.mxu0 0.0
        %1245 = vmatprep.subr.mxu0 0.0
        %1246 = vmatpush1.msra.mxu0 0.0
        %1247 = vmatprep.subr.mxu0 0.0
        %1248 = vmatpush1.msra.mxu0 0.0
        %1249 = vmatprep.subr.mxu0 0.0
        %1250 = vmatpush1.msra.mxu0 0.0
        %1251 = vmatprep.subr.mxu0 0.0
        %1252 = vmatpush1.msra.mxu0 0.0
        %1253 = vmatprep.subr.mxu0 0.0
        %1254 = vmatpush1.msra.mxu0 0.0
        %1255 = vmatprep.subr.mxu0 0.0
        %1256 = vmatpush1.msra.mxu0 0.0
        %1257 = vmatprep.subr.mxu0 0.0
        %1258 = vmatpush1.msra.mxu0 0.0
        %1259 = vmatprep.subr.mxu0 0.0
        %1260 = vmatpush1.msra.mxu0 0.0
        %1261 = vmatprep.subr.mxu0 0.0
        %1262 = vmatpush1.msra.mxu0 0.0
        %1263 = vmatprep.subr.mxu0 0.0
        %1264 = vmatpush1.msra.mxu0 0.0
        %1265 = vmatprep.subr.mxu0 0.0
        %1266 = vmatpush1.msra.mxu0 0.0
        %1267 = vmatprep.subr.mxu0 0.0
        %1268 = vmatpush1.msra.mxu0 0.0
        %1269 = vmatprep.subr.mxu0 0.0
        %1270 = vmatpush1.msra.mxu0 0.0
        %1271 = vmatprep.subr.mxu0 0.0
        %1272 = vmatpush1.msra.mxu0 0.0
        %1273 = vmatprep.subr.mxu0 0.0
        %1274 = vmatpush1.msra.mxu0 0.0
        %1275 = vmatprep.subr.mxu0 0.0
        %1276 = vmatpush1.msra.mxu0 0.0
        %1277 = vmatprep.subr.mxu0 0.0
        %1278 = vmatpush1.msra.mxu0 0.0
        %1279 = vmatprep.subr.mxu0 0.0
        %1280 = vmatpush1.msra.mxu0 0.0
        %1281 = vmatprep.subr.mxu0 0.0
        %1282 = vmatpush1.msra.mxu0 0.0
        %1283 = vmatprep.subr.mxu0 0.0
        %1284 = vmatpush1.msra.mxu0 0.0
        %1285 = vmatprep.subr.mxu0 0.0
        %1286 = vmatpush1.msra.mxu0 0.0
        %1287 = vmatprep.subr.mxu0 0.0
        %1288 = vmatpush1.msra.mxu0 0.0
        %1289 = vmatprep.subr.mxu0 0.0
        %1290 = vmatpush1.msra.mxu0 0.0
        %1291 = vmatprep.subr.mxu0 0.0
        %1292 = vmatpush1.msra.mxu0 0.0
        %1293 = vmatprep.mubr.f32.mxu0 0.0
        %1294 = vmatmul.mubr.f32.gmra.mrb[0].mxu0 %v1227
        %v1295 = vpop.f32.mrb[0].mxu0
        %v1296 = vadd.f32 %v1224, %v1295
        %v1297 = vpop.f32.mrb[0].mxu0
        %1298 = vdwg.mxu0
        %vm1299 = vcmask 270336
        %1300 = vst.msk [vmem:[%s509] sm:$0x1] %vm1299, %v1296
        %p1301 = scmp.lt.s32.totalorder %s29, 1
        %s1302 = scalar_select %p1301, %s29, 1
        %s1303 = smul.addr %s1302, 8
        %s1304 = scalar_lea.vmem %s11, %s1303
        %p1305 = scmp.lt.s32.totalorder %s29, 1
        %s1306 = scalar_select %p1305, %s29, 1
        %s1307 = smul.addr %s1306, 2
        %s1308 = smul.addr %s1307, 8
        %s1309 = scalar_lea.vmem %s12, %s1308
        %p1310 = scmp.lt.s32.totalorder %s29, 1
        %s1311 = scalar_select %p1310, %s29, 1
        %s1312 = smul.addr %s1311, 2
        %s1313 = smul.addr %s1312, 8
        %s1314 = scalar_lea.vmem %s13, %s1313
        %p1315 = scmp.lt.s32.totalorder %s29, 1
        %s1316 = scalar_select %p1315, %s29, 1
        %s1317 = scalar_lea.vmem %s14, %s1316
        // Predicated region
        $region69: #{msd_forward.4} parent=63 // pred_check
          %p1318 = pneg %p283
        $region70: #{msd_forward.4} parent=63 // pred_check_branch
          %1320 = sbr.rel (%p1318) target = $region72
        $region71: #{msd_forward.4} parent=63 // pred_region
          _
        $region72: #{msd_forward.4} parent=63 // pred_fallthru
          _
        // Predicated region
        $region73: #{msd_forward.4} parent=63 // pred_check
          %p1321 = pneg %p309
        $region74: #{msd_forward.4} parent=63 // pred_check_branch
          %1323 = sbr.rel (%p1321) target = $region76
        $region75: #{msd_forward.4} parent=63 // pred_region
          _
        $region76: #{msd_forward.4} parent=63 // pred_fallthru
          _
        // Predicated region
        $region77: #{msd_forward.4} parent=63 // pred_check
          %p1324 = pneg %p335
        $region78: #{msd_forward.4} parent=63 // pred_check_branch
          %1326 = sbr.rel (%p1324) target = $region80
        $region79: #{msd_forward.4} parent=63 // pred_region
          _
        $region80: #{msd_forward.4} parent=63 // pred_fallthru
          _
        // Predicated region
        $region81: #{msd_forward.4} parent=63 // pred_check
          %p1327 = pneg %p361
        $region82: #{msd_forward.4} parent=63 // pred_check_branch
          %1329 = sbr.rel (%p1327) target = $region84
        $region83: #{msd_forward.4} parent=63 // pred_region
          _
        $region84: #{msd_forward.4} parent=63 // pred_fallthru
          _
      $region64: #{msd_forward.4} parent=5 // pred_fallthru
        _
      %p1330 = scmp.le.s32.totalorder 2, %s24
      // Predicated region
      $region85: #{msd_forward.4} parent=5 // pred_check
        %p1331 = pneg %p1330
      $region86: #{msd_forward.4} parent=5 // pred_check_branch
        %1333 = sbr.rel (%p1331) target = $region88
      $region87: #{msd_forward.4} parent=5 // pred_region
        %s1334 = ssub.s32 %s24, 2
        // Predicated region
        $region89: #{msd_forward.4} parent=87 // pred_check
          %p1335 = pneg %p289
        $region90: #{msd_forward.4} parent=87 // pred_check_branch
          %1337 = sbr.rel (%p1335) target = $region92
        $region91: #{msd_forward.4} parent=87 // pred_region
          %p1338 = scmp.lt.s32.totalorder %s30, 1
          %s1339 = scalar_select %p1338, %s30, 1
          %s1340 = smul.addr %s1339, 8
          %s1341 = scalar_lea.vmem %s11, %s1340
        $region92: #{msd_forward.4} parent=87 // pred_fallthru
          _
        // Predicated region
        $region93: #{msd_forward.4} parent=87 // pred_check
          %p1342 = pneg %p315
        $region94: #{msd_forward.4} parent=87 // pred_check_branch
          %1344 = sbr.rel (%p1342) target = $region96
        $region95: #{msd_forward.4} parent=87 // pred_region
          %p1345 = scmp.lt.s32.totalorder %s30, 1
          %s1346 = scalar_select %p1345, %s30, 1
          %s1347 = smul.addr %s1346, 2
          %s1348 = smul.addr %s1347, 8
          %s1349 = scalar_lea.vmem %s12, %s1348
        $region96: #{msd_forward.4} parent=87 // pred_fallthru
          _
        // Predicated region
        $region97: #{msd_forward.4} parent=87 // pred_check
          %p1350 = pneg %p341
        $region98: #{msd_forward.4} parent=87 // pred_check_branch
          %1352 = sbr.rel (%p1350) target = $region100
        $region99: #{msd_forward.4} parent=87 // pred_region
          %p1353 = scmp.lt.s32.totalorder %s30, 1
          %s1354 = scalar_select %p1353, %s30, 1
          %s1355 = smul.addr %s1354, 2
          %s1356 = smul.addr %s1355, 8
          %s1357 = scalar_lea.vmem %s13, %s1356
        $region100: #{msd_forward.4} parent=87 // pred_fallthru
          _
        // Predicated region
        $region101: #{msd_forward.4} parent=87 // pred_check
          %p1358 = pneg %p367
        $region102: #{msd_forward.4} parent=87 // pred_check_branch
          %1360 = sbr.rel (%p1358) target = $region104
        $region103: #{msd_forward.4} parent=87 // pred_region
          %p1361 = scmp.lt.s32.totalorder %s30, 1
          %s1362 = scalar_select %p1361, %s30, 1
          %s1363 = scalar_lea.vmem %s14, %s1362
        $region104: #{msd_forward.4} parent=87 // pred_fallthru
          _
      $region88: #{msd_forward.4} parent=5 // pred_fallthru
        _
    $region6: #{msd_forward.4} parent=1 // loop_footer
      %s28 = sadd.s32 1, %s24
    $region7: #{msd_forward.4} parent=1 // loop_footer_branch
      %23 = sbr.rel target = $region3
    $region8: #{msd_forward.4} parent=1 // loop_exit
      _
    %1364 = vsyncpa [#allocation4], 1
    %s1365 = scalar_lea.sflag [#allocation4], 1
    %1366 = vsyncpa %s1365, 1

// kernel: squeeze.38
$region0: #{squeeze.38}
  %s0 = inlined_call_operand.vmem [shape: f32[64], index: 0, kind: input, shape index: {}]
  %s1 = inlined_call_operand.hbm [shape: f32[2,32], index: 1, kind: output, shape index: {}]
  $region1: #{squeeze.38} parent=0
    #allocation0 [shape = 'u8[1024]{0}', space=vmem, size = 0x400, scoped, tag = 'operand span for operand 1']
    #allocation1 [shape = 's32[1]{0}', space=sflag, size = 0x4, scoped, tag = 'scoped memory for squeeze.38']
    #allocation2 [shape = 'u8[4096]{0}', space=vmem, size = 0x1000, scoped, tag = 'scoped mem for output reshape']
    #allocation3 [shape = 'u8[4096]{0}', space=vmem, size = 0x1000, scoped, tag = 'scoped mem for input reshape']
    %2 = vsyncpa [#allocation1], 0
    %s4 = sshllo.u32 0, 1
    %v5 = vld [vmem:[%s0] sm:%s4]
    %6 = vst [vmem:[#allocation3] sm:%s4] %v5
    %v7 = vld [vmem:[#allocation3] sm:$0x1]
    %vm8 = vcmask 261120
    %9 = vst.msk [vmem:[#allocation2] sm:$0x1] %vm8, %v7
    %v10 = vld [vmem:[#allocation3] sm:$0x1]
    %11 = vrot.lane.b32.xlu0 %v10, 96
    %v12 = vpop.permute.xlu0 %11
    %vm13 = vcmask 261120
    %s14 = scalar_lea.vmem [#allocation2], 1
    %15 = vst.msk [vmem:[%s14] sm:$0x1] %vm13, %v12
    %s17 = sshllo.u32 0, 2
    %v19 = vld [vmem:[#allocation2] sm:%s17]
    %s20 = sshllo.u32 0, 2
    %21 = vst [vmem:[#allocation0] sm:%s20] %v19
    %s23 = ssub.s32 32, 32
    %24 = vsyncadd [#allocation1], %s23
    %s26 = sshll.u32 [#allocation0], 4
    %s27 = int_to_ptr.vmem [resolvable:$true] %s26
    %29 = dma.vmem_to_hbm [thread:$0]  %s27, 32, %s1, [#allocation1]
    %30 = dma.done [#allocation1], 32
    %31 = vsyncpa [#allocation1], 1

// kernel: squeeze.48
$region0: #{squeeze.48}
  %s0 = inlined_call_operand.vmem [shape: f32[34], index: 0, kind: input, shape index: {}]
  %s1 = inlined_call_operand.hbm [shape: f32[2,17], index: 1, kind: output, shape index: {}]
  $region1: #{squeeze.48} parent=0
    #allocation0 [shape = 'u8[1024]{0}', space=vmem, size = 0x400, scoped, tag = 'operand span for operand 1']
    #allocation1 [shape = 's32[1]{0}', space=sflag, size = 0x4, scoped, tag = 'scoped memory for squeeze.48']
    #allocation2 [shape = 'u8[4096]{0}', space=vmem, size = 0x1000, scoped, tag = 'scoped mem for output reshape']
    #allocation3 [shape = 'u8[4096]{0}', space=vmem, size = 0x1000, scoped, tag = 'scoped mem for input reshape']
    %2 = vsyncpa [#allocation1], 0
    %s4 = sshllo.u32 0, 1
    %v5 = vld [vmem:[%s0] sm:%s4]
    %6 = vst [vmem:[#allocation3] sm:%s4] %v5
    %v7 = vld [vmem:[#allocation3] sm:$0x1]
    %vm8 = vcmask 138240
    %9 = vst.msk [vmem:[#allocation2] sm:$0x1] %vm8, %v7
    %v10 = vld [vmem:[#allocation3] sm:$0x1]
    %11 = vrot.lane.b32.xlu0 %v10, 111
    %v12 = vpop.permute.xlu0 %11
    %vm13 = vcmask 138240
    %s14 = scalar_lea.vmem [#allocation2], 1
    %15 = vst.msk [vmem:[%s14] sm:$0x1] %vm13, %v12
    %s17 = sshllo.u32 0, 2
    %v19 = vld [vmem:[#allocation2] sm:%s17]
    %s20 = sshllo.u32 0, 2
    %21 = vst [vmem:[#allocation0] sm:%s20] %v19
    %s23 = ssub.s32 32, 32
    %24 = vsyncadd [#allocation1], %s23
    %s26 = sshll.u32 [#allocation0], 4
    %s27 = int_to_ptr.vmem [resolvable:$true] %s26
    %29 = dma.vmem_to_hbm [thread:$0]  %s27, 32, %s1, [#allocation1]
    %30 = dma.done [#allocation1], 32
    %31 = vsyncpa [#allocation1], 1

// kernel: msd_forward.5
$region0: #{msd_forward.5}
  #allocation0 [shape = 'u32[]', space=smem, size = 0x4, offset = 0x4, fixed_abs, tag = 'smem constant byte address 0x4 - core index']
  #allocation1 [shape = 'u32[144,128]{1,0:T(1,128)}', space=vmem, size = 0x12000, scoped, tag = 'internal scratch']
  #allocation2 [shape = 'f32[1,1]{1,0:T(1,128)S(1)}', space=vmem, size = 0x200, scoped, tag = 'scoped memory for msd_forward.5']
  %s0 = inlined_call_operand.vmem [shape: f32[2,1,128], index: 0, kind: input, shape index: {}]
  %s1 = inlined_call_operand.vmem [shape: f32[128,66], index: 1, kind: input, shape index: {}]
  %s2 = inlined_call_operand.vmem [shape: f32[66,34], index: 2, kind: input, shape index: {}]
  %s3 = inlined_call_operand.vmem [shape: f32[8,5], index: 3, kind: input, shape index: {}]
  %s4 = inlined_call_operand.vmem [shape: f32[8,1], index: 4, kind: input, shape index: {}]
  %s5 = inlined_call_operand.vmem [shape: f32[16,40], index: 5, kind: input, shape index: {}]
  %s6 = inlined_call_operand.vmem [shape: f32[16,1], index: 6, kind: input, shape index: {}]
  %s7 = inlined_call_operand.vmem [shape: f32[16,80], index: 7, kind: input, shape index: {}]
  %s8 = inlined_call_operand.vmem [shape: f32[16,1], index: 8, kind: input, shape index: {}]
  %s9 = inlined_call_operand.vmem [shape: f32[1,48], index: 9, kind: input, shape index: {}]
  %s10 = inlined_call_operand.<no memory space> [shape: f32[1,1], index: 10, kind: input, shape index: {}]
  %s11 = inlined_call_operand.vmem [shape: f32[34,18], index: 11, kind: input, shape index: {}]
  %s12 = inlined_call_operand.vmem [shape: f32[2,8,34], index: 12, kind: output, shape index: {0}]
  %s13 = inlined_call_operand.vmem [shape: f32[2,16,18], index: 13, kind: output, shape index: {1}]
  %s14 = inlined_call_operand.vmem [shape: f32[2,16,18], index: 14, kind: output, shape index: {2}]
  %s15 = inlined_call_operand.vmem [shape: f32[2,1,18], index: 15, kind: output, shape index: {3}]
  %16 = xla_tuple %s12, %s13, %s14, %s15
  %s17 = sld [smem:[#allocation0]]
  $region105: #{msd_forward.5} parent=0
    _
  %s19 = ssub.s32 1, %s17
  %s20 = scalar_select 0, %s19, %s17
  %v21 = vstv %s10
  %22 = vst [vmem:[#allocation2] sm:$0x1] %v21
  loop: start=0, step=1, limit=4
  $region2: #{msd_forward.5} parent=0 // loop_pre_header
    _
  $region3: #{msd_forward.5} parent=0 // loop_header
    %s24 = sphi 0, %s28
    %p25 = scmp.ge.s32.totalorder %s24, 4
    %s34 = sphi 0, %s36
    %s37 = sphi 0, %s34
    %s38 = sphi 0, %s37
    %s54 = sphi 0, %s38
    %s58 = sphi 0, %s58
    %s60 = sphi 0, %s58
    %s61 = sphi 0, %s60
    %s75 = sphi 0, %s61
    %s79 = sphi 0, %s79
    %s81 = sphi 0, %s79
    %s82 = sphi 0, %s81
    %s96 = sphi 0, %s82
    %s100 = sphi 0, %s100
    %s102 = sphi 0, %s100
    %s103 = sphi 0, %s102
    %s117 = sphi 0, %s103
    %s121 = sphi 0, %s121
    %s123 = sphi 0, %s121
    %s124 = sphi 0, %s123
    %s138 = sphi 0, %s124
    %s142 = sphi 0, %s142
    %s144 = sphi 0, %s142
    %s145 = sphi 0, %s144
    %s159 = sphi 0, %s145
    %s163 = sphi 0, %s163
    %s165 = sphi 0, %s163
    %s166 = sphi 0, %s165
    %s180 = sphi 0, %s166
    %s184 = sphi 0, %s184
    %s186 = sphi 0, %s184
    %s187 = sphi 0, %s186
    %s201 = sphi 0, %s187
    %s205 = sphi 0, %s205
    %s207 = sphi 0, %s205
    %s208 = sphi 0, %s207
    %s222 = sphi 0, %s208
    %s226 = sphi 0, %s226
    %s228 = sphi 0, %s226
    %s229 = sphi 0, %s228
    %s243 = sphi 0, %s229
    %s247 = sphi 0, %s247
    %s249 = sphi 0, %s247
    %s250 = sphi 0, %s249
    %s264 = sphi 0, %s250
    %s268 = sphi 0, %s268
    %s270 = sphi 0, %s268
    %s271 = sphi 0, %s270
    %s285 = sphi 0, %s271
    %s291 = sphi 0, %s293
    %s294 = sphi 0, %s291
    %s295 = sphi 0, %s294
    %s311 = sphi 0, %s295
    %s317 = sphi 0, %s319
    %s320 = sphi 0, %s317
    %s321 = sphi 0, %s320
    %s337 = sphi 0, %s321
    %s343 = sphi 0, %s345
    %s346 = sphi 0, %s343
    %s347 = sphi 0, %s346
    %s363 = sphi 0, %s347
    %s369 = sphi 0, %s371
    %s372 = sphi 0, %s369
    %s373 = sphi 0, %s372
    %s389 = sphi 0, %s373
  $region4: #{msd_forward.5} parent=0 // loop_header_branch
    %27 = sbr.rel (%p25) target = $region8
  $region5: #{msd_forward.5} parent=0 // loop_body
    %s29 = ssub.s32 %s24, 1
    %s30 = ssub.s32 %s24, 2
    %s31 = sadd.s32 %s24, 1
    %s32 = ssub.s32 %s24, %s31
    %p33 = scmp.eq.s32.totalorder %s32, 0
    %s35 = sadd.s32 %s34, 1
    %s36 = scalar_select %p33, %s34, %s35
    %p39 = pneg %p33
    %p40 = scmp.eq.s32.totalorder %s24, 1
    %p41 = por %p39, %p40
    %p42 = scmp.ne.s32.totalorder %s34, %s37
    %p43 = scmp.eq.s32.totalorder %s24, 0
    %p44 = por %p42, %p43
    %p45 = scmp.ne.s32.totalorder %s34, %s37
    %p46 = scmp.eq.s32.totalorder %s29, 1
    %p47 = por %p45, %p46
    %p48 = scmp.ne.s32.totalorder %s37, %s38
    %p49 = scmp.eq.s32.totalorder %s29, 0
    %p50 = por %p48, %p49
    %p51 = scmp.ne.s32.totalorder %s37, %s38
    %p52 = scmp.eq.s32.totalorder %s30, 1
    %p53 = por %p51, %p52
    %p55 = scmp.ne.s32.totalorder %s38, %s54
    %p56 = scmp.eq.s32.totalorder %s30, 0
    %p57 = por %p55, %p56
    %s59 = sadd.s32 %s58, 1
    %p62 = scmp.eq.s32.totalorder %s24, 1
    %p63 = scmp.ne.s32.totalorder %s58, %s60
    %p64 = scmp.eq.s32.totalorder %s24, 0
    %p65 = por %p63, %p64
    %p66 = scmp.ne.s32.totalorder %s58, %s60
    %p67 = scmp.eq.s32.totalorder %s29, 1
    %p68 = por %p66, %p67
    %p69 = scmp.ne.s32.totalorder %s60, %s61
    %p70 = scmp.eq.s32.totalorder %s29, 0
    %p71 = por %p69, %p70
    %p72 = scmp.ne.s32.totalorder %s60, %s61
    %p73 = scmp.eq.s32.totalorder %s30, 1
    %p74 = por %p72, %p73
    %p76 = scmp.ne.s32.totalorder %s61, %s75
    %p77 = scmp.eq.s32.totalorder %s30, 0
    %p78 = por %p76, %p77
    %s80 = sadd.s32 %s79, 1
    %p83 = scmp.eq.s32.totalorder %s24, 1
    %p84 = scmp.ne.s32.totalorder %s79, %s81
    %p85 = scmp.eq.s32.totalorder %s24, 0
    %p86 = por %p84, %p85
    %p87 = scmp.ne.s32.totalorder %s79, %s81
    %p88 = scmp.eq.s32.totalorder %s29, 1
    %p89 = por %p87, %p88
    %p90 = scmp.ne.s32.totalorder %s81, %s82
    %p91 = scmp.eq.s32.totalorder %s29, 0
    %p92 = por %p90, %p91
    %p93 = scmp.ne.s32.totalorder %s81, %s82
    %p94 = scmp.eq.s32.totalorder %s30, 1
    %p95 = por %p93, %p94
    %p97 = scmp.ne.s32.totalorder %s82, %s96
    %p98 = scmp.eq.s32.totalorder %s30, 0
    %p99 = por %p97, %p98
    %s101 = sadd.s32 %s100, 1
    %p104 = scmp.eq.s32.totalorder %s24, 1
    %p105 = scmp.ne.s32.totalorder %s100, %s102
    %p106 = scmp.eq.s32.totalorder %s24, 0
    %p107 = por %p105, %p106
    %p108 = scmp.ne.s32.totalorder %s100, %s102
    %p109 = scmp.eq.s32.totalorder %s29, 1
    %p110 = por %p108, %p109
    %p111 = scmp.ne.s32.totalorder %s102, %s103
    %p112 = scmp.eq.s32.totalorder %s29, 0
    %p113 = por %p111, %p112
    %p114 = scmp.ne.s32.totalorder %s102, %s103
    %p115 = scmp.eq.s32.totalorder %s30, 1
    %p116 = por %p114, %p115
    %p118 = scmp.ne.s32.totalorder %s103, %s117
    %p119 = scmp.eq.s32.totalorder %s30, 0
    %p120 = por %p118, %p119
    %s122 = sadd.s32 %s121, 1
    %p125 = scmp.eq.s32.totalorder %s24, 1
    %p126 = scmp.ne.s32.totalorder %s121, %s123
    %p127 = scmp.eq.s32.totalorder %s24, 0
    %p128 = por %p126, %p127
    %p129 = scmp.ne.s32.totalorder %s121, %s123
    %p130 = scmp.eq.s32.totalorder %s29, 1
    %p131 = por %p129, %p130
    %p132 = scmp.ne.s32.totalorder %s123, %s124
    %p133 = scmp.eq.s32.totalorder %s29, 0
    %p134 = por %p132, %p133
    %p135 = scmp.ne.s32.totalorder %s123, %s124
    %p136 = scmp.eq.s32.totalorder %s30, 1
    %p137 = por %p135, %p136
    %p139 = scmp.ne.s32.totalorder %s124, %s138
    %p140 = scmp.eq.s32.totalorder %s30, 0
    %p141 = por %p139, %p140
    %s143 = sadd.s32 %s142, 1
    %p146 = scmp.eq.s32.totalorder %s24, 1
    %p147 = scmp.ne.s32.totalorder %s142, %s144
    %p148 = scmp.eq.s32.totalorder %s24, 0
    %p149 = por %p147, %p148
    %p150 = scmp.ne.s32.totalorder %s142, %s144
    %p151 = scmp.eq.s32.totalorder %s29, 1
    %p152 = por %p150, %p151
    %p153 = scmp.ne.s32.totalorder %s144, %s145
    %p154 = scmp.eq.s32.totalorder %s29, 0
    %p155 = por %p153, %p154
    %p156 = scmp.ne.s32.totalorder %s144, %s145
    %p157 = scmp.eq.s32.totalorder %s30, 1
    %p158 = por %p156, %p157
    %p160 = scmp.ne.s32.totalorder %s145, %s159
    %p161 = scmp.eq.s32.totalorder %s30, 0
    %p162 = por %p160, %p161
    %s164 = sadd.s32 %s163, 1
    %p167 = scmp.eq.s32.totalorder %s24, 1
    %p168 = scmp.ne.s32.totalorder %s163, %s165
    %p169 = scmp.eq.s32.totalorder %s24, 0
    %p170 = por %p168, %p169
    %p171 = scmp.ne.s32.totalorder %s163, %s165
    %p172 = scmp.eq.s32.totalorder %s29, 1
    %p173 = por %p171, %p172
    %p174 = scmp.ne.s32.totalorder %s165, %s166
    %p175 = scmp.eq.s32.totalorder %s29, 0
    %p176 = por %p174, %p175
    %p177 = scmp.ne.s32.totalorder %s165, %s166
    %p178 = scmp.eq.s32.totalorder %s30, 1
    %p179 = por %p177, %p178
    %p181 = scmp.ne.s32.totalorder %s166, %s180
    %p182 = scmp.eq.s32.totalorder %s30, 0
    %p183 = por %p181, %p182
    %s185 = sadd.s32 %s184, 1
    %p188 = scmp.eq.s32.totalorder %s24, 1
    %p189 = scmp.ne.s32.totalorder %s184, %s186
    %p190 = scmp.eq.s32.totalorder %s24, 0
    %p191 = por %p189, %p190
    %p192 = scmp.ne.s32.totalorder %s184, %s186
    %p193 = scmp.eq.s32.totalorder %s29, 1
    %p194 = por %p192, %p193
    %p195 = scmp.ne.s32.totalorder %s186, %s187
    %p196 = scmp.eq.s32.totalorder %s29, 0
    %p197 = por %p195, %p196
    %p198 = scmp.ne.s32.totalorder %s186, %s187
    %p199 = scmp.eq.s32.totalorder %s30, 1
    %p200 = por %p198, %p199
    %p202 = scmp.ne.s32.totalorder %s187, %s201
    %p203 = scmp.eq.s32.totalorder %s30, 0
    %p204 = por %p202, %p203
    %s206 = sadd.s32 %s205, 1
    %p209 = scmp.eq.s32.totalorder %s24, 1
    %p210 = scmp.ne.s32.totalorder %s205, %s207
    %p211 = scmp.eq.s32.totalorder %s24, 0
    %p212 = por %p210, %p211
    %p213 = scmp.ne.s32.totalorder %s205, %s207
    %p214 = scmp.eq.s32.totalorder %s29, 1
    %p215 = por %p213, %p214
    %p216 = scmp.ne.s32.totalorder %s207, %s208
    %p217 = scmp.eq.s32.totalorder %s29, 0
    %p218 = por %p216, %p217
    %p219 = scmp.ne.s32.totalorder %s207, %s208
    %p220 = scmp.eq.s32.totalorder %s30, 1
    %p221 = por %p219, %p220
    %p223 = scmp.ne.s32.totalorder %s208, %s222
    %p224 = scmp.eq.s32.totalorder %s30, 0
    %p225 = por %p223, %p224
    %s227 = sadd.s32 %s226, 1
    %p230 = scmp.eq.s32.totalorder %s24, 1
    %p231 = scmp.ne.s32.totalorder %s226, %s228
    %p232 = scmp.eq.s32.totalorder %s24, 0
    %p233 = por %p231, %p232
    %p234 = scmp.ne.s32.totalorder %s226, %s228
    %p235 = scmp.eq.s32.totalorder %s29, 1
    %p236 = por %p234, %p235
    %p237 = scmp.ne.s32.totalorder %s228, %s229
    %p238 = scmp.eq.s32.totalorder %s29, 0
    %p239 = por %p237, %p238
    %p240 = scmp.ne.s32.totalorder %s228, %s229
    %p241 = scmp.eq.s32.totalorder %s30, 1
    %p242 = por %p240, %p241
    %p244 = scmp.ne.s32.totalorder %s229, %s243
    %p245 = scmp.eq.s32.totalorder %s30, 0
    %p246 = por %p244, %p245
    %s248 = sadd.s32 %s247, 1
    %p251 = scmp.eq.s32.totalorder %s24, 1
    %p252 = scmp.ne.s32.totalorder %s247, %s249
    %p253 = scmp.eq.s32.totalorder %s24, 0
    %p254 = por %p252, %p253
    %p255 = scmp.ne.s32.totalorder %s247, %s249
    %p256 = scmp.eq.s32.totalorder %s29, 1
    %p257 = por %p255, %p256
    %p258 = scmp.ne.s32.totalorder %s249, %s250
    %p259 = scmp.eq.s32.totalorder %s29, 0
    %p260 = por %p258, %p259
    %p261 = scmp.ne.s32.totalorder %s249, %s250
    %p262 = scmp.eq.s32.totalorder %s30, 1
    %p263 = por %p261, %p262
    %p265 = scmp.ne.s32.totalorder %s250, %s264
    %p266 = scmp.eq.s32.totalorder %s30, 0
    %p267 = por %p265, %p266
    %s269 = sadd.s32 %s268, 1
    %p272 = scmp.eq.s32.totalorder %s24, 1
    %p273 = scmp.ne.s32.totalorder %s268, %s270
    %p274 = scmp.eq.s32.totalorder %s24, 0
    %p275 = por %p273, %p274
    %p276 = scmp.ne.s32.totalorder %s268, %s270
    %p277 = scmp.eq.s32.totalorder %s29, 1
    %p278 = por %p276, %p277
    %p279 = scmp.ne.s32.totalorder %s270, %s271
    %p280 = scmp.eq.s32.totalorder %s29, 0
    %p281 = por %p279, %p280
    %p282 = scmp.ne.s32.totalorder %s270, %s271
    %p283 = scmp.eq.s32.totalorder %s30, 1
    %p284 = por %p282, %p283
    %p286 = scmp.ne.s32.totalorder %s271, %s285
    %p287 = scmp.eq.s32.totalorder %s30, 0
    %p288 = por %p286, %p287
    %s289 = ssub.s32 %s24, %s31
    %p290 = scmp.eq.s32.totalorder %s289, 0
    %s292 = sadd.s32 %s291, 1
    %s293 = scalar_select %p290, %s291, %s292
    %p296 = pneg %p290
    %p297 = scmp.eq.s32.totalorder %s24, 1
    %p298 = por %p296, %p297
    %p299 = scmp.ne.s32.totalorder %s291, %s294
    %p300 = scmp.eq.s32.totalorder %s24, 0
    %p301 = por %p299, %p300
    %p302 = scmp.ne.s32.totalorder %s291, %s294
    %p303 = scmp.eq.s32.totalorder %s29, 1
    %p304 = por %p302, %p303
    %p305 = scmp.ne.s32.totalorder %s294, %s295
    %p306 = scmp.eq.s32.totalorder %s29, 0
    %p307 = por %p305, %p306
    %p308 = scmp.ne.s32.totalorder %s294, %s295
    %p309 = scmp.eq.s32.totalorder %s30, 1
    %p310 = por %p308, %p309
    %p312 = scmp.ne.s32.totalorder %s295, %s311
    %p313 = scmp.eq.s32.totalorder %s30, 0
    %p314 = por %p312, %p313
    %s315 = ssub.s32 %s24, %s31
    %p316 = scmp.eq.s32.totalorder %s315, 0
    %s318 = sadd.s32 %s317, 1
    %s319 = scalar_select %p316, %s317, %s318
    %p322 = pneg %p316
    %p323 = scmp.eq.s32.totalorder %s24, 1
    %p324 = por %p322, %p323
    %p325 = scmp.ne.s32.totalorder %s317, %s320
    %p326 = scmp.eq.s32.totalorder %s24, 0
    %p327 = por %p325, %p326
    %p328 = scmp.ne.s32.totalorder %s317, %s320
    %p329 = scmp.eq.s32.totalorder %s29, 1
    %p330 = por %p328, %p329
    %p331 = scmp.ne.s32.totalorder %s320, %s321
    %p332 = scmp.eq.s32.totalorder %s29, 0
    %p333 = por %p331, %p332
    %p334 = scmp.ne.s32.totalorder %s320, %s321
    %p335 = scmp.eq.s32.totalorder %s30, 1
    %p336 = por %p334, %p335
    %p338 = scmp.ne.s32.totalorder %s321, %s337
    %p339 = scmp.eq.s32.totalorder %s30, 0
    %p340 = por %p338, %p339
    %s341 = ssub.s32 %s24, %s31
    %p342 = scmp.eq.s32.totalorder %s341, 0
    %s344 = sadd.s32 %s343, 1
    %s345 = scalar_select %p342, %s343, %s344
    %p348 = pneg %p342
    %p349 = scmp.eq.s32.totalorder %s24, 1
    %p350 = por %p348, %p349
    %p351 = scmp.ne.s32.totalorder %s343, %s346
    %p352 = scmp.eq.s32.totalorder %s24, 0
    %p353 = por %p351, %p352
    %p354 = scmp.ne.s32.totalorder %s343, %s346
    %p355 = scmp.eq.s32.totalorder %s29, 1
    %p356 = por %p354, %p355
    %p357 = scmp.ne.s32.totalorder %s346, %s347
    %p358 = scmp.eq.s32.totalorder %s29, 0
    %p359 = por %p357, %p358
    %p360 = scmp.ne.s32.totalorder %s346, %s347
    %p361 = scmp.eq.s32.totalorder %s30, 1
    %p362 = por %p360, %p361
    %p364 = scmp.ne.s32.totalorder %s347, %s363
    %p365 = scmp.eq.s32.totalorder %s30, 0
    %p366 = por %p364, %p365
    %s367 = ssub.s32 %s24, %s31
    %p368 = scmp.eq.s32.totalorder %s367, 0
    %s370 = sadd.s32 %s369, 1
    %s371 = scalar_select %p368, %s369, %s370
    %p374 = pneg %p368
    %p375 = scmp.eq.s32.totalorder %s24, 1
    %p376 = por %p374, %p375
    %p377 = scmp.ne.s32.totalorder %s369, %s372
    %p378 = scmp.eq.s32.totalorder %s24, 0
    %p379 = por %p377, %p378
    %p380 = scmp.ne.s32.totalorder %s369, %s372
    %p381 = scmp.eq.s32.totalorder %s29, 1
    %p382 = por %p380, %p381
    %p383 = scmp.ne.s32.totalorder %s372, %s373
    %p384 = scmp.eq.s32.totalorder %s29, 0
    %p385 = por %p383, %p384
    %p386 = scmp.ne.s32.totalorder %s372, %s373
    %p387 = scmp.eq.s32.totalorder %s30, 1
    %p388 = por %p386, %p387
    %p390 = scmp.ne.s32.totalorder %s373, %s389
    %p391 = scmp.eq.s32.totalorder %s30, 0
    %p392 = por %p390, %p391
    %p393 = scmp.le.s32.totalorder 1, %s24
    %p394 = scmp.lt.s32.totalorder %s24, 3
    %p395 = pnand %p393, %p394
    %p396 = pneg %p395
    // Predicated region
    $region9: #{msd_forward.5} parent=5 // pred_check
      _
    $region10: #{msd_forward.5} parent=5 // pred_check_branch
      %398 = sbr.rel (%p395) target = $region12
    $region11: #{msd_forward.5} parent=5 // pred_region
      %s399 = ssub.s32 %s24, 1
      // Predicated region
      $region13: #{msd_forward.5} parent=11 // pred_check
        %p400 = pneg %p71
      $region14: #{msd_forward.5} parent=11 // pred_check_branch
        %402 = sbr.rel (%p400) target = $region16
      $region15: #{msd_forward.5} parent=11 // pred_region
        _
      $region16: #{msd_forward.5} parent=11 // pred_fallthru
        _
      // Predicated region
      $region17: #{msd_forward.5} parent=11 // pred_check
        %p403 = pneg %p92
      $region18: #{msd_forward.5} parent=11 // pred_check_branch
        %405 = sbr.rel (%p403) target = $region20
      $region19: #{msd_forward.5} parent=11 // pred_region
        _
      $region20: #{msd_forward.5} parent=11 // pred_fallthru
        _
      // Predicated region
      $region21: #{msd_forward.5} parent=11 // pred_check
        %p406 = pneg %p113
      $region22: #{msd_forward.5} parent=11 // pred_check_branch
        %408 = sbr.rel (%p406) target = $region24
      $region23: #{msd_forward.5} parent=11 // pred_region
        _
      $region24: #{msd_forward.5} parent=11 // pred_fallthru
        _
      // Predicated region
      $region25: #{msd_forward.5} parent=11 // pred_check
        %p409 = pneg %p134
      $region26: #{msd_forward.5} parent=11 // pred_check_branch
        %411 = sbr.rel (%p409) target = $region28
      $region27: #{msd_forward.5} parent=11 // pred_region
        _
      $region28: #{msd_forward.5} parent=11 // pred_fallthru
        _
      // Predicated region
      $region29: #{msd_forward.5} parent=11 // pred_check
        %p412 = pneg %p155
      $region30: #{msd_forward.5} parent=11 // pred_check_branch
        %414 = sbr.rel (%p412) target = $region32
      $region31: #{msd_forward.5} parent=11 // pred_region
        _
      $region32: #{msd_forward.5} parent=11 // pred_fallthru
        _
      // Predicated region
      $region33: #{msd_forward.5} parent=11 // pred_check
        %p415 = pneg %p176
      $region34: #{msd_forward.5} parent=11 // pred_check_branch
        %417 = sbr.rel (%p415) target = $region36
      $region35: #{msd_forward.5} parent=11 // pred_region
        _
      $region36: #{msd_forward.5} parent=11 // pred_fallthru
        _
      // Predicated region
      $region37: #{msd_forward.5} parent=11 // pred_check
        %p418 = pneg %p197
      $region38: #{msd_forward.5} parent=11 // pred_check_branch
        %420 = sbr.rel (%p418) target = $region40
      $region39: #{msd_forward.5} parent=11 // pred_region
        _
      $region40: #{msd_forward.5} parent=11 // pred_fallthru
        _
      // Predicated region
      $region41: #{msd_forward.5} parent=11 // pred_check
        %p421 = pneg %p218
      $region42: #{msd_forward.5} parent=11 // pred_check_branch
        %423 = sbr.rel (%p421) target = $region44
      $region43: #{msd_forward.5} parent=11 // pred_region
        _
      $region44: #{msd_forward.5} parent=11 // pred_fallthru
        _
      // Predicated region
      $region45: #{msd_forward.5} parent=11 // pred_check
        %p424 = pneg %p239
      $region46: #{msd_forward.5} parent=11 // pred_check_branch
        %426 = sbr.rel (%p424) target = $region48
      $region47: #{msd_forward.5} parent=11 // pred_region
        _
      $region48: #{msd_forward.5} parent=11 // pred_fallthru
        _
      // Predicated region
      $region49: #{msd_forward.5} parent=11 // pred_check
        %p427 = pneg %p260
      $region50: #{msd_forward.5} parent=11 // pred_check_branch
        %429 = sbr.rel (%p427) target = $region52
      $region51: #{msd_forward.5} parent=11 // pred_region
        _
      $region52: #{msd_forward.5} parent=11 // pred_fallthru
        _
      // Predicated region
      $region53: #{msd_forward.5} parent=11 // pred_check
        %p430 = pneg %p281
      $region54: #{msd_forward.5} parent=11 // pred_check_branch
        %432 = sbr.rel (%p430) target = $region56
      $region55: #{msd_forward.5} parent=11 // pred_region
        _
      $region56: #{msd_forward.5} parent=11 // pred_fallthru
        _
    $region12: #{msd_forward.5} parent=5 // pred_fallthru
      _
    %p433 = scmp.lt.s32.totalorder %s24, 2
    // Predicated region
    $region57: #{msd_forward.5} parent=5 // pred_check
      %p434 = pneg %p433
    $region58: #{msd_forward.5} parent=5 // pred_check_branch
      %436 = sbr.rel (%p434) target = $region60
    $region59: #{msd_forward.5} parent=5 // pred_region
      // Predicated region
      $region61: #{msd_forward.5} parent=59 // pred_check
        %p437 = pneg %p44
      $region62: #{msd_forward.5} parent=59 // pred_check_branch
        %439 = sbr.rel (%p437) target = $region64
      $region63: #{msd_forward.5} parent=59 // pred_region
        %p440 = scmp.lt.s32.totalorder %s24, 1
        %s441 = scalar_select %p440, %s24, 1
        %s442 = scalar_lea.vmem %s0, %s441
      $region64: #{msd_forward.5} parent=59 // pred_fallthru
        _
    $region60: #{msd_forward.5} parent=5 // pred_fallthru
      _
    %p443 = scmp.le.s32.totalorder 1, %s24
    %p444 = scmp.lt.s32.totalorder %s24, 3
    %p445 = pnand %p443, %p444
    %p446 = pneg %p445
    // Predicated region
    $region65: #{msd_forward.5} parent=5 // pred_check
      _
    $region66: #{msd_forward.5} parent=5 // pred_check_branch
      %448 = sbr.rel (%p445) target = $region68
    $region67: #{msd_forward.5} parent=5 // pred_region
      %s449 = ssub.s32 %s24, 1
      %p450 = scmp.lt.s32.totalorder %s29, 1
      %s451 = scalar_select %p450, %s29, 1
      %s452 = scalar_lea.vmem %s0, %s451
      %p453 = pneg %p50
      %p454 = pneg %p47
      %p455 = pneg %p71
      %p456 = pneg %p68
      %p457 = pneg %p92
      %p458 = pneg %p89
      %p459 = pneg %p113
      %p460 = pneg %p110
      %p461 = pneg %p134
      %p462 = pneg %p131
      %p463 = pneg %p155
      %p464 = pneg %p152
      %p465 = pneg %p176
      %p466 = pneg %p173
      %p467 = pneg %p197
      %p468 = pneg %p194
      %p469 = pneg %p218
      %p470 = pneg %p215
      %p471 = pneg %p239
      %p472 = pneg %p236
      %p473 = pneg %p260
      %p474 = pneg %p257
      %p475 = pneg %p281
      %p476 = pneg %p278
      %p477 = pneg %p307
      %p478 = pneg %p304
      %p479 = scmp.lt.s32.totalorder %s29, 1
      %s480 = scalar_select %p479, %s29, 1
      %s481 = smul.addr %s480, 8
      %s482 = scalar_lea.vmem %s12, %s481
      %p483 = pneg %p333
      %p484 = pneg %p330
      %p485 = scmp.lt.s32.totalorder %s29, 1
      %s486 = scalar_select %p485, %s29, 1
      %s487 = smul.addr %s486, 2
      %s488 = smul.addr %s487, 8
      %s489 = scalar_lea.vmem %s13, %s488
      %p490 = pneg %p359
      %p491 = pneg %p356
      %p492 = scmp.lt.s32.totalorder %s29, 1
      %s493 = scalar_select %p492, %s29, 1
      %s494 = smul.addr %s493, 2
      %s495 = smul.addr %s494, 8
      %s496 = scalar_lea.vmem %s14, %s495
      %p497 = pneg %p385
      %p498 = pneg %p382
      %p499 = scmp.lt.s32.totalorder %s29, 1
      %s500 = scalar_select %p499, %s29, 1
      %s501 = scalar_lea.vmem %s15, %s500
      %p502 = scmp.lt.s32.totalorder %s29, 1
      %s503 = scalar_select %p502, %s29, 1
      %s504 = scalar_lea.vmem %s0, %s503
      %p505 = scmp.lt.s32.totalorder %s29, 1
      %s506 = scalar_select %p505, %s29, 1
      %s507 = smul.addr %s506, 8
      %s508 = scalar_lea.vmem %s12, %s507
      %p509 = scmp.lt.s32.totalorder %s29, 1
      %s510 = scalar_select %p509, %s29, 1
      %s511 = smul.addr %s510, 2
      %s512 = smul.addr %s511, 8
      %s513 = scalar_lea.vmem %s13, %s512
      %p514 = scmp.lt.s32.totalorder %s29, 1
      %s515 = scalar_select %p514, %s29, 1
      %s516 = smul.addr %s515, 2
      %s517 = smul.addr %s516, 8
      %s518 = scalar_lea.vmem %s14, %s517
      %p519 = scmp.lt.s32.totalorder %s29, 1
      %s520 = scalar_select %p519, %s29, 1
      %s521 = scalar_lea.vmem %s15, %s520
      %v522 = vld [vmem:[%s504] sm:$0x1]
      %v523 = vld [vmem:[%s1] sm:$0xff]
      %v524 = vld [vmem:[%s1 + $0x8] sm:$0xff]
      %v525 = vld [vmem:[%s1 + $0x10] sm:$0xff]
      %v526 = vld [vmem:[%s1 + $0x18] sm:$0xff]
      %v527 = vld [vmem:[%s1 + $0x20] sm:$0xff]
      %v528 = vld [vmem:[%s1 + $0x28] sm:$0xff]
      %v529 = vld [vmem:[%s1 + $0x30] sm:$0xff]
      %v530 = vld [vmem:[%s1 + $0x38] sm:$0xff]
      %v531 = vld [vmem:[%s1 + $0x40] sm:$0xff]
      %v532 = vld [vmem:[%s1 + $0x48] sm:$0xff]
      %v533 = vld [vmem:[%s1 + $0x50] sm:$0xff]
      %v534 = vld [vmem:[%s1 + $0x58] sm:$0xff]
      %v535 = vld [vmem:[%s1 + $0x60] sm:$0xff]
      %v536 = vld [vmem:[%s1 + $0x68] sm:$0xff]
      %v537 = vld [vmem:[%s1 + $0x70] sm:$0xff]
      %v538 = vld [vmem:[%s1 + $0x78] sm:$0xff]
      %539 = vmatprep.subr.mxu0 0.0
      %540 = vmatpush1.msra.mxu0 %v523
      %541 = vmatprep.subr.mxu0 0.0
      %542 = vmatpush1.msra.mxu0 %v524
      %543 = vmatprep.subr.mxu0 0.0
      %544 = vmatpush1.msra.mxu0 %v525
      %545 = vmatprep.subr.mxu0 0.0
      %546 = vmatpush1.msra.mxu0 %v526
      %547 = vmatprep.subr.mxu0 0.0
      %548 = vmatpush1.msra.mxu0 %v527
      %549 = vmatprep.subr.mxu0 0.0
      %550 = vmatpush1.msra.mxu0 %v528
      %551 = vmatprep.subr.mxu0 0.0
      %552 = vmatpush1.msra.mxu0 %v529
      %553 = vmatprep.subr.mxu0 0.0
      %554 = vmatpush1.msra.mxu0 %v530
      %555 = vmatprep.subr.mxu0 0.0
      %556 = vmatpush1.msra.mxu0 %v531
      %557 = vmatprep.subr.mxu0 0.0
      %558 = vmatpush1.msra.mxu0 %v532
      %559 = vmatprep.subr.mxu0 0.0
      %560 = vmatpush1.msra.mxu0 %v533
      %561 = vmatprep.subr.mxu0 0.0
      %562 = vmatpush1.msra.mxu0 %v534
      %563 = vmatprep.subr.mxu0 0.0
      %564 = vmatpush1.msra.mxu0 %v535
      %565 = vmatprep.subr.mxu0 0.0
      %566 = vmatpush1.msra.mxu0 %v536
      %567 = vmatprep.subr.mxu0 0.0
      %568 = vmatpush1.msra.mxu0 %v537
      %569 = vmatprep.subr.mxu0 0.0
      %570 = vmatpush1.msra.mxu0 %v538
      %571 = vmatprep.subr.mxu0 0.0
      %572 = vmatpush1.msra.mxu0 0.0
      %573 = vmatprep.subr.mxu0 0.0
      %574 = vmatpush1.msra.mxu0 0.0
      %575 = vmatprep.subr.mxu0 0.0
      %576 = vmatpush1.msra.mxu0 0.0
      %577 = vmatprep.subr.mxu0 0.0
      %578 = vmatpush1.msra.mxu0 0.0
      %579 = vmatprep.subr.mxu0 0.0
      %580 = vmatpush1.msra.mxu0 0.0
      %581 = vmatprep.subr.mxu0 0.0
      %582 = vmatpush1.msra.mxu0 0.0
      %583 = vmatprep.subr.mxu0 0.0
      %584 = vmatpush1.msra.mxu0 0.0
      %585 = vmatprep.subr.mxu0 0.0
      %586 = vmatpush1.msra.mxu0 0.0
      %587 = vmatprep.subr.mxu0 0.0
      %588 = vmatpush1.msra.mxu0 0.0
      %589 = vmatprep.subr.mxu0 0.0
      %590 = vmatpush1.msra.mxu0 0.0
      %591 = vmatprep.subr.mxu0 0.0
      %592 = vmatpush1.msra.mxu0 0.0
      %593 = vmatprep.subr.mxu0 0.0
      %594 = vmatpush1.msra.mxu0 0.0
      %595 = vmatprep.subr.mxu0 0.0
      %596 = vmatpush1.msra.mxu0 0.0
      %597 = vmatprep.subr.mxu0 0.0
      %598 = vmatpush1.msra.mxu0 0.0
      %599 = vmatprep.subr.mxu0 0.0
      %600 = vmatpush1.msra.mxu0 0.0
      %601 = vmatprep.subr.mxu0 0.0
      %602 = vmatpush1.msra.mxu0 0.0
      %603 = vmatprep.mubr.f32.mxu0 0.0
      %604 = vmatmul.mubr.f32.gmra.mrb[0].mxu0 %v522
      %v605 = vpop.f32.mrb[0].mxu0
      %v606 = vadd.f32 0.0, %v605
      %v607 = vpop.f32.mrb[0].mxu0
      %608 = vdwg.mxu0
      %v609 = vmul.f32 %v606, 0.25
      %v610 = vld [vmem:[%s2] sm:$0xff]
      %v611 = vld [vmem:[%s2 + $0x8] sm:$0xff]
      %v612 = vld [vmem:[%s2 + $0x10] sm:$0xff]
      %v613 = vld [vmem:[%s2 + $0x18] sm:$0xff]
      %v614 = vld [vmem:[%s2 + $0x20] sm:$0xff]
      %v615 = vld [vmem:[%s2 + $0x28] sm:$0xff]
      %v616 = vld [vmem:[%s2 + $0x30] sm:$0xff]
      %v617 = vld [vmem:[%s2 + $0x38] sm:$0xff]
      %v618 = vld [vmem:[%s2 + $0x40] sm:$0x3]
      %vm619 = vcmask 539648
      %v621 = vsel %vm619, %v609, 0
      %vm623 = vcmask 1041408
      %v625 = vsel %vm623, %v618, 0
      %627 = vmatprep.subr.mxu0 0.0
      %628 = vmatpush1.msra.mxu0 %v610
      %629 = vmatprep.subr.mxu0 0.0
      %630 = vmatpush1.msra.mxu0 %v611
      %631 = vmatprep.subr.mxu0 0.0
      %632 = vmatpush1.msra.mxu0 %v612
      %633 = vmatprep.subr.mxu0 0.0
      %634 = vmatpush1.msra.mxu0 %v613
      %635 = vmatprep.subr.mxu0 0.0
      %636 = vmatpush1.msra.mxu0 %v614
      %637 = vmatprep.subr.mxu0 0.0
      %638 = vmatpush1.msra.mxu0 %v615
      %639 = vmatprep.subr.mxu0 0.0
      %640 = vmatpush1.msra.mxu0 %v616
      %641 = vmatprep.subr.mxu0 0.0
      %642 = vmatpush1.msra.mxu0 %v617
      %643 = vmatprep.subr.mxu0 0.0
      %644 = vmatpush1.msra.mxu0 %v625
      %645 = vmatprep.subr.mxu0 0.0
      %646 = vmatpush1.msra.mxu0 0.0
      %647 = vmatprep.subr.mxu0 0.0
      %648 = vmatpush1.msra.mxu0 0.0
      %649 = vmatprep.subr.mxu0 0.0
      %650 = vmatpush1.msra.mxu0 0.0
      %651 = vmatprep.subr.mxu0 0.0
      %652 = vmatpush1.msra.mxu0 0.0
      %653 = vmatprep.subr.mxu0 0.0
      %654 = vmatpush1.msra.mxu0 0.0
      %655 = vmatprep.subr.mxu0 0.0
      %656 = vmatpush1.msra.mxu0 0.0
      %657 = vmatprep.subr.mxu0 0.0
      %658 = vmatpush1.msra.mxu0 0.0
      %659 = vmatprep.subr.mxu0 0.0
      %660 = vmatpush1.msra.mxu0 0.0
      %661 = vmatprep.subr.mxu0 0.0
      %662 = vmatpush1.msra.mxu0 0.0
      %663 = vmatprep.subr.mxu0 0.0
      %664 = vmatpush1.msra.mxu0 0.0
      %665 = vmatprep.subr.mxu0 0.0
      %666 = vmatpush1.msra.mxu0 0.0
      %667 = vmatprep.subr.mxu0 0.0
      %668 = vmatpush1.msra.mxu0 0.0
      %669 = vmatprep.subr.mxu0 0.0
      %670 = vmatpush1.msra.mxu0 0.0
      %671 = vmatprep.subr.mxu0 0.0
      %672 = vmatpush1.msra.mxu0 0.0
      %673 = vmatprep.subr.mxu0 0.0
      %674 = vmatpush1.msra.mxu0 0.0
      %675 = vmatprep.subr.mxu0 0.0
      %676 = vmatpush1.msra.mxu0 0.0
      %677 = vmatprep.subr.mxu0 0.0
      %678 = vmatpush1.msra.mxu0 0.0
      %679 = vmatprep.subr.mxu0 0.0
      %680 = vmatpush1.msra.mxu0 0.0
      %681 = vmatprep.subr.mxu0 0.0
      %682 = vmatpush1.msra.mxu0 0.0
      %683 = vmatprep.subr.mxu0 0.0
      %684 = vmatpush1.msra.mxu0 0.0
      %685 = vmatprep.subr.mxu0 0.0
      %686 = vmatpush1.msra.mxu0 0.0
      %687 = vmatprep.subr.mxu0 0.0
      %688 = vmatpush1.msra.mxu0 0.0
      %689 = vmatprep.subr.mxu0 0.0
      %690 = vmatpush1.msra.mxu0 0.0
      %691 = vmatprep.mubr.f32.mxu0 0.0
      %692 = vmatmul.mubr.f32.gmra.mrb[0].mxu0 %v621
      %v693 = vpop.f32.mrb[0].mxu0
      %v694 = vadd.f32 0.0, %v693
      %v695 = vpop.f32.mrb[0].mxu0
      %696 = vdwg.mxu0
      %v697 = vmul.f32 %v694, 0.25
      %v698 = vld [vmem:[%s3] sm:$0xff]
      %v699 = vld [vmem:[%s4] sm:$0xff]
      %701 = vrot.lane.b32.xlu0 %v697, 2
      %v702 = vpop.permute.xlu0 %701
      %vm704 = vcmask 15360
      %v705 = vsel %vm704, 0.0, %v702
      %vm706 = vcmask 154624
      %v707 = vsel %vm706, %v705, 0.0
      %708 = vrot.lane.b32.xlu0 %v697, 113
      %v709 = vpop.permute.xlu0 %708
      %v711 = vsel %vm704, 0.0, %v709
      %v712 = vsel %vm706, %v711, 0.0
      %714 = vrot.lane.b32.xlu0 %v712, 17
      %v715 = vpop.permute.xlu0 %714
      %vm717 = vcmask 138240
      %v718 = vsel %vm717, %v707, %v715
      %720 = vset.pattern.permute.xlu0 0
      %721 = vperm.xlu0 %720, %v698
      %v722 = vpop.permute.xlu0 %721
      %v724 = vlaneseq
      %v725 = vshrl.u32 %v724, 7
      %v726 = vsub.s32 0, %v725
      %v727 = vrot.slane %v718, %v726
      %v728 = vmul.f32 %v722, %v727
      %v729 = vadd.f32 %v728, 0.0
      %731 = vrot.lane.b32.xlu0 %v707, 127
      %v732 = vpop.permute.xlu0 %731
      %734 = vrot.lane.b32.xlu0 %v712, 16
      %v735 = vpop.permute.xlu0 %734
      %v737 = vsel %vm717, %v732, %v735
      %738 = vset.pattern.permute.xlu0 1
      %739 = vperm.xlu0 %738, %v698
      %v740 = vpop.permute.xlu0 %739
      %v742 = vlaneseq
      %v743 = vshrl.u32 %v742, 7
      %v744 = vsub.s32 0, %v743
      %v745 = vrot.slane %v737, %v744
      %v746 = vmul.f32 %v740, %v745
      %v747 = vadd.f32 %v729, %v746
      %748 = vrot.lane.b32.xlu0 %v707, 126
      %v749 = vpop.permute.xlu0 %748
      %751 = vrot.lane.b32.xlu0 %v712, 15
      %v752 = vpop.permute.xlu0 %751
      %v754 = vsel %vm717, %v749, %v752
      %755 = vset.pattern.permute.xlu0 2
      %756 = vperm.xlu0 %755, %v698
      %v757 = vpop.permute.xlu0 %756
      %v759 = vlaneseq
      %v760 = vshrl.u32 %v759, 7
      %v761 = vsub.s32 0, %v760
      %v762 = vrot.slane %v754, %v761
      %v763 = vmul.f32 %v757, %v762
      %v764 = vadd.f32 %v747, %v763
      %765 = vrot.lane.b32.xlu0 %v707, 125
      %v766 = vpop.permute.xlu0 %765
      %768 = vrot.lane.b32.xlu0 %v712, 14
      %v769 = vpop.permute.xlu0 %768
      %v771 = vsel %vm717, %v766, %v769
      %772 = vset.pattern.permute.xlu0 3
      %773 = vperm.xlu0 %772, %v698
      %v774 = vpop.permute.xlu0 %773
      %v776 = vlaneseq
      %v777 = vshrl.u32 %v776, 7
      %v778 = vsub.s32 0, %v777
      %v779 = vrot.slane %v771, %v778
      %v780 = vmul.f32 %v774, %v779
      %v781 = vadd.f32 %v764, %v780
      %782 = vrot.lane.b32.xlu0 %v707, 124
      %v783 = vpop.permute.xlu0 %782
      %785 = vrot.lane.b32.xlu0 %v712, 13
      %v786 = vpop.permute.xlu0 %785
      %v788 = vsel %vm717, %v783, %v786
      %789 = vset.pattern.permute.xlu0 4
      %790 = vperm.xlu0 %789, %v698
      %v791 = vpop.permute.xlu0 %790
      %v793 = vlaneseq
      %v794 = vshrl.u32 %v793, 7
      %v795 = vsub.s32 0, %v794
      %v796 = vrot.slane %v788, %v795
      %v797 = vmul.f32 %v791, %v796
      %v798 = vadd.f32 %v781, %v797
      %800 = vset.pattern.permute.xlu0 0
      %801 = vperm.xlu0 %800, %v699
      %v802 = vpop.permute.xlu0 %801
      %v804 = vadd.f32 %v798, %v802
      %vm805 = vcmp.ge.f32.partialorder %v804, 0.0
      %v806 = vmul.f32 %v804, 0.1
      %v807 = vsel %vm805, %v804, %v806
      %vm808 = vcmask 277504
      %809 = vst.msk [vmem:[%s508] sm:$0xff] %vm808, %v807
      %v810 = vld [vmem:[%s11] sm:$0xff]
      %v811 = vld [vmem:[%s11 + $0x8] sm:$0xff]
      %v812 = vld [vmem:[%s11 + $0x10] sm:$0xff]
      %v813 = vld [vmem:[%s11 + $0x18] sm:$0xff]
      %v814 = vld [vmem:[%s11 + $0x20] sm:$0x3]
      %v815 = vld [vmem:[%s5] sm:$0xff]
      %v816 = vld [vmem:[%s5 + $0x8] sm:$0xff]
      %v817 = vld [vmem:[%s6] sm:$0xff]
      %v818 = vld [vmem:[%s6 + $0x8] sm:$0xff]
      %820 = vrot.lane.b32.xlu0 %v807, 2
      %v821 = vpop.permute.xlu0 %820
      %v823 = vsel %vm704, 0.0, %v821
      %v824 = vsel %vm706, %v823, 0.0
      %825 = vrot.lane.b32.xlu0 %v807, 113
      %v826 = vpop.permute.xlu0 %825
      %v828 = vsel %vm704, 0.0, %v826
      %v829 = vsel %vm706, %v828, 0.0
      %831 = vrot.lane.b32.xlu0 %v829, 17
      %v832 = vpop.permute.xlu0 %831
      %v834 = vsel %vm717, %v824, %v832
      %836 = vrot.lane.b32.xlu0 %v824, 127
      %v837 = vpop.permute.xlu0 %836
      %839 = vrot.lane.b32.xlu0 %v829, 16
      %v840 = vpop.permute.xlu0 %839
      %v842 = vsel %vm717, %v837, %v840
      %843 = vrot.lane.b32.xlu0 %v824, 126
      %v844 = vpop.permute.xlu0 %843
      %846 = vrot.lane.b32.xlu0 %v829, 15
      %v847 = vpop.permute.xlu0 %846
      %v849 = vsel %vm717, %v844, %v847
      %850 = vrot.lane.b32.xlu0 %v824, 125
      %v851 = vpop.permute.xlu0 %850
      %853 = vrot.lane.b32.xlu0 %v829, 14
      %v854 = vpop.permute.xlu0 %853
      %v856 = vsel %vm717, %v851, %v854
      %857 = vrot.lane.b32.xlu0 %v824, 124
      %v858 = vpop.permute.xlu0 %857
      %860 = vrot.lane.b32.xlu0 %v829, 13
      %v861 = vpop.permute.xlu0 %860
      %v863 = vsel %vm717, %v858, %v861
      %vm864 = vcmask 326656
      %v866 = vsel %vm864, %v815, 0
      %v869 = vsel %vm864, %v816, 0
      %871 = vmatprep.subr.mxu0 0.0
      %872 = vmatpush1.msra.mxu0 %v834
      %873 = vmatprep.subr.mxu0 0.0
      %874 = vmatpush1.msra.mxu0 %v842
      %875 = vmatprep.subr.mxu0 0.0
      %876 = vmatpush1.msra.mxu0 %v849
      %877 = vmatprep.subr.mxu0 0.0
      %878 = vmatpush1.msra.mxu0 %v856
      %879 = vmatprep.subr.mxu0 0.0
      %880 = vmatpush1.msra.mxu0 %v863
      %881 = vmatprep.subr.mxu0 0.0
      %882 = vmatpush1.msra.mxu0 0.0
      %883 = vmatprep.subr.mxu0 0.0
      %884 = vmatpush1.msra.mxu0 0.0
      %885 = vmatprep.subr.mxu0 0.0
      %886 = vmatpush1.msra.mxu0 0.0
      %887 = vmatprep.subr.mxu0 0.0
      %888 = vmatpush1.msra.mxu0 0.0
      %889 = vmatprep.subr.mxu0 0.0
      %890 = vmatpush1.msra.mxu0 0.0
      %891 = vmatprep.subr.mxu0 0.0
      %892 = vmatpush1.msra.mxu0 0.0
      %893 = vmatprep.subr.mxu0 0.0
      %894 = vmatpush1.msra.mxu0 0.0
      %895 = vmatprep.subr.mxu0 0.0
      %896 = vmatpush1.msra.mxu0 0.0
      %897 = vmatprep.subr.mxu0 0.0
      %898 = vmatpush1.msra.mxu0 0.0
      %899 = vmatprep.subr.mxu0 0.0
      %900 = vmatpush1.msra.mxu0 0.0
      %901 = vmatprep.subr.mxu0 0.0
      %902 = vmatpush1.msra.mxu0 0.0
      %903 = vmatprep.subr.mxu0 0.0
      %904 = vmatpush1.msra.mxu0 0.0
      %905 = vmatprep.subr.mxu0 0.0
      %906 = vmatpush1.msra.mxu0 0.0
      %907 = vmatprep.subr.mxu0 0.0
      %908 = vmatpush1.msra.mxu0 0.0
      %909 = vmatprep.subr.mxu0 0.0
      %910 = vmatpush1.msra.mxu0 0.0
      %911 = vmatprep.subr.mxu0 0.0
      %912 = vmatpush1.msra.mxu0 0.0
      %913 = vmatprep.subr.mxu0 0.0
      %914 = vmatpush1.msra.mxu0 0.0
      %915 = vmatprep.subr.mxu0 0.0
      %916 = vmatpush1.msra.mxu0 0.0
      %917 = vmatprep.subr.mxu0 0.0
      %918 = vmatpush1.msra.mxu0 0.0
      %919 = vmatprep.subr.mxu0 0.0
      %920 = vmatpush1.msra.mxu0 0.0
      %921 = vmatprep.subr.mxu0 0.0
      %922 = vmatpush1.msra.mxu0 0.0
      %923 = vmatprep.subr.mxu0 0.0
      %924 = vmatpush1.msra.mxu0 0.0
      %925 = vmatprep.subr.mxu0 0.0
      %926 = vmatpush1.msra.mxu0 0.0
      %927 = vmatprep.subr.mxu0 0.0
      %928 = vmatpush1.msra.mxu0 0.0
      %929 = vmatprep.subr.mxu0 0.0
      %930 = vmatpush1.msra.mxu0 0.0
      %931 = vmatprep.subr.mxu0 0.0
      %932 = vmatpush1.msra.mxu0 0.0
      %933 = vmatprep.subr.mxu0 0.0
      %934 = vmatpush1.msra.mxu0 0.0
      %935 = vmatprep.mubr.f32.mxu0 0.0
      %936 = vmatmul.mubr.f32.gmra.mrb[0].mxu0 %v866
      %v937 = vpop.f32.mrb[0].mxu0
      %v938 = vadd.f32 0.0, %v937
      %v939 = vpop.f32.mrb[0].mxu0
      %940 = vmatprep.mubr.f32.mxu0 0.0
      %941 = vmatmul.mubr.f32.gmra.mrb[0].mxu0 %v869
      %v942 = vpop.f32.mrb[0].mxu0
      %v943 = vadd.f32 0.0, %v942
      %v944 = vpop.f32.mrb[0].mxu0
      %945 = vdwg.mxu0
      %947 = vset.pattern.permute.xlu0 0
      %948 = vperm.xlu0 %947, %v817
      %v949 = vpop.permute.xlu0 %948
      %952 = vset.pattern.permute.xlu0 0
      %953 = vperm.xlu0 %952, %v818
      %v954 = vpop.permute.xlu0 %953
      %v957 = vsel %vm808, %v938, 0
      %v960 = vsel %vm808, %v943, 0
      %v963 = vsel %vm623, %v814, 0
      %965 = vmatprep.subr.mxu0 0.0
      %966 = vmatpush1.msra.mxu0 %v810
      %967 = vmatprep.subr.mxu0 0.0
      %968 = vmatpush1.msra.mxu0 %v811
      %969 = vmatprep.subr.mxu0 0.0
      %970 = vmatpush1.msra.mxu0 %v812
      %971 = vmatprep.subr.mxu0 0.0
      %972 = vmatpush1.msra.mxu0 %v813
      %973 = vmatprep.subr.mxu0 0.0
      %974 = vmatpush1.msra.mxu0 %v963
      %975 = vmatprep.subr.mxu0 0.0
      %976 = vmatpush1.msra.mxu0 0.0
      %977 = vmatprep.subr.mxu0 0.0
      %978 = vmatpush1.msra.mxu0 0.0
      %979 = vmatprep.subr.mxu0 0.0
      %980 = vmatpush1.msra.mxu0 0.0
      %981 = vmatprep.subr.mxu0 0.0
      %982 = vmatpush1.msra.mxu0 0.0
      %983 = vmatprep.subr.mxu0 0.0
      %984 = vmatpush1.msra.mxu0 0.0
      %985 = vmatprep.subr.mxu0 0.0
      %986 = vmatpush1.msra.mxu0 0.0
      %987 = vmatprep.subr.mxu0 0.0
      %988 = vmatpush1.msra.mxu0 0.0
      %989 = vmatprep.subr.mxu0 0.0
      %990 = vmatpush1.msra.mxu0 0.0
      %991 = vmatprep.subr.mxu0 0.0
      %992 = vmatpush1.msra.mxu0 0.0
      %993 = vmatprep.subr.mxu0 0.0
      %994 = vmatpush1.msra.mxu0 0.0
      %995 = vmatprep.subr.mxu0 0.0
      %996 = vmatpush1.msra.mxu0 0.0
      %997 = vmatprep.subr.mxu0 0.0
      %998 = vmatpush1.msra.mxu0 0.0
      %999 = vmatprep.subr.mxu0 0.0
      %1000 = vmatpush1.msra.mxu0 0.0
      %1001 = vmatprep.subr.mxu0 0.0
      %1002 = vmatpush1.msra.mxu0 0.0
      %1003 = vmatprep.subr.mxu0 0.0
      %1004 = vmatpush1.msra.mxu0 0.0
      %1005 = vmatprep.subr.mxu0 0.0
      %1006 = vmatpush1.msra.mxu0 0.0
      %1007 = vmatprep.subr.mxu0 0.0
      %1008 = vmatpush1.msra.mxu0 0.0
      %1009 = vmatprep.subr.mxu0 0.0
      %1010 = vmatpush1.msra.mxu0 0.0
      %1011 = vmatprep.subr.mxu0 0.0
      %1012 = vmatpush1.msra.mxu0 0.0
      %1013 = vmatprep.subr.mxu0 0.0
      %1014 = vmatpush1.msra.mxu0 0.0
      %1015 = vmatprep.subr.mxu0 0.0
      %1016 = vmatpush1.msra.mxu0 0.0
      %1017 = vmatprep.subr.mxu0 0.0
      %1018 = vmatpush1.msra.mxu0 0.0
      %1019 = vmatprep.subr.mxu0 0.0
      %1020 = vmatpush1.msra.mxu0 0.0
      %1021 = vmatprep.subr.mxu0 0.0
      %1022 = vmatpush1.msra.mxu0 0.0
      %1023 = vmatprep.subr.mxu0 0.0
      %1024 = vmatpush1.msra.mxu0 0.0
      %1025 = vmatprep.subr.mxu0 0.0
      %1026 = vmatpush1.msra.mxu0 0.0
      %1027 = vmatprep.subr.mxu0 0.0
      %1028 = vmatpush1.msra.mxu0 0.0
      %1029 = vmatprep.mubr.f32.mxu0 0.0
      %1030 = vmatmul.mubr.f32.gmra.mrb[0].mxu0 %v957
      %v1031 = vpop.f32.mrb[0].mxu0
      %v1032 = vadd.f32 %v949, %v1031
      %v1033 = vpop.f32.mrb[0].mxu0
      %1034 = vmatprep.mubr.f32.mxu0 0.0
      %1035 = vmatmul.mubr.f32.gmra.mrb[0].mxu0 %v960
      %v1036 = vpop.f32.mrb[0].mxu0
      %v1037 = vadd.f32 %v954, %v1036
      %v1038 = vpop.f32.mrb[0].mxu0
      %1039 = vdwg.mxu0
      %vm1040 = vcmp.ge.f32.partialorder %v1032, 0.0
      %vm1041 = vcmp.ge.f32.partialorder %v1037, 0.0
      %v1042 = vmul.f32 %v1032, 0.1
      %v1043 = vmul.f32 %v1037, 0.1
      %v1044 = vsel %vm1040, %v1032, %v1042
      %v1045 = vsel %vm1041, %v1037, %v1043
      %vm1046 = vcmask 146432
      %1047 = vst.msk [vmem:[%s513] sm:$0xff] %vm1046, %v1044
      %1048 = vst.msk [vmem:[%s513 + $0x8] sm:$0xff] %vm1046, %v1045
      %v1049 = vld [vmem:[%s7] sm:$0xff]
      %v1050 = vld [vmem:[%s7 + $0x8] sm:$0xff]
      %v1051 = vld [vmem:[%s8] sm:$0xff]
      %v1052 = vld [vmem:[%s8 + $0x8] sm:$0xff]
      %1055 = vrot.lane.b32.xlu0 %v1044, 2
      %v1056 = vpop.permute.xlu0 %1055
      %1057 = vrot.lane.b32.xlu0 %v1045, 2
      %v1058 = vpop.permute.xlu0 %1057
      %v1061 = vsel %vm704, 0.0, %v1056
      %v1062 = vsel %vm704, 0.0, %v1058
      %vm1063 = vcmask 89088
      %v1064 = vsel %vm1063, %v1061, 0.0
      %v1065 = vsel %vm1063, %v1062, 0.0
      %1066 = vrot.lane.b32.xlu0 %v1044, 121
      %v1067 = vpop.permute.xlu0 %1066
      %1068 = vrot.lane.b32.xlu0 %v1045, 121
      %v1069 = vpop.permute.xlu0 %1068
      %v1072 = vsel %vm704, 0.0, %v1067
      %v1073 = vsel %vm704, 0.0, %v1069
      %v1074 = vsel %vm1063, %v1072, 0.0
      %v1075 = vsel %vm1063, %v1073, 0.0
      %1078 = vrot.lane.b32.xlu0 %v1074, 9
      %v1079 = vpop.permute.xlu0 %1078
      %1080 = vrot.lane.b32.xlu0 %v1075, 9
      %v1081 = vpop.permute.xlu0 %1080
      %vm1084 = vcmask 72704
      %v1085 = vsel %vm1084, %v1064, %v1079
      %v1086 = vsel %vm1084, %v1065, %v1081
      %1089 = vrot.lane.b32.xlu0 %v1064, 127
      %v1090 = vpop.permute.xlu0 %1089
      %1091 = vrot.lane.b32.xlu0 %v1065, 127
      %v1092 = vpop.permute.xlu0 %1091
      %1095 = vrot.lane.b32.xlu0 %v1074, 8
      %v1096 = vpop.permute.xlu0 %1095
      %1097 = vrot.lane.b32.xlu0 %v1075, 8
      %v1098 = vpop.permute.xlu0 %1097
      %v1101 = vsel %vm1084, %v1090, %v1096
      %v1102 = vsel %vm1084, %v1092, %v1098
      %1103 = vrot.lane.b32.xlu0 %v1064, 126
      %v1104 = vpop.permute.xlu0 %1103
      %1105 = vrot.lane.b32.xlu0 %v1065, 126
      %v1106 = vpop.permute.xlu0 %1105
      %1109 = vrot.lane.b32.xlu0 %v1074, 7
      %v1110 = vpop.permute.xlu0 %1109
      %1111 = vrot.lane.b32.xlu0 %v1075, 7
      %v1112 = vpop.permute.xlu0 %1111
      %v1115 = vsel %vm1084, %v1104, %v1110
      %v1116 = vsel %vm1084, %v1106, %v1112
      %1117 = vrot.lane.b32.xlu0 %v1064, 125
      %v1118 = vpop.permute.xlu0 %1117
      %1119 = vrot.lane.b32.xlu0 %v1065, 125
      %v1120 = vpop.permute.xlu0 %1119
      %1123 = vrot.lane.b32.xlu0 %v1074, 6
      %v1124 = vpop.permute.xlu0 %1123
      %1125 = vrot.lane.b32.xlu0 %v1075, 6
      %v1126 = vpop.permute.xlu0 %1125
      %v1129 = vsel %vm1084, %v1118, %v1124
      %v1130 = vsel %vm1084, %v1120, %v1126
      %1131 = vrot.lane.b32.xlu0 %v1064, 124
      %v1132 = vpop.permute.xlu0 %1131
      %1133 = vrot.lane.b32.xlu0 %v1065, 124
      %v1134 = vpop.permute.xlu0 %1133
      %1137 = vrot.lane.b32.xlu0 %v1074, 5
      %v1138 = vpop.permute.xlu0 %1137
      %1139 = vrot.lane.b32.xlu0 %v1075, 5
      %v1140 = vpop.permute.xlu0 %1139
      %v1143 = vsel %vm1084, %v1132, %v1138
      %v1144 = vsel %vm1084, %v1134, %v1140
      %1146 = vset.pattern.permute.xlu0 0
      %1147 = vperm.xlu0 %1146, %v1051
      %v1148 = vpop.permute.xlu0 %1147
      %1151 = vset.pattern.permute.xlu0 0
      %1152 = vperm.xlu0 %1151, %v1052
      %v1153 = vpop.permute.xlu0 %1152
      %vm1155 = vcmask 654336
      %v1157 = vsel %vm1155, %v1049, 0
      %v1160 = vsel %vm1155, %v1050, 0
      %1162 = vmatprep.subr.mxu0 0.0
      %1163 = vmatpush1.msra.mxu0 %v1085
      %1164 = vmatprep.subr.mxu0 0.0
      %1165 = vmatpush1.msra.mxu0 %v1086
      %1166 = vmatprep.subr.mxu0 0.0
      %1167 = vmatpush1.msra.mxu0 %v1101
      %1168 = vmatprep.subr.mxu0 0.0
      %1169 = vmatpush1.msra.mxu0 %v1102
      %1170 = vmatprep.subr.mxu0 0.0
      %1171 = vmatpush1.msra.mxu0 %v1115
      %1172 = vmatprep.subr.mxu0 0.0
      %1173 = vmatpush1.msra.mxu0 %v1116
      %1174 = vmatprep.subr.mxu0 0.0
      %1175 = vmatpush1.msra.mxu0 %v1129
      %1176 = vmatprep.subr.mxu0 0.0
      %1177 = vmatpush1.msra.mxu0 %v1130
      %1178 = vmatprep.subr.mxu0 0.0
      %1179 = vmatpush1.msra.mxu0 %v1143
      %1180 = vmatprep.subr.mxu0 0.0
      %1181 = vmatpush1.msra.mxu0 %v1144
      %1182 = vmatprep.subr.mxu0 0.0
      %1183 = vmatpush1.msra.mxu0 0.0
      %1184 = vmatprep.subr.mxu0 0.0
      %1185 = vmatpush1.msra.mxu0 0.0
      %1186 = vmatprep.subr.mxu0 0.0
      %1187 = vmatpush1.msra.mxu0 0.0
      %1188 = vmatprep.subr.mxu0 0.0
      %1189 = vmatpush1.msra.mxu0 0.0
      %1190 = vmatprep.subr.mxu0 0.0
      %1191 = vmatpush1.msra.mxu0 0.0
      %1192 = vmatprep.subr.mxu0 0.0
      %1193 = vmatpush1.msra.mxu0 0.0
      %1194 = vmatprep.subr.mxu0 0.0
      %1195 = vmatpush1.msra.mxu0 0.0
      %1196 = vmatprep.subr.mxu0 0.0
      %1197 = vmatpush1.msra.mxu0 0.0
      %1198 = vmatprep.subr.mxu0 0.0
      %1199 = vmatpush1.msra.mxu0 0.0
      %1200 = vmatprep.subr.mxu0 0.0
      %1201 = vmatpush1.msra.mxu0 0.0
      %1202 = vmatprep.subr.mxu0 0.0
      %1203 = vmatpush1.msra.mxu0 0.0
      %1204 = vmatprep.subr.mxu0 0.0
      %1205 = vmatpush1.msra.mxu0 0.0
      %1206 = vmatprep.subr.mxu0 0.0
      %1207 = vmatpush1.msra.mxu0 0.0
      %1208 = vmatprep.subr.mxu0 0.0
      %1209 = vmatpush1.msra.mxu0 0.0
      %1210 = vmatprep.subr.mxu0 0.0
      %1211 = vmatpush1.msra.mxu0 0.0
      %1212 = vmatprep.subr.mxu0 0.0
      %1213 = vmatpush1.msra.mxu0 0.0
      %1214 = vmatprep.subr.mxu0 0.0
      %1215 = vmatpush1.msra.mxu0 0.0
      %1216 = vmatprep.subr.mxu0 0.0
      %1217 = vmatpush1.msra.mxu0 0.0
      %1218 = vmatprep.subr.mxu0 0.0
      %1219 = vmatpush1.msra.mxu0 0.0
      %1220 = vmatprep.subr.mxu0 0.0
      %1221 = vmatpush1.msra.mxu0 0.0
      %1222 = vmatprep.subr.mxu0 0.0
      %1223 = vmatpush1.msra.mxu0 0.0
      %1224 = vmatprep.subr.mxu0 0.0
      %1225 = vmatpush1.msra.mxu0 0.0
      %1226 = vmatprep.mubr.f32.mxu0 0.0
      %1227 = vmatmul.mubr.f32.gmra.mrb[0].mxu0 %v1157
      %v1228 = vpop.f32.mrb[0].mxu0
      %v1229 = vadd.f32 %v1148, %v1228
      %v1230 = vpop.f32.mrb[0].mxu0
      %1231 = vmatprep.mubr.f32.mxu0 0.0
      %1232 = vmatmul.mubr.f32.gmra.mrb[0].mxu0 %v1160
      %v1233 = vpop.f32.mrb[0].mxu0
      %v1234 = vadd.f32 %v1153, %v1233
      %v1235 = vpop.f32.mrb[0].mxu0
      %1236 = vdwg.mxu0
      %vm1237 = vcmp.ge.f32.partialorder %v1229, 0.0
      %vm1238 = vcmp.ge.f32.partialorder %v1234, 0.0
      %v1239 = vmul.f32 %v1229, 0.1
      %v1240 = vmul.f32 %v1234, 0.1
      %v1241 = vsel %vm1237, %v1229, %v1239
      %v1242 = vsel %vm1238, %v1234, %v1240
      %1243 = vst.msk [vmem:[%s518] sm:$0xff] %vm1046, %v1241
      %1244 = vst.msk [vmem:[%s518 + $0x8] sm:$0xff] %vm1046, %v1242
      %v1245 = vld [vmem:[%s9] sm:$0x1]
      %v1246 = vld [vmem:[#allocation2] sm:$0x1]
      %1249 = vrot.lane.b32.xlu0 %v1241, 1
      %v1250 = vpop.permute.xlu0 %1249
      %1251 = vrot.lane.b32.xlu0 %v1242, 1
      %v1252 = vpop.permute.xlu0 %1251
      %vm1255 = vcmask 7168
      %v1256 = vsel %vm1255, 0.0, %v1250
      %v1257 = vsel %vm1255, 0.0, %v1252
      %vm1258 = vcmask 80896
      %v1259 = vsel %vm1258, %v1256, 0.0
      %v1260 = vsel %vm1258, %v1257, 0.0
      %1261 = vrot.lane.b32.xlu0 %v1241, 120
      %v1262 = vpop.permute.xlu0 %1261
      %1263 = vrot.lane.b32.xlu0 %v1242, 120
      %v1264 = vpop.permute.xlu0 %1263
      %v1267 = vsel %vm1255, 0.0, %v1262
      %v1268 = vsel %vm1255, 0.0, %v1264
      %v1269 = vsel %vm1258, %v1267, 0.0
      %v1270 = vsel %vm1258, %v1268, 0.0
      %1273 = vrot.lane.b32.xlu0 %v1269, 9
      %v1274 = vpop.permute.xlu0 %1273
      %1275 = vrot.lane.b32.xlu0 %v1270, 9
      %v1276 = vpop.permute.xlu0 %1275
      %v1279 = vsel %vm1084, %v1259, %v1274
      %v1280 = vsel %vm1084, %v1260, %v1276
      %1283 = vrot.lane.b32.xlu0 %v1259, 127
      %v1284 = vpop.permute.xlu0 %1283
      %1285 = vrot.lane.b32.xlu0 %v1260, 127
      %v1286 = vpop.permute.xlu0 %1285
      %1289 = vrot.lane.b32.xlu0 %v1269, 8
      %v1290 = vpop.permute.xlu0 %1289
      %1291 = vrot.lane.b32.xlu0 %v1270, 8
      %v1292 = vpop.permute.xlu0 %1291
      %v1295 = vsel %vm1084, %v1284, %v1290
      %v1296 = vsel %vm1084, %v1286, %v1292
      %1297 = vrot.lane.b32.xlu0 %v1259, 126
      %v1298 = vpop.permute.xlu0 %1297
      %1299 = vrot.lane.b32.xlu0 %v1260, 126
      %v1300 = vpop.permute.xlu0 %1299
      %1303 = vrot.lane.b32.xlu0 %v1269, 7
      %v1304 = vpop.permute.xlu0 %1303
      %1305 = vrot.lane.b32.xlu0 %v1270, 7
      %v1306 = vpop.permute.xlu0 %1305
      %v1309 = vsel %vm1084, %v1298, %v1304
      %v1310 = vsel %vm1084, %v1300, %v1306
      %1312 = vset.pattern.permute.xlu0 0
      %1313 = vperm.xlu0 %1312, %v1246
      %v1314 = vpop.permute.xlu0 %1313
      %v1316 = vlaneseq
      %v1317 = vshrl.u32 %v1316, 7
      %v1318 = vsub.s32 0, %v1317
      %v1319 = vrot.slane %v1314, %v1318
      %vm1320 = vcmask 392192
      %v1322 = vsel %vm1320, %v1245, 0
      %1324 = vmatprep.subr.mxu0 0.0
      %1325 = vmatpush1.msra.mxu0 %v1279
      %1326 = vmatprep.subr.mxu0 0.0
      %1327 = vmatpush1.msra.mxu0 %v1280
      %1328 = vmatprep.subr.mxu0 0.0
      %1329 = vmatpush1.msra.mxu0 %v1295
      %1330 = vmatprep.subr.mxu0 0.0
      %1331 = vmatpush1.msra.mxu0 %v1296
      %1332 = vmatprep.subr.mxu0 0.0
      %1333 = vmatpush1.msra.mxu0 %v1309
      %1334 = vmatprep.subr.mxu0 0.0
      %1335 = vmatpush1.msra.mxu0 %v1310
      %1336 = vmatprep.subr.mxu0 0.0
      %1337 = vmatpush1.msra.mxu0 0.0
      %1338 = vmatprep.subr.mxu0 0.0
      %1339 = vmatpush1.msra.mxu0 0.0
      %1340 = vmatprep.subr.mxu0 0.0
      %1341 = vmatpush1.msra.mxu0 0.0
      %1342 = vmatprep.subr.mxu0 0.0
      %1343 = vmatpush1.msra.mxu0 0.0
      %1344 = vmatprep.subr.mxu0 0.0
      %1345 = vmatpush1.msra.mxu0 0.0
      %1346 = vmatprep.subr.mxu0 0.0
      %1347 = vmatpush1.msra.mxu0 0.0
      %1348 = vmatprep.subr.mxu0 0.0
      %1349 = vmatpush1.msra.mxu0 0.0
      %1350 = vmatprep.subr.mxu0 0.0
      %1351 = vmatpush1.msra.mxu0 0.0
      %1352 = vmatprep.subr.mxu0 0.0
      %1353 = vmatpush1.msra.mxu0 0.0
      %1354 = vmatprep.subr.mxu0 0.0
      %1355 = vmatpush1.msra.mxu0 0.0
      %1356 = vmatprep.subr.mxu0 0.0
      %1357 = vmatpush1.msra.mxu0 0.0
      %1358 = vmatprep.subr.mxu0 0.0
      %1359 = vmatpush1.msra.mxu0 0.0
      %1360 = vmatprep.subr.mxu0 0.0
      %1361 = vmatpush1.msra.mxu0 0.0
      %1362 = vmatprep.subr.mxu0 0.0
      %1363 = vmatpush1.msra.mxu0 0.0
      %1364 = vmatprep.subr.mxu0 0.0
      %1365 = vmatpush1.msra.mxu0 0.0
      %1366 = vmatprep.subr.mxu0 0.0
      %1367 = vmatpush1.msra.mxu0 0.0
      %1368 = vmatprep.subr.mxu0 0.0
      %1369 = vmatpush1.msra.mxu0 0.0
      %1370 = vmatprep.subr.mxu0 0.0
      %1371 = vmatpush1.msra.mxu0 0.0
      %1372 = vmatprep.subr.mxu0 0.0
      %1373 = vmatpush1.msra.mxu0 0.0
      %1374 = vmatprep.subr.mxu0 0.0
      %1375 = vmatpush1.msra.mxu0 0.0
      %1376 = vmatprep.subr.mxu0 0.0
      %1377 = vmatpush1.msra.mxu0 0.0
      %1378 = vmatprep.subr.mxu0 0.0
      %1379 = vmatpush1.msra.mxu0 0.0
      %1380 = vmatprep.subr.mxu0 0.0
      %1381 = vmatpush1.msra.mxu0 0.0
      %1382 = vmatprep.subr.mxu0 0.0
      %1383 = vmatpush1.msra.mxu0 0.0
      %1384 = vmatprep.subr.mxu0 0.0
      %1385 = vmatpush1.msra.mxu0 0.0
      %1386 = vmatprep.subr.mxu0 0.0
      %1387 = vmatpush1.msra.mxu0 0.0
      %1388 = vmatprep.mubr.f32.mxu0 0.0
      %1389 = vmatmul.mubr.f32.gmra.mrb[0].mxu0 %v1322
      %v1390 = vpop.f32.mrb[0].mxu0
      %v1391 = vadd.f32 %v1319, %v1390
      %v1392 = vpop.f32.mrb[0].mxu0
      %1393 = vdwg.mxu0
      %vm1394 = vcmask 139264
      %1395 = vst.msk [vmem:[%s521] sm:$0x1] %vm1394, %v1391
      %p1396 = scmp.lt.s32.totalorder %s29, 1
      %s1397 = scalar_select %p1396, %s29, 1
      %s1398 = smul.addr %s1397, 8
      %s1399 = scalar_lea.vmem %s12, %s1398
      %p1400 = scmp.lt.s32.totalorder %s29, 1
      %s1401 = scalar_select %p1400, %s29, 1
      %s1402 = smul.addr %s1401, 2
      %s1403 = smul.addr %s1402, 8
      %s1404 = scalar_lea.vmem %s13, %s1403
      %p1405 = scmp.lt.s32.totalorder %s29, 1
      %s1406 = scalar_select %p1405, %s29, 1
      %s1407 = smul.addr %s1406, 2
      %s1408 = smul.addr %s1407, 8
      %s1409 = scalar_lea.vmem %s14, %s1408
      %p1410 = scmp.lt.s32.totalorder %s29, 1
      %s1411 = scalar_select %p1410, %s29, 1
      %s1412 = scalar_lea.vmem %s15, %s1411
      // Predicated region
      $region69: #{msd_forward.5} parent=67 // pred_check
        %p1413 = pneg %p304
      $region70: #{msd_forward.5} parent=67 // pred_check_branch
        %1415 = sbr.rel (%p1413) target = $region72
      $region71: #{msd_forward.5} parent=67 // pred_region
        _
      $region72: #{msd_forward.5} parent=67 // pred_fallthru
        _
      // Predicated region
      $region73: #{msd_forward.5} parent=67 // pred_check
        %p1416 = pneg %p330
      $region74: #{msd_forward.5} parent=67 // pred_check_branch
        %1418 = sbr.rel (%p1416) target = $region76
      $region75: #{msd_forward.5} parent=67 // pred_region
        _
      $region76: #{msd_forward.5} parent=67 // pred_fallthru
        _
      // Predicated region
      $region77: #{msd_forward.5} parent=67 // pred_check
        %p1419 = pneg %p356
      $region78: #{msd_forward.5} parent=67 // pred_check_branch
        %1421 = sbr.rel (%p1419) target = $region80
      $region79: #{msd_forward.5} parent=67 // pred_region
        _
      $region80: #{msd_forward.5} parent=67 // pred_fallthru
        _
      // Predicated region
      $region81: #{msd_forward.5} parent=67 // pred_check
        %p1422 = pneg %p382
      $region82: #{msd_forward.5} parent=67 // pred_check_branch
        %1424 = sbr.rel (%p1422) target = $region84
      $region83: #{msd_forward.5} parent=67 // pred_region
        _
      $region84: #{msd_forward.5} parent=67 // pred_fallthru
        _
    $region68: #{msd_forward.5} parent=5 // pred_fallthru
      _
    %p1425 = scmp.le.s32.totalorder 2, %s24
    // Predicated region
    $region85: #{msd_forward.5} parent=5 // pred_check
      %p1426 = pneg %p1425
    $region86: #{msd_forward.5} parent=5 // pred_check_branch
      %1428 = sbr.rel (%p1426) target = $region88
    $region87: #{msd_forward.5} parent=5 // pred_region
      %s1429 = ssub.s32 %s24, 2
      // Predicated region
      $region89: #{msd_forward.5} parent=87 // pred_check
        %p1430 = pneg %p310
      $region90: #{msd_forward.5} parent=87 // pred_check_branch
        %1432 = sbr.rel (%p1430) target = $region92
      $region91: #{msd_forward.5} parent=87 // pred_region
        %p1433 = scmp.lt.s32.totalorder %s30, 1
        %s1434 = scalar_select %p1433, %s30, 1
        %s1435 = smul.addr %s1434, 8
        %s1436 = scalar_lea.vmem %s12, %s1435
      $region92: #{msd_forward.5} parent=87 // pred_fallthru
        _
      // Predicated region
      $region93: #{msd_forward.5} parent=87 // pred_check
        %p1437 = pneg %p336
      $region94: #{msd_forward.5} parent=87 // pred_check_branch
        %1439 = sbr.rel (%p1437) target = $region96
      $region95: #{msd_forward.5} parent=87 // pred_region
        %p1440 = scmp.lt.s32.totalorder %s30, 1
        %s1441 = scalar_select %p1440, %s30, 1
        %s1442 = smul.addr %s1441, 2
        %s1443 = smul.addr %s1442, 8
        %s1444 = scalar_lea.vmem %s13, %s1443
      $region96: #{msd_forward.5} parent=87 // pred_fallthru
        _
      // Predicated region
      $region97: #{msd_forward.5} parent=87 // pred_check
        %p1445 = pneg %p362
      $region98: #{msd_forward.5} parent=87 // pred_check_branch
        %1447 = sbr.rel (%p1445) target = $region100
      $region99: #{msd_forward.5} parent=87 // pred_region
        %p1448 = scmp.lt.s32.totalorder %s30, 1
        %s1449 = scalar_select %p1448, %s30, 1
        %s1450 = smul.addr %s1449, 2
        %s1451 = smul.addr %s1450, 8
        %s1452 = scalar_lea.vmem %s14, %s1451
      $region100: #{msd_forward.5} parent=87 // pred_fallthru
        _
      // Predicated region
      $region101: #{msd_forward.5} parent=87 // pred_check
        %p1453 = pneg %p388
      $region102: #{msd_forward.5} parent=87 // pred_check_branch
        %1455 = sbr.rel (%p1453) target = $region104
      $region103: #{msd_forward.5} parent=87 // pred_region
        %p1456 = scmp.lt.s32.totalorder %s30, 1
        %s1457 = scalar_select %p1456, %s30, 1
        %s1458 = scalar_lea.vmem %s15, %s1457
      $region104: #{msd_forward.5} parent=87 // pred_fallthru
        _
    $region88: #{msd_forward.5} parent=5 // pred_fallthru
      _
  $region6: #{msd_forward.5} parent=0 // loop_footer
    %s28 = sadd.s32 1, %s24
  $region7: #{msd_forward.5} parent=0 // loop_footer_branch
    %23 = sbr.rel target = $region3
  $region8: #{msd_forward.5} parent=0 // loop_exit
    _

// kernel: squeeze.58
$region0: #{squeeze.58}
  %s0 = inlined_call_operand.vmem [shape: f32[18], index: 0, kind: input, shape index: {}]
  %s1 = inlined_call_operand.hbm [shape: f32[2,9], index: 1, kind: output, shape index: {}]
  $region1: #{squeeze.58} parent=0
    #allocation0 [shape = 'u8[1024]{0}', space=vmem, size = 0x400, scoped, tag = 'operand span for operand 1']
    #allocation1 [shape = 's32[1]{0}', space=sflag, size = 0x4, scoped, tag = 'scoped memory for squeeze.58']
    #allocation2 [shape = 'u8[4096]{0}', space=vmem, size = 0x1000, scoped, tag = 'scoped mem for output reshape']
    #allocation3 [shape = 'u8[4096]{0}', space=vmem, size = 0x1000, scoped, tag = 'scoped mem for input reshape']
    %2 = vsyncpa [#allocation1], 0
    %s4 = sshllo.u32 0, 1
    %v5 = vld [vmem:[%s0] sm:%s4]
    %6 = vst [vmem:[#allocation3] sm:%s4] %v5
    %v7 = vld [vmem:[#allocation3] sm:$0x1]
    %vm8 = vcmask 72704
    %9 = vst.msk [vmem:[#allocation2] sm:$0x1] %vm8, %v7
    %v10 = vld [vmem:[#allocation3] sm:$0x1]
    %11 = vrot.lane.b32.xlu0 %v10, 119
    %v12 = vpop.permute.xlu0 %11
    %vm13 = vcmask 72704
    %s14 = scalar_lea.vmem [#allocation2], 1
    %15 = vst.msk [vmem:[%s14] sm:$0x1] %vm13, %v12
    %s17 = sshllo.u32 0, 2
    %v19 = vld [vmem:[#allocation2] sm:%s17]
    %s20 = sshllo.u32 0, 2
    %21 = vst [vmem:[#allocation0] sm:%s20] %v19
    %s23 = ssub.s32 32, 32
    %24 = vsyncadd [#allocation1], %s23
    %s26 = sshll.u32 [#allocation0], 4
    %s27 = int_to_ptr.vmem [resolvable:$true] %s26
    %29 = dma.vmem_to_hbm [thread:$0]  %s27, 32, %s1, [#allocation1]
    %30 = dma.done [#allocation1], 32
    %31 = vsyncpa [#allocation1], 1

</llo_original>
